<compile_context>
chip_gen: v5e
topology: v5e:2x2
jax: 0.10.0
libtpu: 0.0.40
codegen_flags: <defaults>
</compile_context>

<pallas_src>
import functools

import jax
import jax.numpy as jnp
import numpy as np
from jax.experimental import pallas as pl
from jax.experimental.pallas import tpu as pltpu

EPS = 1e-5
NUM_GROUPS = 32
NHW = 9  # ConvTranspose3d kernel [1, 3, 3] -> 9 spatial taps


# ------------------------------- fused kernel --------------------------------


def _cdecoder_kernel(z_ref, att_ref, w1z_ref, w1a_ref, w2_ref, w3_ref,
                     wd_ref, oh_cg_ref, oh_gc_ref, bmlp_ref, gnp_ref, o_ref,
                     *, groups, eps, y_bf16):
    f32 = jnp.float32
    md = w1z_ref.dtype                      # matmul input dtype (bf16 by default)

    TB, S, Dz = z_ref.shape
    Da = att_ref.shape[-1]

    if TB == 1:
        z = z_ref[0].astype(md)             # [S, Dz]
        a = att_ref[0].astype(md)           # [S, Da]
    else:
        # Merge (TB, S) -> TB*S so the MXU sees a tall M dimension.
        z = z_ref[...].reshape(TB * S, Dz).astype(md)
        a = att_ref[...].reshape(TB * S, Da).astype(md)

    b1 = bmlp_ref[0:1, :]                   # [1, H] f32
    b2 = bmlp_ref[1:2, :]
    b3 = bmlp_ref[2:3, :]

    # fc1 on the split weight: cat([z, att], -1) @ W1^T  ==  z @ W1z^T + att @ W1a^T
    h = jnp.dot(z, w1z_ref[...], preferred_element_type=f32)
    h = h + jnp.dot(a, w1a_ref[...], preferred_element_type=f32)
    h = jnp.maximum(h + b1, 0.0)                                             # relu1
    h = jnp.dot(h.astype(md), w2_ref[...], preferred_element_type=f32) + b2
    h = jnp.maximum(h, 0.0)                                                  # relu2
    h = jnp.dot(h.astype(md), w3_ref[...], preferred_element_type=f32) + b3  # [TB*S, H]

    # ConvTranspose3d(k=[1,3,3]) on a [*, *, S, 1, 1] input == single matmul:
    #   y[r, hw*C + c] = sum_ci h[r, ci] * Wd[ci, c, hw]
    y = jnp.dot(h.astype(md), wd_ref[...], preferred_element_type=f32)       # [TB*S, 9*C]
    if y_bf16:
        y = y.astype(jnp.bfloat16)          # halve the largest activation (v7x headroom)

    bd = gnp_ref[0:1, :]                    # [1, C] deconv bias
    gamma = gnp_ref[1:2, :]                 # [1, C]
    beta = gnp_ref[2:3, :]                  # [1, C]
    C = bd.shape[1]

    n_per_ch = float(NHW * S)
    inv_n = 1.0 / (float(C // groups) * n_per_ch)

    # ---- GroupNorm(32, C) per batch element (stats over channels-in-group, S, 3, 3) --
    for b in range(TB):                                      # static unroll (TB small)
        yb = y[b * S:(b + 1) * S, :]                         # [S, 9C]
        ch_s = jnp.zeros((1, C), f32)
        ch_q = jnp.zeros((1, C), f32)
        for hw in range(NHW):                                # static unroll (9)
            blk = yb[:, hw * C:(hw + 1) * C].astype(f32)     # aligned: C % 128 == 0
            ch_s = ch_s + jnp.sum(blk, axis=0, keepdims=True)
            ch_q = ch_q + jnp.sum(blk * blk, axis=0, keepdims=True)

        # Fold the deconv bias in analytically: for x' = x + b (N = 9*S samples/channel)
        #   sum x'   = sum x + N b
        #   sum x'^2 = sum x^2 + 2 b sum x + N b^2
        ch_q = ch_q + 2.0 * bd * ch_s + n_per_ch * bd * bd
        ch_s = ch_s + n_per_ch * bd

        # Group totals + broadcast-back per channel via two tiny one-hot matmuls
        # ([2,C]x[C,G] then [2,G]x[G,C]); replaces the old 4 MiB [C,C] indicator.
        stats = jnp.concatenate([ch_s, ch_q], axis=0)                        # [2, C]
        gsum = jnp.dot(stats, oh_cg_ref[...], preferred_element_type=f32)    # [2, G]
        gtot = jnp.dot(gsum, oh_gc_ref[...], preferred_element_type=f32)     # [2, C]
        mean = gtot[0:1, :] * inv_n
        var = jnp.maximum(gtot[1:2, :] * inv_n - mean * mean, 0.0)  # clamp f32 cancellation
        inv_std = jax.lax.rsqrt(var + eps)
        scale = inv_std * gamma                                              # [1, C]
        shift = beta + (bd - mean) * scale                                   # [1, C]

        # Tile scale/shift across the 9 taps (lane concat of 128-aligned blocks) and
        # emit ONE lane-dense [S, 9C] store per batch element.
        scale9 = jnp.concatenate([scale] * NHW, axis=1)                      # [1, 9C]
        shift9 = jnp.concatenate([shift] * NHW, axis=1)                      # [1, 9C]
        o_ref[b] = jnp.maximum(yb * scale9 + shift9, 0.0)


# ------------------------------- wrappers -------------------------------------


def pack_cdecoder_params(params, *, groups=NUM_GROUPS, z_features=None,
                         matmul_dtype=jnp.bfloat16):
    """Reshape / cast the PyTorch-style parameters into kernel-ready arrays (once)."""
    w1, b1 = params["fc1"]          # [H, Dz+Da], [H]
    w2, b2 = params["fc2"]          # [H, H], [H]
    w3, b3 = params["fc3"]          # [H, H], [H]
    wd, bd = params["deconv"]       # [Cin, Cout, 1, 3, 3], [Cout]
    gamma, beta = params["gn"]      # [Cout], [Cout]

    H, in_total = w1.shape
    dz = in_total // 2 if z_features is None else z_features
    cin, cout, kd, kh, kw = wd.shape
    assert (kd, kh, kw) == (1, 3, 3) and cin == H
    assert cout % groups == 0
    cpg = cout // groups
    md = matmul_dtype

    # ConvTranspose3d weight [Cin, Cout, 1, 3, 3] -> [Cin, 9*Cout], columns ordered
    # (hw major, cout minor) so each 128-aligned column block is one (kh, kw) tap.
    wd_flat = jnp.transpose(wd.reshape(cin, cout, NHW), (0, 2, 1)).reshape(cin, NHW * cout)

    # Small one-hot group matrices for GroupNorm group-sum / broadcast-back.
    gid = jnp.arange(cout) // cpg
    oh_cg = (gid[:, None] == jnp.arange(groups)[None, :]).astype(jnp.float32)  # [C, G]
    oh_gc = oh_cg.T                                                            # [G, C]

    return {
        "w1z_t": w1[:, :dz].T.astype(md),          # [Dz, H]
        "w1a_t": w1[:, dz:].T.astype(md),          # [Da, H]
        "w2_t": w2.T.astype(md),                   # [H, H]
        "w3_t": w3.T.astype(md),                   # [H, H]
        "wd_flat": wd_flat.astype(md),             # [H, 9*C]
        "oh_cg": oh_cg,                            # [C, G] f32
        "oh_gc": oh_gc,                            # [G, C] f32
        "b_mlp": jnp.stack([b1, b2, b3], 0).astype(jnp.float32),         # [3, H]
        "gn_pack": jnp.stack([bd, gamma, beta], 0).astype(jnp.float32),  # [3, C]
    }


def _invariant_spec(shape):
    """Grid-invariant operand: constant index_map + single buffering (no 2x VMEM)."""
    zeros = (0,) * len(shape)
    return pl.BlockSpec(shape, lambda i: zeros, pipeline_mode=pl.Buffered(1))


def cdecoder_forward(packed, z, att, *, groups=NUM_GROUPS, eps=EPS,
                     batch_tile=1, y_bf16=False):
    """z: [B, S, Dz] f32; att: [B, Da, S] f32 -> [B, C, S, 3, 3] f32."""
    B, S, Dz = z.shape
    Da = att.shape[1]
    H = packed["w2_t"].shape[0]
    C = packed["gn_pack"].shape[1]
    assert packed["w1z_t"].shape[0] == Dz and packed["w1a_t"].shape[0] == Da
    assert B % batch_tile == 0
    TB = batch_tile

    # PyTorch's att.permute(0, 2, 1): pure XLA layout op outside the kernel so the att
    # tiles enter the kernel lane-dense ([S, Da]) instead of [Da, S] (narrow lanes).
    att_t = jnp.transpose(att, (0, 2, 1))

    # ---- scoped VMEM budget + cost hint sized from the actual operands ----
    md_bytes = jnp.dtype(packed["w1z_t"].dtype).itemsize
    w_bytes = ((Dz * H + Da * H + 2 * H * H + H * NHW * C) * md_bytes
               + (2 * C * groups + 3 * H + 3 * C) * 4)               # single-buffered
    io_bytes = 2 * (TB * S * (Dz + Da) * 4) + 2 * (TB * S * NHW * C * 4)  # 2x-buffered I/O
    y_bytes = TB * S * NHW * C * (2 if y_bf16 else 4)
    act_bytes = TB * S * H * 4 + 2 * y_bytes
    vmem_limit = int(min(max(int(1.25 * (w_bytes + io_bytes + act_bytes)) + (8 << 20),
                             32 << 20), 100 << 20))

    cost = pl.CostEstimate(
        flops=2 * B * S * (Dz * H + Da * H + 2 * H * H + H * NHW * C),
        transcendentals=B * C,
        bytes_accessed=(B * S * (Dz + Da) + B * S * NHW * C) * 4 + w_bytes,
    )

    kernel = functools.partial(_cdecoder_kernel, groups=groups, eps=eps, y_bf16=y_bf16)
    y = pl.pallas_call(
        kernel,
        out_shape=jax.ShapeDtypeStruct((B, S, NHW * C), jnp.float32),
        grid=(B // TB,),
        in_specs=[
            pl.BlockSpec((TB, S, Dz), lambda i: (i, 0, 0)),
            pl.BlockSpec((TB, S, Da), lambda i: (i, 0, 0)),
            _invariant_spec((Dz, H)),
            _invariant_spec((Da, H)),
            _invariant_spec((H, H)),
            _invariant_spec((H, H)),
            # NOTE: wd_flat stays VMEM-resident (fetched once per call). Streaming it
            # per (kh,kw) tap would cut its footprint 18->4 MiB at D=1024 but re-fetches
            # it per batch element and makes the deconv weight-DMA-bound; only worth it
            # if the resident footprint does not fit (v7x + very long sequences).
            _invariant_spec((H, NHW * C)),
            _invariant_spec((C, groups)),
            _invariant_spec((groups, C)),
            _invariant_spec((3, H)),
            _invariant_spec((3, C)),
        ],
        out_specs=pl.BlockSpec((TB, S, NHW * C), lambda i: (i, 0, 0)),
        compiler_params=pltpu.CompilerParams(
            dimension_semantics=("parallel",),
            vmem_limit_bytes=vmem_limit),
        cost_estimate=cost,
    )(z, att_t, packed["w1z_t"], packed["w1a_t"], packed["w2_t"], packed["w3_t"],
      packed["wd_flat"], packed["oh_cg"], packed["oh_gc"],
      packed["b_mlp"], packed["gn_pack"])

    # [B, S, 9*C] (columns hw-major, c-minor; hw = kh*3 + kw) -> PyTorch [B, C, S, 3, 3]
    return jnp.transpose(y.reshape(B, S, 3, 3, C), (0, 4, 1, 2, 3))


# ------------------------------- pure-JAX reference ---------------------------


def cdecoder_reference(params, z, att, *, groups=NUM_GROUPS, eps=EPS,
                       matmul_dtype=jnp.bfloat16):
    w1, b1 = params["fc1"]
    w2, b2 = params["fc2"]
    w3, b3 = params["fc3"]
    wd, bd = params["deconv"]
    gamma, beta = params["gn"]
    md, f32 = matmul_dtype, jnp.float32

    att_t = jnp.transpose(att, (0, 2, 1))
    x = jnp.concatenate([z, att_t], axis=-1)

    def lin(v, w, b):
        return jnp.dot(v.astype(md), w.T.astype(md), preferred_element_type=f32) + b

    h = jax.nn.relu(lin(x, w1, b1))
    h = jax.nn.relu(lin(h, w2, b2))
    h = lin(h, w3, b3)                                                 # [B, S, H]

    B, S, H = h.shape
    cin, cout = wd.shape[0], wd.shape[1]
    wd2 = wd.reshape(cin, cout * NHW)
    y = jnp.dot(h.reshape(B * S, H).astype(md), wd2.astype(md),
                preferred_element_type=f32).reshape(B, S, cout, 3, 3)
    y = y + bd[None, None, :, None, None]
    y = jnp.transpose(y, (0, 2, 1, 3, 4))                              # [B, C, S, 3, 3]

    cpg = cout // groups
    yg = y.reshape(B, groups, cpg * S * NHW)
    mean = jnp.mean(yg, axis=2, keepdims=True)
    var = jnp.mean((yg - mean) ** 2, axis=2, keepdims=True)
    yn = ((yg - mean) * jax.lax.rsqrt(var + eps)).reshape(B, cout, S, 3, 3)
    out = yn * gamma[None, :, None, None, None] + beta[None, :, None, None, None]
    return jax.nn.relu(out)


# ------------------------------- demo ------------------------------------------


if __name__ == "__main__":
    key = jax.random.PRNGKey(0)
    B, S, D = 2, 8, 256          # small stand-ins for the module's (batch, seq, 1024)
    GROUPS = NUM_GROUPS

    ks = jax.random.split(key, 10)

    def linear_init(k, cout, cin):
        kw, kb = jax.random.split(k)
        w = jax.random.normal(kw, (cout, cin), jnp.float32) * (cin ** -0.5)
        b = 0.1 * jax.random.normal(kb, (cout,), jnp.float32)
        return w, b

    kdw, kdb = jax.random.split(ks[3])
    params = {
        "fc1": linear_init(ks[0], D, 2 * D),
        "fc2": linear_init(ks[1], D, D),
        "fc3": linear_init(ks[2], D, D),
        "deconv": (
            jax.random.normal(kdw, (D, D, 1, 3, 3), jnp.float32) * (D ** -0.5),
            0.1 * jax.random.normal(kdb, (D,), jnp.float32),
        ),
        "gn": (
            1.0 + 0.05 * jax.random.normal(ks[4], (D,), jnp.float32),
            0.05 * jax.random.normal(ks[5], (D,), jnp.float32),
        ),
    }

    z = jax.random.normal(ks[6], (B, S, D), jnp.float32)      # [B, S, 1024-analog]
    att = jax.random.normal(ks[7], (B, D, S), jnp.float32)    # [B, 1024-analog, S]

    packed = pack_cdecoder_params(params, groups=GROUPS, z_features=D)

    fwd_tb1 = jax.jit(functools.partial(cdecoder_forward, groups=GROUPS, batch_tile=1))
    fwd_tb2 = jax.jit(functools.partial(cdecoder_forward, groups=GROUPS, batch_tile=2))
    fwd_b16 = jax.jit(functools.partial(cdecoder_forward, groups=GROUPS,
                                        batch_tile=1, y_bf16=True))

    out1 = jax.block_until_ready(fwd_tb1(packed, z, att))     # 1 batch elem / step
    out2 = jax.block_until_ready(fwd_tb2(packed, z, att))     # batch-tiled (M = TB*S)
    out3 = jax.block_until_ready(fwd_b16(packed, z, att))     # bf16 deconv activation

    assert out1.shape == (B, D, S, 3, 3) and out1.dtype == jnp.float32
    assert out2.shape == (B, D, S, 3, 3)
    assert out3.shape == (B, D, S, 3, 3)

    ref = cdecoder_reference(params, z, att, groups=GROUPS)
    np.testing.assert_allclose(np.asarray(out1), np.asarray(ref), rtol=1e-2, atol=1e-2)
    np.testing.assert_allclose(np.asarray(out2), np.asarray(ref), rtol=1e-2, atol=1e-2)
    np.testing.assert_allclose(np.asarray(out3), np.asarray(ref), rtol=5e-2, atol=5e-2)

    print("KERNEL_OK")
</pallas_src>

<mosaic_0001>
module attributes {stable_mosaic.version = 11 : i64} {
  func.func @_cdecoder_kernel(%arg0: i32, %arg1: memref<1x8x256xf32, #tpu.memory_space<vmem>>, %arg2: memref<1x8x256xf32, #tpu.memory_space<vmem>>, %arg3: memref<256x256xbf16, #tpu.memory_space<vmem>>, %arg4: memref<256x256xbf16, #tpu.memory_space<vmem>>, %arg5: memref<256x256xbf16, #tpu.memory_space<vmem>>, %arg6: memref<256x256xbf16, #tpu.memory_space<vmem>>, %arg7: memref<256x2304xbf16, #tpu.memory_space<vmem>>, %arg8: memref<256x32xf32, #tpu.memory_space<vmem>>, %arg9: memref<32x256xf32, #tpu.memory_space<vmem>>, %arg10: memref<3x256xf32, #tpu.memory_space<vmem>>, %arg11: memref<3x256xf32, #tpu.memory_space<vmem>>, %arg12: memref<1x8x2304xf32, #tpu.memory_space<vmem>>) attributes {dimension_semantics = [#tpu.dimension_semantics<parallel>], iteration_bounds = array<i64: 2>, scalar_prefetch = 0 : i64, scratch_operands = 0 : i64, tpu.core_type = #tpu.core_type<tc>, window_params = [{transform_indices = @transform_0, window_bounds = array<i64: 1, 8, 256>}, {transform_indices = @transform_1, window_bounds = array<i64: 1, 8, 256>}, {pipeline_mode = #tpu.pipeline_mode<synchronous>, transform_indices = @transform_2, window_bounds = array<i64: 256, 256>}, {pipeline_mode = #tpu.pipeline_mode<synchronous>, transform_indices = @transform_3, window_bounds = array<i64: 256, 256>}, {pipeline_mode = #tpu.pipeline_mode<synchronous>, transform_indices = @transform_4, window_bounds = array<i64: 256, 256>}, {pipeline_mode = #tpu.pipeline_mode<synchronous>, transform_indices = @transform_5, window_bounds = array<i64: 256, 256>}, {pipeline_mode = #tpu.pipeline_mode<synchronous>, transform_indices = @transform_6, window_bounds = array<i64: 256, 2304>}, {pipeline_mode = #tpu.pipeline_mode<synchronous>, transform_indices = @transform_7, window_bounds = array<i64: 256, 32>}, {pipeline_mode = #tpu.pipeline_mode<synchronous>, transform_indices = @transform_8, window_bounds = array<i64: 32, 256>}, {pipeline_mode = #tpu.pipeline_mode<synchronous>, transform_indices = @transform_9, window_bounds = array<i64: 3, 256>}, {pipeline_mode = #tpu.pipeline_mode<synchronous>, transform_indices = @transform_10, window_bounds = array<i64: 3, 256>}, {transform_indices = @transform_11, window_bounds = array<i64: 1, 8, 2304>}]} {
    %c0 = arith.constant 0 : index
    %c0_0 = arith.constant 0 : index
    %c0_1 = arith.constant 0 : index
    %0 = vector.load %arg1[%c0, %c0_0, %c0_1] : memref<1x8x256xf32, #tpu.memory_space<vmem>>, vector<1x8x256xf32>
    %1 = vector.shape_cast %0 : vector<1x8x256xf32> to vector<8x256xf32>
    %2 = arith.truncf %1 : vector<8x256xf32> to vector<8x256xbf16>
    %c0_2 = arith.constant 0 : index
    %c0_3 = arith.constant 0 : index
    %c0_4 = arith.constant 0 : index
    %3 = vector.load %arg2[%c0_2, %c0_3, %c0_4] : memref<1x8x256xf32, #tpu.memory_space<vmem>>, vector<1x8x256xf32>
    %4 = vector.shape_cast %3 : vector<1x8x256xf32> to vector<8x256xf32>
    %5 = arith.truncf %4 : vector<8x256xf32> to vector<8x256xbf16>
    %c0_5 = arith.constant 0 : index
    %c0_6 = arith.constant 0 : index
    %6 = vector.load %arg10[%c0_5, %c0_6] : memref<3x256xf32, #tpu.memory_space<vmem>>, vector<1x256xf32>
    %c1 = arith.constant 1 : index
    %c0_7 = arith.constant 0 : index
    %7 = vector.load %arg10[%c1, %c0_7] : memref<3x256xf32, #tpu.memory_space<vmem>>, vector<1x256xf32>
    %c2 = arith.constant 2 : index
    %c0_8 = arith.constant 0 : index
    %8 = vector.load %arg10[%c2, %c0_8] : memref<3x256xf32, #tpu.memory_space<vmem>>, vector<1x256xf32>
    %c0_9 = arith.constant 0 : index
    %c0_10 = arith.constant 0 : index
    %9 = vector.load %arg3[%c0_9, %c0_10] : memref<256x256xbf16, #tpu.memory_space<vmem>>, vector<256x256xbf16>
    %cst = arith.constant dense<0.000000e+00> : vector<8x256xf32>
    %10 = tpu.matmul %2, %9, %cst {dimension_numbers = #tpu.dot_dimension_numbers<[1], [0], [0], [1], [0, 0, 1, 1], [], []>} : vector<8x256xbf16>, vector<256x256xbf16>, vector<8x256xf32> -> vector<8x256xf32>
    %c0_11 = arith.constant 0 : index
    %c0_12 = arith.constant 0 : index
    %11 = vector.load %arg4[%c0_11, %c0_12] : memref<256x256xbf16, #tpu.memory_space<vmem>>, vector<256x256xbf16>
    %cst_13 = arith.constant dense<0.000000e+00> : vector<8x256xf32>
    %12 = tpu.matmul %5, %11, %cst_13 {dimension_numbers = #tpu.dot_dimension_numbers<[1], [0], [0], [1], [0, 0, 1, 1], [], []>} : vector<8x256xbf16>, vector<256x256xbf16>, vector<8x256xf32> -> vector<8x256xf32>
    %13 = arith.addf %10, %12 : vector<8x256xf32>
    %14 = vector.broadcast %6 : vector<1x256xf32> to vector<8x256xf32>
    %15 = arith.addf %13, %14 : vector<8x256xf32>
    %cst_14 = arith.constant 0.000000e+00 : f32
    %16 = vector.broadcast %cst_14 : f32 to vector<8x256xf32>
    %17 = arith.maximumf %15, %16 : vector<8x256xf32>
    %18 = arith.truncf %17 : vector<8x256xf32> to vector<8x256xbf16>
    %c0_15 = arith.constant 0 : index
    %c0_16 = arith.constant 0 : index
    %19 = vector.load %arg5[%c0_15, %c0_16] : memref<256x256xbf16, #tpu.memory_space<vmem>>, vector<256x256xbf16>
    %cst_17 = arith.constant dense<0.000000e+00> : vector<8x256xf32>
    %20 = tpu.matmul %18, %19, %cst_17 {dimension_numbers = #tpu.dot_dimension_numbers<[1], [0], [0], [1], [0, 0, 1, 1], [], []>} : vector<8x256xbf16>, vector<256x256xbf16>, vector<8x256xf32> -> vector<8x256xf32>
    %21 = vector.broadcast %7 : vector<1x256xf32> to vector<8x256xf32>
    %22 = arith.addf %20, %21 : vector<8x256xf32>
    %cst_18 = arith.constant 0.000000e+00 : f32
    %23 = vector.broadcast %cst_18 : f32 to vector<8x256xf32>
    %24 = arith.maximumf %22, %23 : vector<8x256xf32>
    %25 = arith.truncf %24 : vector<8x256xf32> to vector<8x256xbf16>
    %c0_19 = arith.constant 0 : index
    %c0_20 = arith.constant 0 : index
    %26 = vector.load %arg6[%c0_19, %c0_20] : memref<256x256xbf16, #tpu.memory_space<vmem>>, vector<256x256xbf16>
    %cst_21 = arith.constant dense<0.000000e+00> : vector<8x256xf32>
    %27 = tpu.matmul %25, %26, %cst_21 {dimension_numbers = #tpu.dot_dimension_numbers<[1], [0], [0], [1], [0, 0, 1, 1], [], []>} : vector<8x256xbf16>, vector<256x256xbf16>, vector<8x256xf32> -> vector<8x256xf32>
    %28 = vector.broadcast %8 : vector<1x256xf32> to vector<8x256xf32>
    %29 = arith.addf %27, %28 : vector<8x256xf32>
    %30 = arith.truncf %29 : vector<8x256xf32> to vector<8x256xbf16>
    %c0_22 = arith.constant 0 : index
    %c0_23 = arith.constant 0 : index
    %31 = vector.load %arg7[%c0_22, %c0_23] : memref<256x2304xbf16, #tpu.memory_space<vmem>>, vector<256x2304xbf16>
    %cst_24 = arith.constant dense<0.000000e+00> : vector<8x2304xf32>
    %32 = tpu.matmul %30, %31, %cst_24 {dimension_numbers = #tpu.dot_dimension_numbers<[1], [0], [0], [1], [0, 0, 1, 1], [], []>} : vector<8x256xbf16>, vector<256x2304xbf16>, vector<8x2304xf32> -> vector<8x2304xf32>
    %c0_25 = arith.constant 0 : index
    %c0_26 = arith.constant 0 : index
    %33 = vector.load %arg11[%c0_25, %c0_26] : memref<3x256xf32, #tpu.memory_space<vmem>>, vector<1x256xf32>
    %c1_27 = arith.constant 1 : index
    %c0_28 = arith.constant 0 : index
    %34 = vector.load %arg11[%c1_27, %c0_28] : memref<3x256xf32, #tpu.memory_space<vmem>>, vector<1x256xf32>
    %c2_29 = arith.constant 2 : index
    %c0_30 = arith.constant 0 : index
    %35 = vector.load %arg11[%c2_29, %c0_30] : memref<3x256xf32, #tpu.memory_space<vmem>>, vector<1x256xf32>
    %cst_31 = arith.constant 0.000000e+00 : f32
    %36 = vector.broadcast %cst_31 : f32 to vector<1x256xf32>
    %cst_32 = arith.constant 0.000000e+00 : f32
    %37 = vector.broadcast %cst_32 : f32 to vector<1x256xf32>
    %38 = vector.extract_strided_slice %32 {offsets = [0, 0], sizes = [8, 256], strides = [1, 1]} : vector<8x2304xf32> to vector<8x256xf32>
    %cst_33 = arith.constant dense<0.000000e+00> : vector<256xf32>
    %39 = vector.multi_reduction <add>, %38, %cst_33 [0] : vector<8x256xf32> to vector<256xf32>
    %40 = vector.shape_cast %39 : vector<256xf32> to vector<1x256xf32>
    %41 = arith.addf %36, %40 : vector<1x256xf32>
    %42 = arith.mulf %38, %38 : vector<8x256xf32>
    %cst_34 = arith.constant dense<0.000000e+00> : vector<256xf32>
    %43 = vector.multi_reduction <add>, %42, %cst_34 [0] : vector<8x256xf32> to vector<256xf32>
    %44 = vector.shape_cast %43 : vector<256xf32> to vector<1x256xf32>
    %45 = arith.addf %37, %44 : vector<1x256xf32>
    %46 = vector.extract_strided_slice %32 {offsets = [0, 256], sizes = [8, 256], strides = [1, 1]} : vector<8x2304xf32> to vector<8x256xf32>
    %cst_35 = arith.constant dense<0.000000e+00> : vector<256xf32>
    %47 = vector.multi_reduction <add>, %46, %cst_35 [0] : vector<8x256xf32> to vector<256xf32>
    %48 = vector.shape_cast %47 : vector<256xf32> to vector<1x256xf32>
    %49 = arith.addf %41, %48 : vector<1x256xf32>
    %50 = arith.mulf %46, %46 : vector<8x256xf32>
    %cst_36 = arith.constant dense<0.000000e+00> : vector<256xf32>
    %51 = vector.multi_reduction <add>, %50, %cst_36 [0] : vector<8x256xf32> to vector<256xf32>
    %52 = vector.shape_cast %51 : vector<256xf32> to vector<1x256xf32>
    %53 = arith.addf %45, %52 : vector<1x256xf32>
    %54 = vector.extract_strided_slice %32 {offsets = [0, 512], sizes = [8, 256], strides = [1, 1]} : vector<8x2304xf32> to vector<8x256xf32>
    %cst_37 = arith.constant dense<0.000000e+00> : vector<256xf32>
    %55 = vector.multi_reduction <add>, %54, %cst_37 [0] : vector<8x256xf32> to vector<256xf32>
    %56 = vector.shape_cast %55 : vector<256xf32> to vector<1x256xf32>
    %57 = arith.addf %49, %56 : vector<1x256xf32>
    %58 = arith.mulf %54, %54 : vector<8x256xf32>
    %cst_38 = arith.constant dense<0.000000e+00> : vector<256xf32>
    %59 = vector.multi_reduction <add>, %58, %cst_38 [0] : vector<8x256xf32> to vector<256xf32>
    %60 = vector.shape_cast %59 : vector<256xf32> to vector<1x256xf32>
    %61 = arith.addf %53, %60 : vector<1x256xf32>
    %62 = vector.extract_strided_slice %32 {offsets = [0, 768], sizes = [8, 256], strides = [1, 1]} : vector<8x2304xf32> to vector<8x256xf32>
    %cst_39 = arith.constant dense<0.000000e+00> : vector<256xf32>
    %63 = vector.multi_reduction <add>, %62, %cst_39 [0] : vector<8x256xf32> to vector<256xf32>
    %64 = vector.shape_cast %63 : vector<256xf32> to vector<1x256xf32>
    %65 = arith.addf %57, %64 : vector<1x256xf32>
    %66 = arith.mulf %62, %62 : vector<8x256xf32>
    %cst_40 = arith.constant dense<0.000000e+00> : vector<256xf32>
    %67 = vector.multi_reduction <add>, %66, %cst_40 [0] : vector<8x256xf32> to vector<256xf32>
    %68 = vector.shape_cast %67 : vector<256xf32> to vector<1x256xf32>
    %69 = arith.addf %61, %68 : vector<1x256xf32>
    %70 = vector.extract_strided_slice %32 {offsets = [0, 1024], sizes = [8, 256], strides = [1, 1]} : vector<8x2304xf32> to vector<8x256xf32>
    %cst_41 = arith.constant dense<0.000000e+00> : vector<256xf32>
    %71 = vector.multi_reduction <add>, %70, %cst_41 [0] : vector<8x256xf32> to vector<256xf32>
    %72 = vector.shape_cast %71 : vector<256xf32> to vector<1x256xf32>
    %73 = arith.addf %65, %72 : vector<1x256xf32>
    %74 = arith.mulf %70, %70 : vector<8x256xf32>
    %cst_42 = arith.constant dense<0.000000e+00> : vector<256xf32>
    %75 = vector.multi_reduction <add>, %74, %cst_42 [0] : vector<8x256xf32> to vector<256xf32>
    %76 = vector.shape_cast %75 : vector<256xf32> to vector<1x256xf32>
    %77 = arith.addf %69, %76 : vector<1x256xf32>
    %78 = vector.extract_strided_slice %32 {offsets = [0, 1280], sizes = [8, 256], strides = [1, 1]} : vector<8x2304xf32> to vector<8x256xf32>
    %cst_43 = arith.constant dense<0.000000e+00> : vector<256xf32>
    %79 = vector.multi_reduction <add>, %78, %cst_43 [0] : vector<8x256xf32> to vector<256xf32>
    %80 = vector.shape_cast %79 : vector<256xf32> to vector<1x256xf32>
    %81 = arith.addf %73, %80 : vector<1x256xf32>
    %82 = arith.mulf %78, %78 : vector<8x256xf32>
    %cst_44 = arith.constant dense<0.000000e+00> : vector<256xf32>
    %83 = vector.multi_reduction <add>, %82, %cst_44 [0] : vector<8x256xf32> to vector<256xf32>
    %84 = vector.shape_cast %83 : vector<256xf32> to vector<1x256xf32>
    %85 = arith.addf %77, %84 : vector<1x256xf32>
    %86 = vector.extract_strided_slice %32 {offsets = [0, 1536], sizes = [8, 256], strides = [1, 1]} : vector<8x2304xf32> to vector<8x256xf32>
    %cst_45 = arith.constant dense<0.000000e+00> : vector<256xf32>
    %87 = vector.multi_reduction <add>, %86, %cst_45 [0] : vector<8x256xf32> to vector<256xf32>
    %88 = vector.shape_cast %87 : vector<256xf32> to vector<1x256xf32>
    %89 = arith.addf %81, %88 : vector<1x256xf32>
    %90 = arith.mulf %86, %86 : vector<8x256xf32>
    %cst_46 = arith.constant dense<0.000000e+00> : vector<256xf32>
    %91 = vector.multi_reduction <add>, %90, %cst_46 [0] : vector<8x256xf32> to vector<256xf32>
    %92 = vector.shape_cast %91 : vector<256xf32> to vector<1x256xf32>
    %93 = arith.addf %85, %92 : vector<1x256xf32>
    %94 = vector.extract_strided_slice %32 {offsets = [0, 1792], sizes = [8, 256], strides = [1, 1]} : vector<8x2304xf32> to vector<8x256xf32>
    %cst_47 = arith.constant dense<0.000000e+00> : vector<256xf32>
    %95 = vector.multi_reduction <add>, %94, %cst_47 [0] : vector<8x256xf32> to vector<256xf32>
    %96 = vector.shape_cast %95 : vector<256xf32> to vector<1x256xf32>
    %97 = arith.addf %89, %96 : vector<1x256xf32>
    %98 = arith.mulf %94, %94 : vector<8x256xf32>
    %cst_48 = arith.constant dense<0.000000e+00> : vector<256xf32>
    %99 = vector.multi_reduction <add>, %98, %cst_48 [0] : vector<8x256xf32> to vector<256xf32>
    %100 = vector.shape_cast %99 : vector<256xf32> to vector<1x256xf32>
    %101 = arith.addf %93, %100 : vector<1x256xf32>
    %102 = vector.extract_strided_slice %32 {offsets = [0, 2048], sizes = [8, 256], strides = [1, 1]} : vector<8x2304xf32> to vector<8x256xf32>
    %cst_49 = arith.constant dense<0.000000e+00> : vector<256xf32>
    %103 = vector.multi_reduction <add>, %102, %cst_49 [0] : vector<8x256xf32> to vector<256xf32>
    %104 = vector.shape_cast %103 : vector<256xf32> to vector<1x256xf32>
    %105 = arith.addf %97, %104 : vector<1x256xf32>
    %106 = arith.mulf %102, %102 : vector<8x256xf32>
    %cst_50 = arith.constant dense<0.000000e+00> : vector<256xf32>
    %107 = vector.multi_reduction <add>, %106, %cst_50 [0] : vector<8x256xf32> to vector<256xf32>
    %108 = vector.shape_cast %107 : vector<256xf32> to vector<1x256xf32>
    %109 = arith.addf %101, %108 : vector<1x256xf32>
    %cst_51 = arith.constant 2.000000e+00 : f32
    %110 = vector.broadcast %cst_51 : f32 to vector<1x256xf32>
    %111 = arith.mulf %110, %33 : vector<1x256xf32>
    %112 = arith.mulf %111, %105 : vector<1x256xf32>
    %113 = arith.addf %109, %112 : vector<1x256xf32>
    %cst_52 = arith.constant 7.200000e+01 : f32
    %114 = vector.broadcast %cst_52 : f32 to vector<1x256xf32>
    %115 = arith.mulf %114, %33 : vector<1x256xf32>
    %116 = arith.mulf %115, %33 : vector<1x256xf32>
    %117 = arith.addf %113, %116 : vector<1x256xf32>
    %cst_53 = arith.constant 7.200000e+01 : f32
    %118 = vector.broadcast %cst_53 : f32 to vector<1x256xf32>
    %119 = arith.mulf %118, %33 : vector<1x256xf32>
    %120 = arith.addf %105, %119 : vector<1x256xf32>
    %121 = tpu.concatenate %120, %117 in 0 : vector<1x256xf32>, vector<1x256xf32> -> vector<2x256xf32>
    %c0_54 = arith.constant 0 : index
    %c0_55 = arith.constant 0 : index
    %122 = vector.load %arg8[%c0_54, %c0_55] : memref<256x32xf32, #tpu.memory_space<vmem>>, vector<256x32xf32>
    %cst_56 = arith.constant dense<0.000000e+00> : vector<2x32xf32>
    %123 = tpu.matmul %121, %122, %cst_56 {dimension_numbers = #tpu.dot_dimension_numbers<[1], [0], [0], [1], [0, 0, 1, 1], [], []>} : vector<2x256xf32>, vector<256x32xf32>, vector<2x32xf32> -> vector<2x32xf32>
    %c0_57 = arith.constant 0 : index
    %c0_58 = arith.constant 0 : index
    %124 = vector.load %arg9[%c0_57, %c0_58] : memref<32x256xf32, #tpu.memory_space<vmem>>, vector<32x256xf32>
    %cst_59 = arith.constant dense<0.000000e+00> : vector<2x256xf32>
    %125 = tpu.matmul %123, %124, %cst_59 {dimension_numbers = #tpu.dot_dimension_numbers<[1], [0], [0], [1], [0, 0, 1, 1], [], []>} : vector<2x32xf32>, vector<32x256xf32>, vector<2x256xf32> -> vector<2x256xf32>
    %126 = vector.extract_strided_slice %125 {offsets = [0, 0], sizes = [1, 256], strides = [1, 1]} : vector<2x256xf32> to vector<1x256xf32>
    %cst_60 = arith.constant 0.00173611112 : f32
    %127 = vector.broadcast %cst_60 : f32 to vector<1x256xf32>
    %128 = arith.mulf %126, %127 : vector<1x256xf32>
    %129 = vector.extract_strided_slice %125 {offsets = [1, 0], sizes = [1, 256], strides = [1, 1]} : vector<2x256xf32> to vector<1x256xf32>
    %cst_61 = arith.constant 0.00173611112 : f32
    %130 = vector.broadcast %cst_61 : f32 to vector<1x256xf32>
    %131 = arith.mulf %129, %130 : vector<1x256xf32>
    %132 = arith.mulf %128, %128 : vector<1x256xf32>
    %133 = arith.subf %131, %132 : vector<1x256xf32>
    %cst_62 = arith.constant 0.000000e+00 : f32
    %134 = vector.broadcast %cst_62 : f32 to vector<1x256xf32>
    %135 = arith.maximumf %133, %134 : vector<1x256xf32>
    %cst_63 = arith.constant 9.99999974E-6 : f32
    %136 = vector.broadcast %cst_63 : f32 to vector<1x256xf32>
    %137 = arith.addf %135, %136 : vector<1x256xf32>
    %138 = math.rsqrt %137 : vector<1x256xf32>
    %139 = arith.mulf %138, %34 : vector<1x256xf32>
    %140 = arith.subf %33, %128 : vector<1x256xf32>
    %141 = arith.mulf %140, %139 : vector<1x256xf32>
    %142 = arith.addf %35, %141 : vector<1x256xf32>
    %143 = tpu.concatenate %139, %139, %139, %139, %139, %139, %139, %139, %139 in 1 : vector<1x256xf32>, vector<1x256xf32>, vector<1x256xf32>, vector<1x256xf32>, vector<1x256xf32>, vector<1x256xf32>, vector<1x256xf32>, vector<1x256xf32>, vector<1x256xf32> -> vector<1x2304xf32>
    %144 = tpu.concatenate %142, %142, %142, %142, %142, %142, %142, %142, %142 in 1 : vector<1x256xf32>, vector<1x256xf32>, vector<1x256xf32>, vector<1x256xf32>, vector<1x256xf32>, vector<1x256xf32>, vector<1x256xf32>, vector<1x256xf32>, vector<1x256xf32> -> vector<1x2304xf32>
    %145 = vector.broadcast %143 : vector<1x2304xf32> to vector<8x2304xf32>
    %146 = arith.mulf %32, %145 : vector<8x2304xf32>
    %147 = vector.broadcast %144 : vector<1x2304xf32> to vector<8x2304xf32>
    %148 = arith.addf %146, %147 : vector<8x2304xf32>
    %cst_64 = arith.constant 0.000000e+00 : f32
    %149 = vector.broadcast %cst_64 : f32 to vector<8x2304xf32>
    %150 = arith.maximumf %148, %149 : vector<8x2304xf32>
    %c0_65 = arith.constant 0 : index
    %c0_66 = arith.constant 0 : index
    %c0_67 = arith.constant 0 : index
    %151 = vector.load %arg12[%c0_65, %c0_66, %c0_67] : memref<1x8x2304xf32, #tpu.memory_space<vmem>>, vector<1x8x2304xf32>
    %152 = vector.shape_cast %151 : vector<1x8x2304xf32> to vector<8x2304xf32>
    %153 = vector.shape_cast %150 : vector<8x2304xf32> to vector<1x8x2304xf32>
    tpu.vector_store %arg12[%c0_65, %c0_66, %c0_67], %153 {strides = array<i32>} : memref<1x8x2304xf32, #tpu.memory_space<vmem>>, vector<1x8x2304xf32>,
    return
  }
  func.func @transform_0(%arg0: i32) -> (i32, i32, i32) {
    %c0_i32 = arith.constant 0 : i32
    %c0_i32_0 = arith.constant 0 : i32
    %c0_i32_1 = arith.constant 0 : i32
    return %arg0, %c0_i32, %c0_i32_0 : i32, i32, i32
  }
  func.func @transform_1(%arg0: i32) -> (i32, i32, i32) {
    %c0_i32 = arith.constant 0 : i32
    %c0_i32_0 = arith.constant 0 : i32
    %c0_i32_1 = arith.constant 0 : i32
    return %arg0, %c0_i32, %c0_i32_0 : i32, i32, i32
  }
  func.func @transform_2(%arg0: i32) -> (i32, i32) {
    %c0_i32 = arith.constant 0 : i32
    %c0_i32_0 = arith.constant 0 : i32
    %c0_i32_1 = arith.constant 0 : i32
    return %c0_i32, %c0_i32_0 : i32, i32
  }
  func.func @transform_3(%arg0: i32) -> (i32, i32) {
    %c0_i32 = arith.constant 0 : i32
    %c0_i32_0 = arith.constant 0 : i32
    %c0_i32_1 = arith.constant 0 : i32
    return %c0_i32, %c0_i32_0 : i32, i32
  }
  func.func @transform_4(%arg0: i32) -> (i32, i32) {
    %c0_i32 = arith.constant 0 : i32
    %c0_i32_0 = arith.constant 0 : i32
    %c0_i32_1 = arith.constant 0 : i32
    return %c0_i32, %c0_i32_0 : i32, i32
  }
  func.func @transform_5(%arg0: i32) -> (i32, i32) {
    %c0_i32 = arith.constant 0 : i32
    %c0_i32_0 = arith.constant 0 : i32
    %c0_i32_1 = arith.constant 0 : i32
    return %c0_i32, %c0_i32_0 : i32, i32
  }
  func.func @transform_6(%arg0: i32) -> (i32, i32) {
    %c0_i32 = arith.constant 0 : i32
    %c0_i32_0 = arith.constant 0 : i32
    %c0_i32_1 = arith.constant 0 : i32
    return %c0_i32, %c0_i32_0 : i32, i32
  }
  func.func @transform_7(%arg0: i32) -> (i32, i32) {
    %c0_i32 = arith.constant 0 : i32
    %c0_i32_0 = arith.constant 0 : i32
    %c0_i32_1 = arith.constant 0 : i32
    return %c0_i32, %c0_i32_0 : i32, i32
  }
  func.func @transform_8(%arg0: i32) -> (i32, i32) {
    %c0_i32 = arith.constant 0 : i32
    %c0_i32_0 = arith.constant 0 : i32
    %c0_i32_1 = arith.constant 0 : i32
    return %c0_i32, %c0_i32_0 : i32, i32
  }
  func.func @transform_9(%arg0: i32) -> (i32, i32) {
    %c0_i32 = arith.constant 0 : i32
    %c0_i32_0 = arith.constant 0 : i32
    %c0_i32_1 = arith.constant 0 : i32
    return %c0_i32, %c0_i32_0 : i32, i32
  }
  func.func @transform_10(%arg0: i32) -> (i32, i32) {
    %c0_i32 = arith.constant 0 : i32
    %c0_i32_0 = arith.constant 0 : i32
    %c0_i32_1 = arith.constant 0 : i32
    return %c0_i32, %c0_i32_0 : i32, i32
  }
  func.func @transform_11(%arg0: i32) -> (i32, i32, i32) {
    %c0_i32 = arith.constant 0 : i32
    %c0_i32_0 = arith.constant 0 : i32
    %c0_i32_1 = arith.constant 0 : i32
    return %arg0, %c0_i32, %c0_i32_0 : i32, i32, i32
  }
}

</mosaic_0001>

<llo_original>
// kernel: cdecoder_forward.1
$region0: #{cdecoder_forward.1}
  #allocation0 [shape = 'u32[]', space=smem, size = 0x4, offset = 0x4, fixed_abs, tag = 'smem constant byte address 0x4 - core index']
  #allocation1 [shape = 'u32[72,128]{1,0:T(1,128)}', space=vmem, size = 0x9000, scoped, tag = 'internal scratch']
  %s0 = inlined_call_operand.hbm [shape: f32[2,8,256], index: 0, kind: input, shape index: {}]
  %s1 = inlined_call_operand.hbm [shape: f32[2,8,256], index: 1, kind: input, shape index: {}]
  %s2 = inlined_call_operand.hbm [shape: bf16[256,256], index: 2, kind: input, shape index: {}]
  %s3 = inlined_call_operand.hbm [shape: bf16[256,256], index: 3, kind: input, shape index: {}]
  %s4 = inlined_call_operand.hbm [shape: bf16[256,256], index: 4, kind: input, shape index: {}]
  %s5 = inlined_call_operand.hbm [shape: bf16[256,256], index: 5, kind: input, shape index: {}]
  %s6 = inlined_call_operand.hbm [shape: bf16[256,2304], index: 6, kind: input, shape index: {}]
  %s7 = inlined_call_operand.vmem [shape: f32[256,32], index: 7, kind: input, shape index: {}]
  %s8 = inlined_call_operand.hbm [shape: f32[32,256], index: 8, kind: input, shape index: {}]
  %s9 = inlined_call_operand.hbm [shape: f32[3,256], index: 9, kind: input, shape index: {}]
  %s10 = inlined_call_operand.hbm [shape: f32[3,256], index: 10, kind: input, shape index: {}]
  %s11 = inlined_call_operand.hbm [shape: f32[2,8,2304], index: 11, kind: output, shape index: {}]
  %s12 = sld [smem:[#allocation0]]
  $region117: #{cdecoder_forward.1} parent=0
    _
  %s14 = ssub.s32 1, %s12
  %s15 = scalar_select 0, %s14, %s12
  $region1: #{cdecoder_forward.1} parent=0
    #allocation2 [shape = 'u8[16384]{0}', space=vmem, size = 0x4000, scoped, tag = 'input window, operand 0']
    #allocation3 [shape = 's32[2]{0}', space=sflag, size = 0x8, scoped, tag = 'scoped memory for cdecoder_forward.1']
    #allocation4 [shape = 's32[2]{0}', space=sflag, size = 0x8, scoped, tag = 'scoped memory for cdecoder_forward.1']
    #allocation5 [shape = 'u8[16384]{0}', space=vmem, size = 0x4000, scoped, tag = 'input window, operand 1']
    #allocation6 [shape = 's32[2]{0}', space=sflag, size = 0x8, scoped, tag = 'scoped memory for cdecoder_forward.1']
    #allocation7 [shape = 'u8[131072]{0}', space=vmem, size = 0x20000, scoped, tag = 'input window, operand 2, single buffered']
    #allocation8 [shape = 'u8[131072]{0}', space=vmem, size = 0x20000, scoped, tag = 'input window, operand 3, single buffered']
    #allocation9 [shape = 's32[1]{0}', space=sflag, size = 0x4, scoped, tag = 'scoped memory for cdecoder_forward.1']
    #allocation10 [shape = 'u8[131072]{0}', space=vmem, size = 0x20000, scoped, tag = 'input window, operand 4, single buffered']
    #allocation11 [shape = 'u8[131072]{0}', space=vmem, size = 0x20000, scoped, tag = 'input window, operand 5, single buffered']
    #allocation12 [shape = 's32[1]{0}', space=sflag, size = 0x4, scoped, tag = 'scoped memory for cdecoder_forward.1']
    #allocation13 [shape = 'u8[1179648]{0}', space=vmem, size = 0x120000, scoped, tag = 'input window, operand 6, single buffered']
    #allocation14 [shape = 'u8[32768]{0}', space=vmem, size = 0x8000, scoped, tag = 'input window, operand 8, single buffered']
    #allocation15 [shape = 's32[1]{0}', space=sflag, size = 0x4, scoped, tag = 'scoped memory for cdecoder_forward.1']
    #allocation16 [shape = 'u8[4096]{0}', space=vmem, size = 0x1000, scoped, tag = 'input window, operand 9, single buffered']
    #allocation17 [shape = 'u8[4096]{0}', space=vmem, size = 0x1000, scoped, tag = 'input window, operand 10, single buffered']
    #allocation18 [shape = 's32[1]{0}', space=sflag, size = 0x4, scoped, tag = 'scoped memory for cdecoder_forward.1']
    #allocation19 [shape = 'u8[147456]{0}', space=vmem, size = 0x24000, scoped, tag = 'output window, operand 0']
    %16 = vsyncpa [#allocation3], 0
    %s17 = scalar_lea.sflag [#allocation3], 1
    %18 = vsyncpa %s17, 0
    %19 = vsyncpa [#allocation6], 0
    %s20 = scalar_lea.sflag [#allocation6], 1
    %21 = vsyncpa %s20, 0
    %22 = vsyncpa [#allocation9], 0
    %23 = vsyncpa [#allocation12], 0
    %24 = vsyncpa [#allocation15], 0
    %25 = vsyncpa [#allocation18], 0
    %26 = vsyncpa [#allocation4], 0
    %s27 = scalar_lea.sflag [#allocation4], 1
    %28 = vsyncpa %s27, 0
    loop: start=0, step=1, limit=4
    $region2: #{cdecoder_forward.1} parent=1 // loop_pre_header
      _
    $region3: #{cdecoder_forward.1} parent=1 // loop_header
      %s30 = sphi 0, %s34
      %p31 = scmp.ge.s32.totalorder %s30, 4
      %s40 = sphi 0, %s42
      %s43 = sphi 0, %s40
      %s44 = sphi 0, %s43
      %s60 = sphi 0, %s44
      %s66 = sphi 0, %s68
      %s69 = sphi 0, %s66
      %s70 = sphi 0, %s69
      %s86 = sphi 0, %s70
      %s90 = sphi 0, %s90
      %s92 = sphi 0, %s90
      %s93 = sphi 0, %s92
      %s107 = sphi 0, %s93
      %s111 = sphi 0, %s111
      %s113 = sphi 0, %s111
      %s114 = sphi 0, %s113
      %s128 = sphi 0, %s114
      %s132 = sphi 0, %s132
      %s134 = sphi 0, %s132
      %s135 = sphi 0, %s134
      %s149 = sphi 0, %s135
      %s153 = sphi 0, %s153
      %s155 = sphi 0, %s153
      %s156 = sphi 0, %s155
      %s170 = sphi 0, %s156
      %s174 = sphi 0, %s174
      %s176 = sphi 0, %s174
      %s177 = sphi 0, %s176
      %s191 = sphi 0, %s177
      %s195 = sphi 0, %s195
      %s197 = sphi 0, %s195
      %s198 = sphi 0, %s197
      %s212 = sphi 0, %s198
      %s216 = sphi 0, %s216
      %s218 = sphi 0, %s216
      %s219 = sphi 0, %s218
      %s233 = sphi 0, %s219
      %s237 = sphi 0, %s237
      %s239 = sphi 0, %s237
      %s240 = sphi 0, %s239
      %s254 = sphi 0, %s240
      %s258 = sphi 0, %s258
      %s260 = sphi 0, %s258
      %s261 = sphi 0, %s260
      %s275 = sphi 0, %s261
      %s281 = sphi 0, %s283
      %s284 = sphi 0, %s281
      %s285 = sphi 0, %s284
      %s301 = sphi 0, %s285
    $region4: #{cdecoder_forward.1} parent=1 // loop_header_branch
      %33 = sbr.rel (%p31) target = $region8
    $region5: #{cdecoder_forward.1} parent=1 // loop_body
      %s35 = ssub.s32 %s30, 1
      %s36 = ssub.s32 %s30, 2
      %s37 = sadd.s32 %s30, 1
      %s38 = ssub.s32 %s30, %s37
      %p39 = scmp.eq.s32.totalorder %s38, 0
      %s41 = sadd.s32 %s40, 1
      %s42 = scalar_select %p39, %s40, %s41
      %p45 = pneg %p39
      %p46 = scmp.eq.s32.totalorder %s30, 1
      %p47 = por %p45, %p46
      %p48 = scmp.ne.s32.totalorder %s40, %s43
      %p49 = scmp.eq.s32.totalorder %s30, 0
      %p50 = por %p48, %p49
      %p51 = scmp.ne.s32.totalorder %s40, %s43
      %p52 = scmp.eq.s32.totalorder %s35, 1
      %p53 = por %p51, %p52
      %p54 = scmp.ne.s32.totalorder %s43, %s44
      %p55 = scmp.eq.s32.totalorder %s35, 0
      %p56 = por %p54, %p55
      %p57 = scmp.ne.s32.totalorder %s43, %s44
      %p58 = scmp.eq.s32.totalorder %s36, 1
      %p59 = por %p57, %p58
      %p61 = scmp.ne.s32.totalorder %s44, %s60
      %p62 = scmp.eq.s32.totalorder %s36, 0
      %p63 = por %p61, %p62
      %s64 = ssub.s32 %s30, %s37
      %p65 = scmp.eq.s32.totalorder %s64, 0
      %s67 = sadd.s32 %s66, 1
      %s68 = scalar_select %p65, %s66, %s67
      %p71 = pneg %p65
      %p72 = scmp.eq.s32.totalorder %s30, 1
      %p73 = por %p71, %p72
      %p74 = scmp.ne.s32.totalorder %s66, %s69
      %p75 = scmp.eq.s32.totalorder %s30, 0
      %p76 = por %p74, %p75
      %p77 = scmp.ne.s32.totalorder %s66, %s69
      %p78 = scmp.eq.s32.totalorder %s35, 1
      %p79 = por %p77, %p78
      %p80 = scmp.ne.s32.totalorder %s69, %s70
      %p81 = scmp.eq.s32.totalorder %s35, 0
      %p82 = por %p80, %p81
      %p83 = scmp.ne.s32.totalorder %s69, %s70
      %p84 = scmp.eq.s32.totalorder %s36, 1
      %p85 = por %p83, %p84
      %p87 = scmp.ne.s32.totalorder %s70, %s86
      %p88 = scmp.eq.s32.totalorder %s36, 0
      %p89 = por %p87, %p88
      %s91 = sadd.s32 %s90, 1
      %p94 = scmp.eq.s32.totalorder %s30, 1
      %p95 = scmp.ne.s32.totalorder %s90, %s92
      %p96 = scmp.eq.s32.totalorder %s30, 0
      %p97 = por %p95, %p96
      %p98 = scmp.ne.s32.totalorder %s90, %s92
      %p99 = scmp.eq.s32.totalorder %s35, 1
      %p100 = por %p98, %p99
      %p101 = scmp.ne.s32.totalorder %s92, %s93
      %p102 = scmp.eq.s32.totalorder %s35, 0
      %p103 = por %p101, %p102
      %p104 = scmp.ne.s32.totalorder %s92, %s93
      %p105 = scmp.eq.s32.totalorder %s36, 1
      %p106 = por %p104, %p105
      %p108 = scmp.ne.s32.totalorder %s93, %s107
      %p109 = scmp.eq.s32.totalorder %s36, 0
      %p110 = por %p108, %p109
      %s112 = sadd.s32 %s111, 1
      %p115 = scmp.eq.s32.totalorder %s30, 1
      %p116 = scmp.ne.s32.totalorder %s111, %s113
      %p117 = scmp.eq.s32.totalorder %s30, 0
      %p118 = por %p116, %p117
      %p119 = scmp.ne.s32.totalorder %s111, %s113
      %p120 = scmp.eq.s32.totalorder %s35, 1
      %p121 = por %p119, %p120
      %p122 = scmp.ne.s32.totalorder %s113, %s114
      %p123 = scmp.eq.s32.totalorder %s35, 0
      %p124 = por %p122, %p123
      %p125 = scmp.ne.s32.totalorder %s113, %s114
      %p126 = scmp.eq.s32.totalorder %s36, 1
      %p127 = por %p125, %p126
      %p129 = scmp.ne.s32.totalorder %s114, %s128
      %p130 = scmp.eq.s32.totalorder %s36, 0
      %p131 = por %p129, %p130
      %s133 = sadd.s32 %s132, 1
      %p136 = scmp.eq.s32.totalorder %s30, 1
      %p137 = scmp.ne.s32.totalorder %s132, %s134
      %p138 = scmp.eq.s32.totalorder %s30, 0
      %p139 = por %p137, %p138
      %p140 = scmp.ne.s32.totalorder %s132, %s134
      %p141 = scmp.eq.s32.totalorder %s35, 1
      %p142 = por %p140, %p141
      %p143 = scmp.ne.s32.totalorder %s134, %s135
      %p144 = scmp.eq.s32.totalorder %s35, 0
      %p145 = por %p143, %p144
      %p146 = scmp.ne.s32.totalorder %s134, %s135
      %p147 = scmp.eq.s32.totalorder %s36, 1
      %p148 = por %p146, %p147
      %p150 = scmp.ne.s32.totalorder %s135, %s149
      %p151 = scmp.eq.s32.totalorder %s36, 0
      %p152 = por %p150, %p151
      %s154 = sadd.s32 %s153, 1
      %p157 = scmp.eq.s32.totalorder %s30, 1
      %p158 = scmp.ne.s32.totalorder %s153, %s155
      %p159 = scmp.eq.s32.totalorder %s30, 0
      %p160 = por %p158, %p159
      %p161 = scmp.ne.s32.totalorder %s153, %s155
      %p162 = scmp.eq.s32.totalorder %s35, 1
      %p163 = por %p161, %p162
      %p164 = scmp.ne.s32.totalorder %s155, %s156
      %p165 = scmp.eq.s32.totalorder %s35, 0
      %p166 = por %p164, %p165
      %p167 = scmp.ne.s32.totalorder %s155, %s156
      %p168 = scmp.eq.s32.totalorder %s36, 1
      %p169 = por %p167, %p168
      %p171 = scmp.ne.s32.totalorder %s156, %s170
      %p172 = scmp.eq.s32.totalorder %s36, 0
      %p173 = por %p171, %p172
      %s175 = sadd.s32 %s174, 1
      %p178 = scmp.eq.s32.totalorder %s30, 1
      %p179 = scmp.ne.s32.totalorder %s174, %s176
      %p180 = scmp.eq.s32.totalorder %s30, 0
      %p181 = por %p179, %p180
      %p182 = scmp.ne.s32.totalorder %s174, %s176
      %p183 = scmp.eq.s32.totalorder %s35, 1
      %p184 = por %p182, %p183
      %p185 = scmp.ne.s32.totalorder %s176, %s177
      %p186 = scmp.eq.s32.totalorder %s35, 0
      %p187 = por %p185, %p186
      %p188 = scmp.ne.s32.totalorder %s176, %s177
      %p189 = scmp.eq.s32.totalorder %s36, 1
      %p190 = por %p188, %p189
      %p192 = scmp.ne.s32.totalorder %s177, %s191
      %p193 = scmp.eq.s32.totalorder %s36, 0
      %p194 = por %p192, %p193
      %s196 = sadd.s32 %s195, 1
      %p199 = scmp.eq.s32.totalorder %s30, 1
      %p200 = scmp.ne.s32.totalorder %s195, %s197
      %p201 = scmp.eq.s32.totalorder %s30, 0
      %p202 = por %p200, %p201
      %p203 = scmp.ne.s32.totalorder %s195, %s197
      %p204 = scmp.eq.s32.totalorder %s35, 1
      %p205 = por %p203, %p204
      %p206 = scmp.ne.s32.totalorder %s197, %s198
      %p207 = scmp.eq.s32.totalorder %s35, 0
      %p208 = por %p206, %p207
      %p209 = scmp.ne.s32.totalorder %s197, %s198
      %p210 = scmp.eq.s32.totalorder %s36, 1
      %p211 = por %p209, %p210
      %p213 = scmp.ne.s32.totalorder %s198, %s212
      %p214 = scmp.eq.s32.totalorder %s36, 0
      %p215 = por %p213, %p214
      %s217 = sadd.s32 %s216, 1
      %p220 = scmp.eq.s32.totalorder %s30, 1
      %p221 = scmp.ne.s32.totalorder %s216, %s218
      %p222 = scmp.eq.s32.totalorder %s30, 0
      %p223 = por %p221, %p222
      %p224 = scmp.ne.s32.totalorder %s216, %s218
      %p225 = scmp.eq.s32.totalorder %s35, 1
      %p226 = por %p224, %p225
      %p227 = scmp.ne.s32.totalorder %s218, %s219
      %p228 = scmp.eq.s32.totalorder %s35, 0
      %p229 = por %p227, %p228
      %p230 = scmp.ne.s32.totalorder %s218, %s219
      %p231 = scmp.eq.s32.totalorder %s36, 1
      %p232 = por %p230, %p231
      %p234 = scmp.ne.s32.totalorder %s219, %s233
      %p235 = scmp.eq.s32.totalorder %s36, 0
      %p236 = por %p234, %p235
      %s238 = sadd.s32 %s237, 1
      %p241 = scmp.eq.s32.totalorder %s30, 1
      %p242 = scmp.ne.s32.totalorder %s237, %s239
      %p243 = scmp.eq.s32.totalorder %s30, 0
      %p244 = por %p242, %p243
      %p245 = scmp.ne.s32.totalorder %s237, %s239
      %p246 = scmp.eq.s32.totalorder %s35, 1
      %p247 = por %p245, %p246
      %p248 = scmp.ne.s32.totalorder %s239, %s240
      %p249 = scmp.eq.s32.totalorder %s35, 0
      %p250 = por %p248, %p249
      %p251 = scmp.ne.s32.totalorder %s239, %s240
      %p252 = scmp.eq.s32.totalorder %s36, 1
      %p253 = por %p251, %p252
      %p255 = scmp.ne.s32.totalorder %s240, %s254
      %p256 = scmp.eq.s32.totalorder %s36, 0
      %p257 = por %p255, %p256
      %s259 = sadd.s32 %s258, 1
      %p262 = scmp.eq.s32.totalorder %s30, 1
      %p263 = scmp.ne.s32.totalorder %s258, %s260
      %p264 = scmp.eq.s32.totalorder %s30, 0
      %p265 = por %p263, %p264
      %p266 = scmp.ne.s32.totalorder %s258, %s260
      %p267 = scmp.eq.s32.totalorder %s35, 1
      %p268 = por %p266, %p267
      %p269 = scmp.ne.s32.totalorder %s260, %s261
      %p270 = scmp.eq.s32.totalorder %s35, 0
      %p271 = por %p269, %p270
      %p272 = scmp.ne.s32.totalorder %s260, %s261
      %p273 = scmp.eq.s32.totalorder %s36, 1
      %p274 = por %p272, %p273
      %p276 = scmp.ne.s32.totalorder %s261, %s275
      %p277 = scmp.eq.s32.totalorder %s36, 0
      %p278 = por %p276, %p277
      %s279 = ssub.s32 %s30, %s37
      %p280 = scmp.eq.s32.totalorder %s279, 0
      %s282 = sadd.s32 %s281, 1
      %s283 = scalar_select %p280, %s281, %s282
      %p286 = pneg %p280
      %p287 = scmp.eq.s32.totalorder %s30, 1
      %p288 = por %p286, %p287
      %p289 = scmp.ne.s32.totalorder %s281, %s284
      %p290 = scmp.eq.s32.totalorder %s30, 0
      %p291 = por %p289, %p290
      %p292 = scmp.ne.s32.totalorder %s281, %s284
      %p293 = scmp.eq.s32.totalorder %s35, 1
      %p294 = por %p292, %p293
      %p295 = scmp.ne.s32.totalorder %s284, %s285
      %p296 = scmp.eq.s32.totalorder %s35, 0
      %p297 = por %p295, %p296
      %p298 = scmp.ne.s32.totalorder %s284, %s285
      %p299 = scmp.eq.s32.totalorder %s36, 1
      %p300 = por %p298, %p299
      %p302 = scmp.ne.s32.totalorder %s285, %s301
      %p303 = scmp.eq.s32.totalorder %s36, 0
      %p304 = por %p302, %p303
      %p305 = scmp.le.s32.totalorder 1, %s30
      %p306 = scmp.lt.s32.totalorder %s30, 3
      %p307 = pnand %p305, %p306
      %p308 = pneg %p307
      // Predicated region
      $region9: #{cdecoder_forward.1} parent=5 // pred_check
        _
      $region10: #{cdecoder_forward.1} parent=5 // pred_check_branch
        %310 = sbr.rel (%p307) target = $region12
      $region11: #{cdecoder_forward.1} parent=5 // pred_region
        %s311 = ssub.s32 %s30, 1
        // Predicated region
        $region13: #{cdecoder_forward.1} parent=11 // pred_check
          %p312 = pneg %p103
        $region14: #{cdecoder_forward.1} parent=11 // pred_check_branch
          %314 = sbr.rel (%p312) target = $region16
        $region15: #{cdecoder_forward.1} parent=11 // pred_region
          %316 = vsyncadd [#allocation6], 0
          %s317 = sshll.u32 %s2, 4
          %s318 = int_to_ptr.hbm [resolvable:$true] %s317
          %s319 = sshll.u32 [#allocation7], 4
          %s320 = int_to_ptr.vmem [resolvable:$true] %s319
          %325 = dma.hbm_to_vmem [thread:$0]  %s318, 4096, %s320, [#allocation6], 128, 128, 8
        $region16: #{cdecoder_forward.1} parent=11 // pred_fallthru
          _
        // Predicated region
        $region17: #{cdecoder_forward.1} parent=11 // pred_check
          %p326 = pneg %p124
        $region18: #{cdecoder_forward.1} parent=11 // pred_check_branch
          %328 = sbr.rel (%p326) target = $region20
        $region19: #{cdecoder_forward.1} parent=11 // pred_region
          %330 = vsyncadd [#allocation9], 0
          %s331 = sshll.u32 %s3, 4
          %s332 = int_to_ptr.hbm [resolvable:$true] %s331
          %s333 = sshll.u32 [#allocation8], 4
          %s334 = int_to_ptr.vmem [resolvable:$true] %s333
          %339 = dma.hbm_to_vmem [thread:$0]  %s332, 4096, %s334, [#allocation9], 128, 128, 8
        $region20: #{cdecoder_forward.1} parent=11 // pred_fallthru
          _
        // Predicated region
        $region21: #{cdecoder_forward.1} parent=11 // pred_check
          %p340 = pneg %p145
        $region22: #{cdecoder_forward.1} parent=11 // pred_check_branch
          %342 = sbr.rel (%p340) target = $region24
        $region23: #{cdecoder_forward.1} parent=11 // pred_region
          %344 = vsyncadd [#allocation9], 0
          %s345 = sshll.u32 %s4, 4
          %s346 = int_to_ptr.hbm [resolvable:$true] %s345
          %s347 = sshll.u32 [#allocation10], 4
          %s348 = int_to_ptr.vmem [resolvable:$true] %s347
          %353 = dma.hbm_to_vmem [thread:$0]  %s346, 4096, %s348, [#allocation9], 128, 128, 8
        $region24: #{cdecoder_forward.1} parent=11 // pred_fallthru
          _
        // Predicated region
        $region25: #{cdecoder_forward.1} parent=11 // pred_check
          %p354 = pneg %p166
        $region26: #{cdecoder_forward.1} parent=11 // pred_check_branch
          %356 = sbr.rel (%p354) target = $region28
        $region27: #{cdecoder_forward.1} parent=11 // pred_region
          %358 = vsyncadd [#allocation12], 0
          %s359 = sshll.u32 %s5, 4
          %s360 = int_to_ptr.hbm [resolvable:$true] %s359
          %s361 = sshll.u32 [#allocation11], 4
          %s362 = int_to_ptr.vmem [resolvable:$true] %s361
          %367 = dma.hbm_to_vmem [thread:$0]  %s360, 4096, %s362, [#allocation12], 128, 128, 8
        $region28: #{cdecoder_forward.1} parent=11 // pred_fallthru
          _
        // Predicated region
        $region29: #{cdecoder_forward.1} parent=11 // pred_check
          %p368 = pneg %p187
        $region30: #{cdecoder_forward.1} parent=11 // pred_check_branch
          %370 = sbr.rel (%p368) target = $region32
        $region31: #{cdecoder_forward.1} parent=11 // pred_region
          %372 = vsyncadd [#allocation12], 0
          %s373 = sshll.u32 %s6, 4
          %s374 = int_to_ptr.hbm [resolvable:$true] %s373
          %s375 = sshll.u32 [#allocation13], 4
          %s376 = int_to_ptr.vmem [resolvable:$true] %s375
          %381 = dma.hbm_to_vmem [thread:$0]  %s374, 36864, %s376, [#allocation12], 1152, 1152, 72
        $region32: #{cdecoder_forward.1} parent=11 // pred_fallthru
          _
        // Predicated region
        $region33: #{cdecoder_forward.1} parent=11 // pred_check
          %p382 = pneg %p208
        $region34: #{cdecoder_forward.1} parent=11 // pred_check_branch
          %384 = sbr.rel (%p382) target = $region36
        $region35: #{cdecoder_forward.1} parent=11 // pred_region
          _
        $region36: #{cdecoder_forward.1} parent=11 // pred_fallthru
          _
        // Predicated region
        $region37: #{cdecoder_forward.1} parent=11 // pred_check
          %p385 = pneg %p229
        $region38: #{cdecoder_forward.1} parent=11 // pred_check_branch
          %387 = sbr.rel (%p385) target = $region40
        $region39: #{cdecoder_forward.1} parent=11 // pred_region
          %389 = vsyncadd [#allocation15], 0
          %s390 = sshll.u32 %s8, 4
          %s391 = int_to_ptr.hbm [resolvable:$true] %s390
          %s392 = sshll.u32 [#allocation14], 4
          %s393 = int_to_ptr.vmem [resolvable:$true] %s392
          %398 = dma.hbm_to_vmem [thread:$0]  %s391, 1024, %s393, [#allocation15], 256, 256, 16
        $region40: #{cdecoder_forward.1} parent=11 // pred_fallthru
          _
        // Predicated region
        $region41: #{cdecoder_forward.1} parent=11 // pred_check
          %p399 = pneg %p250
        $region42: #{cdecoder_forward.1} parent=11 // pred_check_branch
          %401 = sbr.rel (%p399) target = $region44
        $region43: #{cdecoder_forward.1} parent=11 // pred_region
          %403 = vsyncadd [#allocation15], 0
          %s405 = sshll.u32 %s9, 4
          %s406 = int_to_ptr.hbm [resolvable:$true] %s405
          %s407 = sshll.u32 [#allocation16], 4
          %s408 = int_to_ptr.vmem [resolvable:$true] %s407
          %410 = dma.hbm_to_vmem [thread:$0]  %s406, 128, %s408, [#allocation15]
        $region44: #{cdecoder_forward.1} parent=11 // pred_fallthru
          _
        // Predicated region
        $region45: #{cdecoder_forward.1} parent=11 // pred_check
          %p411 = pneg %p271
        $region46: #{cdecoder_forward.1} parent=11 // pred_check_branch
          %413 = sbr.rel (%p411) target = $region48
        $region47: #{cdecoder_forward.1} parent=11 // pred_region
          %415 = vsyncadd [#allocation18], 0
          %s417 = sshll.u32 %s10, 4
          %s418 = int_to_ptr.hbm [resolvable:$true] %s417
          %s419 = sshll.u32 [#allocation17], 4
          %s420 = int_to_ptr.vmem [resolvable:$true] %s419
          %422 = dma.hbm_to_vmem [thread:$0]  %s418, 128, %s420, [#allocation18]
        $region48: #{cdecoder_forward.1} parent=11 // pred_fallthru
          _
      $region12: #{cdecoder_forward.1} parent=5 // pred_fallthru
        _
      %p423 = scmp.lt.s32.totalorder %s30, 2
      // Predicated region
      $region49: #{cdecoder_forward.1} parent=5 // pred_check
        %p424 = pneg %p423
      $region50: #{cdecoder_forward.1} parent=5 // pred_check_branch
        %426 = sbr.rel (%p424) target = $region52
      $region51: #{cdecoder_forward.1} parent=5 // pred_region
        // Predicated region
        $region53: #{cdecoder_forward.1} parent=51 // pred_check
          %p427 = pneg %p50
        $region54: #{cdecoder_forward.1} parent=51 // pred_check_branch
          %429 = sbr.rel (%p427) target = $region56
        $region55: #{cdecoder_forward.1} parent=51 // pred_region
          %s430 = sand.u32 %s40, 1
          %s431 = scalar_lea.sflag [#allocation3], %s430
          %s432 = sand.u32 %s40, 1
          %s433 = smul.addr %s432, 16
          %s434 = scalar_lea.vmem [#allocation2], %s433
          %436 = vsyncadd %s431, 0
          %s437 = smul.addr %s30, 2
          %s438 = smul.addr %s437, 8
          %s439 = scalar_lea.hbm %s0, %s438
          %s441 = sshll.u32 %s439, 4
          %s442 = int_to_ptr.hbm [resolvable:$true] %s441
          %s443 = sshll.u32 %s434, 4
          %s444 = int_to_ptr.vmem [resolvable:$true] %s443
          %446 = dma.hbm_to_vmem [thread:$0]  %s442, 256, %s444, %s431
        $region56: #{cdecoder_forward.1} parent=51 // pred_fallthru
          _
        // Predicated region
        $region57: #{cdecoder_forward.1} parent=51 // pred_check
          %p447 = pneg %p76
        $region58: #{cdecoder_forward.1} parent=51 // pred_check_branch
          %449 = sbr.rel (%p447) target = $region60
        $region59: #{cdecoder_forward.1} parent=51 // pred_region
          %s450 = sand.u32 %s30, 1
          %s451 = scalar_lea.sflag [#allocation6], %s450
          %s452 = sand.u32 %s66, 1
          %s453 = smul.addr %s452, 16
          %s454 = scalar_lea.vmem [#allocation5], %s453
          %456 = vsyncadd %s451, 0
          %s457 = smul.addr %s30, 2
          %s458 = smul.addr %s457, 8
          %s459 = scalar_lea.hbm %s1, %s458
          %s461 = sshll.u32 %s459, 4
          %s462 = int_to_ptr.hbm [resolvable:$true] %s461
          %s463 = sshll.u32 %s454, 4
          %s464 = int_to_ptr.vmem [resolvable:$true] %s463
          %466 = dma.hbm_to_vmem [thread:$0]  %s462, 256, %s464, %s451
        $region60: #{cdecoder_forward.1} parent=51 // pred_fallthru
          _
      $region52: #{cdecoder_forward.1} parent=5 // pred_fallthru
        _
      %p467 = scmp.le.s32.totalorder 1, %s30
      %p468 = scmp.lt.s32.totalorder %s30, 3
      %p469 = pnand %p467, %p468
      %p470 = pneg %p469
      // Predicated region
      $region61: #{cdecoder_forward.1} parent=5 // pred_check
        _
      $region62: #{cdecoder_forward.1} parent=5 // pred_check_branch
        %472 = sbr.rel (%p469) target = $region64
      $region63: #{cdecoder_forward.1} parent=5 // pred_region
        %s473 = ssub.s32 %s30, 1
        %s474 = sand.u32 %s43, 1
        %s475 = scalar_lea.sflag [#allocation3], %s474
        %s476 = sand.u32 %s43, 1
        %s477 = smul.addr %s476, 16
        %s478 = scalar_lea.vmem [#allocation2], %s477
        // Predicated region
        $region65: #{cdecoder_forward.1} parent=63 // pred_check
          %p479 = pneg %p56
        $region66: #{cdecoder_forward.1} parent=63 // pred_check_branch
          %481 = sbr.rel (%p479) target = $region68
        $region67: #{cdecoder_forward.1} parent=63 // pred_region
          %483 = dma.done %s475, 256
        $region68: #{cdecoder_forward.1} parent=63 // pred_fallthru
          _
        %s484 = sand.u32 %s35, 1
        %s485 = scalar_lea.sflag [#allocation6], %s484
        %s486 = sand.u32 %s69, 1
        %s487 = smul.addr %s486, 16
        %s488 = scalar_lea.vmem [#allocation5], %s487
        // Predicated region
        $region69: #{cdecoder_forward.1} parent=63 // pred_check
          %p489 = pneg %p82
        $region70: #{cdecoder_forward.1} parent=63 // pred_check_branch
          %491 = sbr.rel (%p489) target = $region72
        $region71: #{cdecoder_forward.1} parent=63 // pred_region
          %493 = dma.done %s485, 256
        $region72: #{cdecoder_forward.1} parent=63 // pred_fallthru
          _
        // Predicated region
        $region73: #{cdecoder_forward.1} parent=63 // pred_check
          %p494 = pneg %p103
        $region74: #{cdecoder_forward.1} parent=63 // pred_check_branch
          %496 = sbr.rel (%p494) target = $region76
        $region75: #{cdecoder_forward.1} parent=63 // pred_region
          %498 = dma.done [#allocation6], 4096
        $region76: #{cdecoder_forward.1} parent=63 // pred_fallthru
          _
        // Predicated region
        $region77: #{cdecoder_forward.1} parent=63 // pred_check
          %p499 = pneg %p124
        $region78: #{cdecoder_forward.1} parent=63 // pred_check_branch
          %501 = sbr.rel (%p499) target = $region80
        $region79: #{cdecoder_forward.1} parent=63 // pred_region
          %503 = dma.done [#allocation9], 4096
        $region80: #{cdecoder_forward.1} parent=63 // pred_fallthru
          _
        // Predicated region
        $region81: #{cdecoder_forward.1} parent=63 // pred_check
          %p504 = pneg %p145
        $region82: #{cdecoder_forward.1} parent=63 // pred_check_branch
          %506 = sbr.rel (%p504) target = $region84
        $region83: #{cdecoder_forward.1} parent=63 // pred_region
          %508 = dma.done [#allocation9], 4096
        $region84: #{cdecoder_forward.1} parent=63 // pred_fallthru
          _
        // Predicated region
        $region85: #{cdecoder_forward.1} parent=63 // pred_check
          %p509 = pneg %p166
        $region86: #{cdecoder_forward.1} parent=63 // pred_check_branch
          %511 = sbr.rel (%p509) target = $region88
        $region87: #{cdecoder_forward.1} parent=63 // pred_region
          %513 = dma.done [#allocation12], 4096
        $region88: #{cdecoder_forward.1} parent=63 // pred_fallthru
          _
        // Predicated region
        $region89: #{cdecoder_forward.1} parent=63 // pred_check
          %p514 = pneg %p187
        $region90: #{cdecoder_forward.1} parent=63 // pred_check_branch
          %516 = sbr.rel (%p514) target = $region92
        $region91: #{cdecoder_forward.1} parent=63 // pred_region
          %518 = dma.done [#allocation12], 36864
        $region92: #{cdecoder_forward.1} parent=63 // pred_fallthru
          _
        // Predicated region
        $region93: #{cdecoder_forward.1} parent=63 // pred_check
          %p519 = pneg %p229
        $region94: #{cdecoder_forward.1} parent=63 // pred_check_branch
          %521 = sbr.rel (%p519) target = $region96
        $region95: #{cdecoder_forward.1} parent=63 // pred_region
          %523 = dma.done [#allocation15], 1024
        $region96: #{cdecoder_forward.1} parent=63 // pred_fallthru
          _
        // Predicated region
        $region97: #{cdecoder_forward.1} parent=63 // pred_check
          %p524 = pneg %p250
        $region98: #{cdecoder_forward.1} parent=63 // pred_check_branch
          %526 = sbr.rel (%p524) target = $region100
        $region99: #{cdecoder_forward.1} parent=63 // pred_region
          %528 = dma.done [#allocation15], 128
        $region100: #{cdecoder_forward.1} parent=63 // pred_fallthru
          _
        // Predicated region
        $region101: #{cdecoder_forward.1} parent=63 // pred_check
          %p529 = pneg %p271
        $region102: #{cdecoder_forward.1} parent=63 // pred_check_branch
          %531 = sbr.rel (%p529) target = $region104
        $region103: #{cdecoder_forward.1} parent=63 // pred_region
          %533 = dma.done [#allocation18], 128
        $region104: #{cdecoder_forward.1} parent=63 // pred_fallthru
          _
        %s534 = sand.u32 %s43, 1
        %s535 = scalar_lea.sflag [#allocation3], %s534
        %s536 = sand.u32 %s43, 1
        %s537 = smul.addr %s536, 16
        %s538 = scalar_lea.vmem [#allocation2], %s537
        %p539 = pneg %p56
        %p540 = pneg %p53
        %s541 = sand.u32 %s35, 1
        %s542 = scalar_lea.sflag [#allocation6], %s541
        %s543 = sand.u32 %s69, 1
        %s544 = smul.addr %s543, 16
        %s545 = scalar_lea.vmem [#allocation5], %s544
        %p546 = pneg %p82
        %p547 = pneg %p79
        %p548 = pneg %p103
        %p549 = pneg %p100
        %p550 = pneg %p124
        %p551 = pneg %p121
        %p552 = pneg %p145
        %p553 = pneg %p142
        %p554 = pneg %p166
        %p555 = pneg %p163
        %p556 = pneg %p187
        %p557 = pneg %p184
        %p558 = pneg %p208
        %p559 = pneg %p205
        %p560 = pneg %p229
        %p561 = pneg %p226
        %p562 = pneg %p250
        %p563 = pneg %p247
        %p564 = pneg %p271
        %p565 = pneg %p268
        %p566 = pneg %p297
        %p567 = pneg %p294
        %s568 = sand.u32 %s284, 1
        %s569 = scalar_lea.sflag [#allocation4], %s568
        %s570 = sand.u32 %s284, 1
        %s571 = smul.addr %s570, 144
        %s572 = scalar_lea.vmem [#allocation19], %s571
        %v573 = vld [vmem:[%s478] sm:$0xff]
        %v574 = vld [vmem:[%s478 + $0x8] sm:$0xff]
        %v575 = vpack.c.bf16 %v573, %v573
        %v576 = vpack.c.bf16 %v574, %v574
        %v577 = vld [vmem:[%s488] sm:$0xff]
        %v578 = vld [vmem:[%s488 + $0x8] sm:$0xff]
        %v579 = vpack.c.bf16 %v577, %v577
        %v580 = vpack.c.bf16 %v578, %v578
        %v581 = vld [vmem:[#allocation16] ss:$4 sm:$0x3]
        %s582 = scalar_lea.vmem [#allocation16], 1
        %v583 = vld [vmem:[%s582] ss:$4 sm:$0x3]
        %s584 = scalar_lea.vmem [#allocation16], 2
        %v585 = vld [vmem:[%s584] ss:$4 sm:$0x3]
        %v586 = vld [vmem:[#allocation7] sm:$0xff]
        %v587 = vld [vmem:[#allocation7 + $0x8] sm:$0xff]
        %v588 = vld [vmem:[#allocation7 + $0x10] sm:$0xff]
        %v589 = vld [vmem:[#allocation7 + $0x18] sm:$0xff]
        %v590 = vld [vmem:[#allocation7 + $0x20] sm:$0xff]
        %v591 = vld [vmem:[#allocation7 + $0x28] sm:$0xff]
        %v592 = vld [vmem:[#allocation7 + $0x30] sm:$0xff]
        %v593 = vld [vmem:[#allocation7 + $0x38] sm:$0xff]
        %v594 = vld [vmem:[#allocation7 + $0x40] sm:$0xff]
        %v595 = vld [vmem:[#allocation7 + $0x48] sm:$0xff]
        %v596 = vld [vmem:[#allocation7 + $0x50] sm:$0xff]
        %v597 = vld [vmem:[#allocation7 + $0x58] sm:$0xff]
        %v598 = vld [vmem:[#allocation7 + $0x60] sm:$0xff]
        %v599 = vld [vmem:[#allocation7 + $0x68] sm:$0xff]
        %v600 = vld [vmem:[#allocation7 + $0x70] sm:$0xff]
        %v601 = vld [vmem:[#allocation7 + $0x78] sm:$0xff]
        %v602 = vld [vmem:[#allocation7 + $0x80] sm:$0xff]
        %v603 = vld [vmem:[#allocation7 + $0x88] sm:$0xff]
        %v604 = vld [vmem:[#allocation7 + $0x90] sm:$0xff]
        %v605 = vld [vmem:[#allocation7 + $0x98] sm:$0xff]
        %v606 = vld [vmem:[#allocation7 + $0xa0] sm:$0xff]
        %v607 = vld [vmem:[#allocation7 + $0xa8] sm:$0xff]
        %v608 = vld [vmem:[#allocation7 + $0xb0] sm:$0xff]
        %v609 = vld [vmem:[#allocation7 + $0xb8] sm:$0xff]
        %v610 = vld [vmem:[#allocation7 + $0xc0] sm:$0xff]
        %v611 = vld [vmem:[#allocation7 + $0xc8] sm:$0xff]
        %v612 = vld [vmem:[#allocation7 + $0xd0] sm:$0xff]
        %v613 = vld [vmem:[#allocation7 + $0xd8] sm:$0xff]
        %v614 = vld [vmem:[#allocation7 + $0xe0] sm:$0xff]
        %v615 = vld [vmem:[#allocation7 + $0xe8] sm:$0xff]
        %v616 = vld [vmem:[#allocation7 + $0xf0] sm:$0xff]
        %v617 = vld [vmem:[#allocation7 + $0xf8] sm:$0xff]
        %v618 = vld [vmem:[#allocation8] sm:$0xff]
        %v619 = vld [vmem:[#allocation8 + $0x8] sm:$0xff]
        %v620 = vld [vmem:[#allocation8 + $0x10] sm:$0xff]
        %v621 = vld [vmem:[#allocation8 + $0x18] sm:$0xff]
        %v622 = vld [vmem:[#allocation8 + $0x20] sm:$0xff]
        %v623 = vld [vmem:[#allocation8 + $0x28] sm:$0xff]
        %v624 = vld [vmem:[#allocation8 + $0x30] sm:$0xff]
        %v625 = vld [vmem:[#allocation8 + $0x38] sm:$0xff]
        %v626 = vld [vmem:[#allocation8 + $0x40] sm:$0xff]
        %v627 = vld [vmem:[#allocation8 + $0x48] sm:$0xff]
        %v628 = vld [vmem:[#allocation8 + $0x50] sm:$0xff]
        %v629 = vld [vmem:[#allocation8 + $0x58] sm:$0xff]
        %v630 = vld [vmem:[#allocation8 + $0x60] sm:$0xff]
        %v631 = vld [vmem:[#allocation8 + $0x68] sm:$0xff]
        %v632 = vld [vmem:[#allocation8 + $0x70] sm:$0xff]
        %v633 = vld [vmem:[#allocation8 + $0x78] sm:$0xff]
        %v634 = vld [vmem:[#allocation8 + $0x80] sm:$0xff]
        %v635 = vld [vmem:[#allocation8 + $0x88] sm:$0xff]
        %v636 = vld [vmem:[#allocation8 + $0x90] sm:$0xff]
        %v637 = vld [vmem:[#allocation8 + $0x98] sm:$0xff]
        %v638 = vld [vmem:[#allocation8 + $0xa0] sm:$0xff]
        %v639 = vld [vmem:[#allocation8 + $0xa8] sm:$0xff]
        %v640 = vld [vmem:[#allocation8 + $0xb0] sm:$0xff]
        %v641 = vld [vmem:[#allocation8 + $0xb8] sm:$0xff]
        %v642 = vld [vmem:[#allocation8 + $0xc0] sm:$0xff]
        %v643 = vld [vmem:[#allocation8 + $0xc8] sm:$0xff]
        %v644 = vld [vmem:[#allocation8 + $0xd0] sm:$0xff]
        %v645 = vld [vmem:[#allocation8 + $0xd8] sm:$0xff]
        %v646 = vld [vmem:[#allocation8 + $0xe0] sm:$0xff]
        %v647 = vld [vmem:[#allocation8 + $0xe8] sm:$0xff]
        %v648 = vld [vmem:[#allocation8 + $0xf0] sm:$0xff]
        %v649 = vld [vmem:[#allocation8 + $0xf8] sm:$0xff]
        %v682 = vunpack.c.l.b16 %v618
        %v683 = vunpack.c.h.b16 %v618
        %v684 = vunpack.c.l.b16 %v619
        %v685 = vunpack.c.h.b16 %v619
        %v686 = vunpack.c.l.b16 %v620
        %v687 = vunpack.c.h.b16 %v620
        %v688 = vunpack.c.l.b16 %v621
        %v689 = vunpack.c.h.b16 %v621
        %v690 = vunpack.c.l.b16 %v622
        %v691 = vunpack.c.h.b16 %v622
        %v692 = vunpack.c.l.b16 %v623
        %v693 = vunpack.c.h.b16 %v623
        %v694 = vunpack.c.l.b16 %v624
        %v695 = vunpack.c.h.b16 %v624
        %v696 = vunpack.c.l.b16 %v625
        %v697 = vunpack.c.h.b16 %v625
        %v698 = vunpack.c.l.b16 %v626
        %v699 = vunpack.c.h.b16 %v626
        %v700 = vunpack.c.l.b16 %v627
        %v701 = vunpack.c.h.b16 %v627
        %v702 = vunpack.c.l.b16 %v628
        %v703 = vunpack.c.h.b16 %v628
        %v704 = vunpack.c.l.b16 %v629
        %v705 = vunpack.c.h.b16 %v629
        %v706 = vunpack.c.l.b16 %v630
        %v707 = vunpack.c.h.b16 %v630
        %v708 = vunpack.c.l.b16 %v631
        %v709 = vunpack.c.h.b16 %v631
        %v710 = vunpack.c.l.b16 %v632
        %v711 = vunpack.c.h.b16 %v632
        %v712 = vunpack.c.l.b16 %v633
        %v713 = vunpack.c.h.b16 %v633
        %v714 = vunpack.c.l.b16 %v634
        %v715 = vunpack.c.h.b16 %v634
        %v716 = vunpack.c.l.b16 %v635
        %v717 = vunpack.c.h.b16 %v635
        %v718 = vunpack.c.l.b16 %v636
        %v719 = vunpack.c.h.b16 %v636
        %v720 = vunpack.c.l.b16 %v637
        %v721 = vunpack.c.h.b16 %v637
        %v722 = vunpack.c.l.b16 %v638
        %v723 = vunpack.c.h.b16 %v638
        %v724 = vunpack.c.l.b16 %v639
        %v725 = vunpack.c.h.b16 %v639
        %v726 = vunpack.c.l.b16 %v640
        %v727 = vunpack.c.h.b16 %v640
        %v728 = vunpack.c.l.b16 %v641
        %v729 = vunpack.c.h.b16 %v641
        %v730 = vunpack.c.l.b16 %v642
        %v731 = vunpack.c.h.b16 %v642
        %v732 = vunpack.c.l.b16 %v643
        %v733 = vunpack.c.h.b16 %v643
        %v734 = vunpack.c.l.b16 %v644
        %v735 = vunpack.c.h.b16 %v644
        %v736 = vunpack.c.l.b16 %v645
        %v737 = vunpack.c.h.b16 %v645
        %v738 = vunpack.c.l.b16 %v646
        %v739 = vunpack.c.h.b16 %v646
        %v740 = vunpack.c.l.b16 %v647
        %v741 = vunpack.c.h.b16 %v647
        %v742 = vunpack.c.l.b16 %v648
        %v743 = vunpack.c.h.b16 %v648
        %v744 = vunpack.c.l.b16 %v649
        %v745 = vunpack.c.h.b16 %v649
        %v746 = vpack.c.b16 %v684, %v682
        %v747 = vpack.c.b16 %v685, %v683
        %v748 = vpack.c.b16 %v688, %v686
        %v749 = vpack.c.b16 %v689, %v687
        %v750 = vpack.c.b16 %v692, %v690
        %v751 = vpack.c.b16 %v693, %v691
        %v752 = vpack.c.b16 %v696, %v694
        %v753 = vpack.c.b16 %v697, %v695
        %v754 = vpack.c.b16 %v700, %v698
        %v755 = vpack.c.b16 %v701, %v699
        %v756 = vpack.c.b16 %v704, %v702
        %v757 = vpack.c.b16 %v705, %v703
        %v758 = vpack.c.b16 %v708, %v706
        %v759 = vpack.c.b16 %v709, %v707
        %v760 = vpack.c.b16 %v712, %v710
        %v761 = vpack.c.b16 %v713, %v711
        %v762 = vpack.c.b16 %v716, %v714
        %v763 = vpack.c.b16 %v717, %v715
        %v764 = vpack.c.b16 %v720, %v718
        %v765 = vpack.c.b16 %v721, %v719
        %v766 = vpack.c.b16 %v724, %v722
        %v767 = vpack.c.b16 %v725, %v723
        %v768 = vpack.c.b16 %v728, %v726
        %v769 = vpack.c.b16 %v729, %v727
        %v770 = vpack.c.b16 %v732, %v730
        %v771 = vpack.c.b16 %v733, %v731
        %v772 = vpack.c.b16 %v736, %v734
        %v773 = vpack.c.b16 %v737, %v735
        %v774 = vpack.c.b16 %v740, %v738
        %v775 = vpack.c.b16 %v741, %v739
        %v776 = vpack.c.b16 %v744, %v742
        %v777 = vpack.c.b16 %v745, %v743
        %810 = vmatpush.bf16.msra.mxu0 %v760
        %811 = vmatpush.bf16.msra.mxu0 %v758
        %812 = vmatpush.bf16.msra.mxu0 %v756
        %813 = vmatpush.bf16.msra.mxu0 %v754
        %814 = vmatpush.bf16.msra.mxu0 %v752
        %815 = vmatpush.bf16.msra.mxu0 %v750
        %816 = vmatpush.bf16.msra.mxu0 %v748
        %817 = vmatpush.bf16.msra.mxu0 %v746
        %818 = vmatmul.bf16.gmra.mxu0 %v579
        %v819 = vpop.f32.mrf.mxu0
        %v820 = vadd.f32 0.0, %v819
        %v821 = vpop.f32.mrf.mxu0
        %822 = vdwg.mxu0
        %823 = vmatpush.bf16.msra.mxu0 %v776
        %824 = vmatpush.bf16.msra.mxu0 %v774
        %825 = vmatpush.bf16.msra.mxu0 %v772
        %826 = vmatpush.bf16.msra.mxu0 %v770
        %827 = vmatpush.bf16.msra.mxu0 %v768
        %828 = vmatpush.bf16.msra.mxu0 %v766
        %829 = vmatpush.bf16.msra.mxu0 %v764
        %830 = vmatpush.bf16.msra.mxu0 %v762
        %831 = vmatmul.bf16.gmra.mxu0 %v580
        %v832 = vpop.f32.mrf.mxu0
        %v833 = vadd.f32 %v820, %v832
        %v834 = vpop.f32.mrf.mxu0
        %835 = vdwg.mxu0
        %836 = vmatpush.bf16.msra.mxu0 %v761
        %837 = vmatpush.bf16.msra.mxu0 %v759
        %838 = vmatpush.bf16.msra.mxu0 %v757
        %839 = vmatpush.bf16.msra.mxu0 %v755
        %840 = vmatpush.bf16.msra.mxu0 %v753
        %841 = vmatpush.bf16.msra.mxu0 %v751
        %842 = vmatpush.bf16.msra.mxu0 %v749
        %843 = vmatpush.bf16.msra.mxu0 %v747
        %844 = vmatmul.bf16.gmra.mxu0 %v579
        %v845 = vpop.f32.mrf.mxu0
        %v846 = vadd.f32 0.0, %v845
        %v847 = vpop.f32.mrf.mxu0
        %848 = vdwg.mxu0
        %849 = vmatpush.bf16.msra.mxu0 %v777
        %850 = vmatpush.bf16.msra.mxu0 %v775
        %851 = vmatpush.bf16.msra.mxu0 %v773
        %852 = vmatpush.bf16.msra.mxu0 %v771
        %853 = vmatpush.bf16.msra.mxu0 %v769
        %854 = vmatpush.bf16.msra.mxu0 %v767
        %855 = vmatpush.bf16.msra.mxu0 %v765
        %856 = vmatpush.bf16.msra.mxu0 %v763
        %857 = vmatmul.bf16.gmra.mxu0 %v580
        %v858 = vpop.f32.mrf.mxu0
        %v859 = vadd.f32 %v846, %v858
        %v860 = vpop.f32.mrf.mxu0
        %861 = vdwg.mxu0
        %v894 = vunpack.c.l.b16 %v586
        %v895 = vunpack.c.h.b16 %v586
        %v896 = vunpack.c.l.b16 %v587
        %v897 = vunpack.c.h.b16 %v587
        %v898 = vunpack.c.l.b16 %v588
        %v899 = vunpack.c.h.b16 %v588
        %v900 = vunpack.c.l.b16 %v589
        %v901 = vunpack.c.h.b16 %v589
        %v902 = vunpack.c.l.b16 %v590
        %v903 = vunpack.c.h.b16 %v590
        %v904 = vunpack.c.l.b16 %v591
        %v905 = vunpack.c.h.b16 %v591
        %v906 = vunpack.c.l.b16 %v592
        %v907 = vunpack.c.h.b16 %v592
        %v908 = vunpack.c.l.b16 %v593
        %v909 = vunpack.c.h.b16 %v593
        %v910 = vunpack.c.l.b16 %v594
        %v911 = vunpack.c.h.b16 %v594
        %v912 = vunpack.c.l.b16 %v595
        %v913 = vunpack.c.h.b16 %v595
        %v914 = vunpack.c.l.b16 %v596
        %v915 = vunpack.c.h.b16 %v596
        %v916 = vunpack.c.l.b16 %v597
        %v917 = vunpack.c.h.b16 %v597
        %v918 = vunpack.c.l.b16 %v598
        %v919 = vunpack.c.h.b16 %v598
        %v920 = vunpack.c.l.b16 %v599
        %v921 = vunpack.c.h.b16 %v599
        %v922 = vunpack.c.l.b16 %v600
        %v923 = vunpack.c.h.b16 %v600
        %v924 = vunpack.c.l.b16 %v601
        %v925 = vunpack.c.h.b16 %v601
        %v926 = vunpack.c.l.b16 %v602
        %v927 = vunpack.c.h.b16 %v602
        %v928 = vunpack.c.l.b16 %v603
        %v929 = vunpack.c.h.b16 %v603
        %v930 = vunpack.c.l.b16 %v604
        %v931 = vunpack.c.h.b16 %v604
        %v932 = vunpack.c.l.b16 %v605
        %v933 = vunpack.c.h.b16 %v605
        %v934 = vunpack.c.l.b16 %v606
        %v935 = vunpack.c.h.b16 %v606
        %v936 = vunpack.c.l.b16 %v607
        %v937 = vunpack.c.h.b16 %v607
        %v938 = vunpack.c.l.b16 %v608
        %v939 = vunpack.c.h.b16 %v608
        %v940 = vunpack.c.l.b16 %v609
        %v941 = vunpack.c.h.b16 %v609
        %v942 = vunpack.c.l.b16 %v610
        %v943 = vunpack.c.h.b16 %v610
        %v944 = vunpack.c.l.b16 %v611
        %v945 = vunpack.c.h.b16 %v611
        %v946 = vunpack.c.l.b16 %v612
        %v947 = vunpack.c.h.b16 %v612
        %v948 = vunpack.c.l.b16 %v613
        %v949 = vunpack.c.h.b16 %v613
        %v950 = vunpack.c.l.b16 %v614
        %v951 = vunpack.c.h.b16 %v614
        %v952 = vunpack.c.l.b16 %v615
        %v953 = vunpack.c.h.b16 %v615
        %v954 = vunpack.c.l.b16 %v616
        %v955 = vunpack.c.h.b16 %v616
        %v956 = vunpack.c.l.b16 %v617
        %v957 = vunpack.c.h.b16 %v617
        %v958 = vpack.c.b16 %v896, %v894
        %v959 = vpack.c.b16 %v897, %v895
        %v960 = vpack.c.b16 %v900, %v898
        %v961 = vpack.c.b16 %v901, %v899
        %v962 = vpack.c.b16 %v904, %v902
        %v963 = vpack.c.b16 %v905, %v903
        %v964 = vpack.c.b16 %v908, %v906
        %v965 = vpack.c.b16 %v909, %v907
        %v966 = vpack.c.b16 %v912, %v910
        %v967 = vpack.c.b16 %v913, %v911
        %v968 = vpack.c.b16 %v916, %v914
        %v969 = vpack.c.b16 %v917, %v915
        %v970 = vpack.c.b16 %v920, %v918
        %v971 = vpack.c.b16 %v921, %v919
        %v972 = vpack.c.b16 %v924, %v922
        %v973 = vpack.c.b16 %v925, %v923
        %v974 = vpack.c.b16 %v928, %v926
        %v975 = vpack.c.b16 %v929, %v927
        %v976 = vpack.c.b16 %v932, %v930
        %v977 = vpack.c.b16 %v933, %v931
        %v978 = vpack.c.b16 %v936, %v934
        %v979 = vpack.c.b16 %v937, %v935
        %v980 = vpack.c.b16 %v940, %v938
        %v981 = vpack.c.b16 %v941, %v939
        %v982 = vpack.c.b16 %v944, %v942
        %v983 = vpack.c.b16 %v945, %v943
        %v984 = vpack.c.b16 %v948, %v946
        %v985 = vpack.c.b16 %v949, %v947
        %v986 = vpack.c.b16 %v952, %v950
        %v987 = vpack.c.b16 %v953, %v951
        %v988 = vpack.c.b16 %v956, %v954
        %v989 = vpack.c.b16 %v957, %v955
        %1022 = vmatpush.bf16.msra.mxu0 %v972
        %1023 = vmatpush.bf16.msra.mxu0 %v970
        %1024 = vmatpush.bf16.msra.mxu0 %v968
        %1025 = vmatpush.bf16.msra.mxu0 %v966
        %1026 = vmatpush.bf16.msra.mxu0 %v964
        %1027 = vmatpush.bf16.msra.mxu0 %v962
        %1028 = vmatpush.bf16.msra.mxu0 %v960
        %1029 = vmatpush.bf16.msra.mxu0 %v958
        %1030 = vmatmul.bf16.gmra.mxu0 %v575
        %v1031 = vpop.f32.mrf.mxu0
        %v1032 = vadd.f32 %v833, %v1031
        %v1033 = vpop.f32.mrf.mxu0
        %1034 = vdwg.mxu0
        %1035 = vmatpush.bf16.msra.mxu0 %v988
        %1036 = vmatpush.bf16.msra.mxu0 %v986
        %1037 = vmatpush.bf16.msra.mxu0 %v984
        %1038 = vmatpush.bf16.msra.mxu0 %v982
        %1039 = vmatpush.bf16.msra.mxu0 %v980
        %1040 = vmatpush.bf16.msra.mxu0 %v978
        %1041 = vmatpush.bf16.msra.mxu0 %v976
        %1042 = vmatpush.bf16.msra.mxu0 %v974
        %1043 = vmatmul.bf16.gmra.mxu0 %v576
        %v1044 = vpop.f32.mrf.mxu0
        %v1045 = vadd.f32 %v1032, %v1044
        %v1046 = vpop.f32.mrf.mxu0
        %1047 = vdwg.mxu0
        %1048 = vmatpush.bf16.msra.mxu0 %v973
        %1049 = vmatpush.bf16.msra.mxu0 %v971
        %1050 = vmatpush.bf16.msra.mxu0 %v969
        %1051 = vmatpush.bf16.msra.mxu0 %v967
        %1052 = vmatpush.bf16.msra.mxu0 %v965
        %1053 = vmatpush.bf16.msra.mxu0 %v963
        %1054 = vmatpush.bf16.msra.mxu0 %v961
        %1055 = vmatpush.bf16.msra.mxu0 %v959
        %1056 = vmatmul.bf16.gmra.mxu0 %v575
        %v1057 = vpop.f32.mrf.mxu0
        %v1058 = vadd.f32 %v859, %v1057
        %v1059 = vpop.f32.mrf.mxu0
        %1060 = vdwg.mxu0
        %1061 = vmatpush.bf16.msra.mxu0 %v989
        %1062 = vmatpush.bf16.msra.mxu0 %v987
        %1063 = vmatpush.bf16.msra.mxu0 %v985
        %1064 = vmatpush.bf16.msra.mxu0 %v983
        %1065 = vmatpush.bf16.msra.mxu0 %v981
        %1066 = vmatpush.bf16.msra.mxu0 %v979
        %1067 = vmatpush.bf16.msra.mxu0 %v977
        %1068 = vmatpush.bf16.msra.mxu0 %v975
        %1069 = vmatmul.bf16.gmra.mxu0 %v576
        %v1070 = vpop.f32.mrf.mxu0
        %v1071 = vadd.f32 %v1058, %v1070
        %v1072 = vpop.f32.mrf.mxu0
        %1073 = vdwg.mxu0
        %v1075 = vperm.slane %v581, 0
        %v1076 = vperm.slane %v581, 1
        %v1079 = vadd.f32 %v1045, %v1075
        %v1080 = vadd.f32 %v1071, %v1076
        %v1081 = vmax.f32 %v1079, 0.0
        %v1082 = vmax.f32 %v1080, 0.0
        %v1083 = vpack.c.bf16 %v1081, %v1081
        %v1084 = vpack.c.bf16 %v1082, %v1082
        %v1085 = vld [vmem:[#allocation10] sm:$0xff]
        %v1086 = vld [vmem:[#allocation10 + $0x8] sm:$0xff]
        %v1087 = vld [vmem:[#allocation10 + $0x10] sm:$0xff]
        %v1088 = vld [vmem:[#allocation10 + $0x18] sm:$0xff]
        %v1089 = vld [vmem:[#allocation10 + $0x20] sm:$0xff]
        %v1090 = vld [vmem:[#allocation10 + $0x28] sm:$0xff]
        %v1091 = vld [vmem:[#allocation10 + $0x30] sm:$0xff]
        %v1092 = vld [vmem:[#allocation10 + $0x38] sm:$0xff]
        %v1093 = vld [vmem:[#allocation10 + $0x40] sm:$0xff]
        %v1094 = vld [vmem:[#allocation10 + $0x48] sm:$0xff]
        %v1095 = vld [vmem:[#allocation10 + $0x50] sm:$0xff]
        %v1096 = vld [vmem:[#allocation10 + $0x58] sm:$0xff]
        %v1097 = vld [vmem:[#allocation10 + $0x60] sm:$0xff]
        %v1098 = vld [vmem:[#allocation10 + $0x68] sm:$0xff]
        %v1099 = vld [vmem:[#allocation10 + $0x70] sm:$0xff]
        %v1100 = vld [vmem:[#allocation10 + $0x78] sm:$0xff]
        %v1101 = vld [vmem:[#allocation10 + $0x80] sm:$0xff]
        %v1102 = vld [vmem:[#allocation10 + $0x88] sm:$0xff]
        %v1103 = vld [vmem:[#allocation10 + $0x90] sm:$0xff]
        %v1104 = vld [vmem:[#allocation10 + $0x98] sm:$0xff]
        %v1105 = vld [vmem:[#allocation10 + $0xa0] sm:$0xff]
        %v1106 = vld [vmem:[#allocation10 + $0xa8] sm:$0xff]
        %v1107 = vld [vmem:[#allocation10 + $0xb0] sm:$0xff]
        %v1108 = vld [vmem:[#allocation10 + $0xb8] sm:$0xff]
        %v1109 = vld [vmem:[#allocation10 + $0xc0] sm:$0xff]
        %v1110 = vld [vmem:[#allocation10 + $0xc8] sm:$0xff]
        %v1111 = vld [vmem:[#allocation10 + $0xd0] sm:$0xff]
        %v1112 = vld [vmem:[#allocation10 + $0xd8] sm:$0xff]
        %v1113 = vld [vmem:[#allocation10 + $0xe0] sm:$0xff]
        %v1114 = vld [vmem:[#allocation10 + $0xe8] sm:$0xff]
        %v1115 = vld [vmem:[#allocation10 + $0xf0] sm:$0xff]
        %v1116 = vld [vmem:[#allocation10 + $0xf8] sm:$0xff]
        %v1118 = vperm.slane %v583, 0
        %v1119 = vperm.slane %v583, 1
        %v1154 = vunpack.c.l.b16 %v1085
        %v1155 = vunpack.c.h.b16 %v1085
        %v1156 = vunpack.c.l.b16 %v1086
        %v1157 = vunpack.c.h.b16 %v1086
        %v1158 = vunpack.c.l.b16 %v1087
        %v1159 = vunpack.c.h.b16 %v1087
        %v1160 = vunpack.c.l.b16 %v1088
        %v1161 = vunpack.c.h.b16 %v1088
        %v1162 = vunpack.c.l.b16 %v1089
        %v1163 = vunpack.c.h.b16 %v1089
        %v1164 = vunpack.c.l.b16 %v1090
        %v1165 = vunpack.c.h.b16 %v1090
        %v1166 = vunpack.c.l.b16 %v1091
        %v1167 = vunpack.c.h.b16 %v1091
        %v1168 = vunpack.c.l.b16 %v1092
        %v1169 = vunpack.c.h.b16 %v1092
        %v1170 = vunpack.c.l.b16 %v1093
        %v1171 = vunpack.c.h.b16 %v1093
        %v1172 = vunpack.c.l.b16 %v1094
        %v1173 = vunpack.c.h.b16 %v1094
        %v1174 = vunpack.c.l.b16 %v1095
        %v1175 = vunpack.c.h.b16 %v1095
        %v1176 = vunpack.c.l.b16 %v1096
        %v1177 = vunpack.c.h.b16 %v1096
        %v1178 = vunpack.c.l.b16 %v1097
        %v1179 = vunpack.c.h.b16 %v1097
        %v1180 = vunpack.c.l.b16 %v1098
        %v1181 = vunpack.c.h.b16 %v1098
        %v1182 = vunpack.c.l.b16 %v1099
        %v1183 = vunpack.c.h.b16 %v1099
        %v1184 = vunpack.c.l.b16 %v1100
        %v1185 = vunpack.c.h.b16 %v1100
        %v1186 = vunpack.c.l.b16 %v1101
        %v1187 = vunpack.c.h.b16 %v1101
        %v1188 = vunpack.c.l.b16 %v1102
        %v1189 = vunpack.c.h.b16 %v1102
        %v1190 = vunpack.c.l.b16 %v1103
        %v1191 = vunpack.c.h.b16 %v1103
        %v1192 = vunpack.c.l.b16 %v1104
        %v1193 = vunpack.c.h.b16 %v1104
        %v1194 = vunpack.c.l.b16 %v1105
        %v1195 = vunpack.c.h.b16 %v1105
        %v1196 = vunpack.c.l.b16 %v1106
        %v1197 = vunpack.c.h.b16 %v1106
        %v1198 = vunpack.c.l.b16 %v1107
        %v1199 = vunpack.c.h.b16 %v1107
        %v1200 = vunpack.c.l.b16 %v1108
        %v1201 = vunpack.c.h.b16 %v1108
        %v1202 = vunpack.c.l.b16 %v1109
        %v1203 = vunpack.c.h.b16 %v1109
        %v1204 = vunpack.c.l.b16 %v1110
        %v1205 = vunpack.c.h.b16 %v1110
        %v1206 = vunpack.c.l.b16 %v1111
        %v1207 = vunpack.c.h.b16 %v1111
        %v1208 = vunpack.c.l.b16 %v1112
        %v1209 = vunpack.c.h.b16 %v1112
        %v1210 = vunpack.c.l.b16 %v1113
        %v1211 = vunpack.c.h.b16 %v1113
        %v1212 = vunpack.c.l.b16 %v1114
        %v1213 = vunpack.c.h.b16 %v1114
        %v1214 = vunpack.c.l.b16 %v1115
        %v1215 = vunpack.c.h.b16 %v1115
        %v1216 = vunpack.c.l.b16 %v1116
        %v1217 = vunpack.c.h.b16 %v1116
        %v1218 = vpack.c.b16 %v1156, %v1154
        %v1219 = vpack.c.b16 %v1157, %v1155
        %v1220 = vpack.c.b16 %v1160, %v1158
        %v1221 = vpack.c.b16 %v1161, %v1159
        %v1222 = vpack.c.b16 %v1164, %v1162
        %v1223 = vpack.c.b16 %v1165, %v1163
        %v1224 = vpack.c.b16 %v1168, %v1166
        %v1225 = vpack.c.b16 %v1169, %v1167
        %v1226 = vpack.c.b16 %v1172, %v1170
        %v1227 = vpack.c.b16 %v1173, %v1171
        %v1228 = vpack.c.b16 %v1176, %v1174
        %v1229 = vpack.c.b16 %v1177, %v1175
        %v1230 = vpack.c.b16 %v1180, %v1178
        %v1231 = vpack.c.b16 %v1181, %v1179
        %v1232 = vpack.c.b16 %v1184, %v1182
        %v1233 = vpack.c.b16 %v1185, %v1183
        %v1234 = vpack.c.b16 %v1188, %v1186
        %v1235 = vpack.c.b16 %v1189, %v1187
        %v1236 = vpack.c.b16 %v1192, %v1190
        %v1237 = vpack.c.b16 %v1193, %v1191
        %v1238 = vpack.c.b16 %v1196, %v1194
        %v1239 = vpack.c.b16 %v1197, %v1195
        %v1240 = vpack.c.b16 %v1200, %v1198
        %v1241 = vpack.c.b16 %v1201, %v1199
        %v1242 = vpack.c.b16 %v1204, %v1202
        %v1243 = vpack.c.b16 %v1205, %v1203
        %v1244 = vpack.c.b16 %v1208, %v1206
        %v1245 = vpack.c.b16 %v1209, %v1207
        %v1246 = vpack.c.b16 %v1212, %v1210
        %v1247 = vpack.c.b16 %v1213, %v1211
        %v1248 = vpack.c.b16 %v1216, %v1214
        %v1249 = vpack.c.b16 %v1217, %v1215
        %1282 = vmatpush.bf16.msra.mxu0 %v1232
        %1283 = vmatpush.bf16.msra.mxu0 %v1230
        %1284 = vmatpush.bf16.msra.mxu0 %v1228
        %1285 = vmatpush.bf16.msra.mxu0 %v1226
        %1286 = vmatpush.bf16.msra.mxu0 %v1224
        %1287 = vmatpush.bf16.msra.mxu0 %v1222
        %1288 = vmatpush.bf16.msra.mxu0 %v1220
        %1289 = vmatpush.bf16.msra.mxu0 %v1218
        %1290 = vmatmul.bf16.gmra.mxu0 %v1083
        %v1291 = vpop.f32.mrf.mxu0
        %v1292 = vadd.f32 %v1118, %v1291
        %v1293 = vpop.f32.mrf.mxu0
        %1294 = vdwg.mxu0
        %1295 = vmatpush.bf16.msra.mxu0 %v1248
        %1296 = vmatpush.bf16.msra.mxu0 %v1246
        %1297 = vmatpush.bf16.msra.mxu0 %v1244
        %1298 = vmatpush.bf16.msra.mxu0 %v1242
        %1299 = vmatpush.bf16.msra.mxu0 %v1240
        %1300 = vmatpush.bf16.msra.mxu0 %v1238
        %1301 = vmatpush.bf16.msra.mxu0 %v1236
        %1302 = vmatpush.bf16.msra.mxu0 %v1234
        %1303 = vmatmul.bf16.gmra.mxu0 %v1084
        %v1304 = vpop.f32.mrf.mxu0
        %v1305 = vadd.f32 %v1292, %v1304
        %v1306 = vpop.f32.mrf.mxu0
        %1307 = vdwg.mxu0
        %1308 = vmatpush.bf16.msra.mxu0 %v1233
        %1309 = vmatpush.bf16.msra.mxu0 %v1231
        %1310 = vmatpush.bf16.msra.mxu0 %v1229
        %1311 = vmatpush.bf16.msra.mxu0 %v1227
        %1312 = vmatpush.bf16.msra.mxu0 %v1225
        %1313 = vmatpush.bf16.msra.mxu0 %v1223
        %1314 = vmatpush.bf16.msra.mxu0 %v1221
        %1315 = vmatpush.bf16.msra.mxu0 %v1219
        %1316 = vmatmul.bf16.gmra.mxu0 %v1083
        %v1317 = vpop.f32.mrf.mxu0
        %v1318 = vadd.f32 %v1119, %v1317
        %v1319 = vpop.f32.mrf.mxu0
        %1320 = vdwg.mxu0
        %1321 = vmatpush.bf16.msra.mxu0 %v1249
        %1322 = vmatpush.bf16.msra.mxu0 %v1247
        %1323 = vmatpush.bf16.msra.mxu0 %v1245
        %1324 = vmatpush.bf16.msra.mxu0 %v1243
        %1325 = vmatpush.bf16.msra.mxu0 %v1241
        %1326 = vmatpush.bf16.msra.mxu0 %v1239
        %1327 = vmatpush.bf16.msra.mxu0 %v1237
        %1328 = vmatpush.bf16.msra.mxu0 %v1235
        %1329 = vmatmul.bf16.gmra.mxu0 %v1084
        %v1330 = vpop.f32.mrf.mxu0
        %v1331 = vadd.f32 %v1318, %v1330
        %v1332 = vpop.f32.mrf.mxu0
        %1333 = vdwg.mxu0
        %v1334 = vmax.f32 %v1305, 0.0
        %v1335 = vmax.f32 %v1331, 0.0
        %v1336 = vpack.c.bf16 %v1334, %v1334
        %v1337 = vpack.c.bf16 %v1335, %v1335
        %v1338 = vld [vmem:[#allocation11] sm:$0xff]
        %v1339 = vld [vmem:[#allocation11 + $0x8] sm:$0xff]
        %v1340 = vld [vmem:[#allocation11 + $0x10] sm:$0xff]
        %v1341 = vld [vmem:[#allocation11 + $0x18] sm:$0xff]
        %v1342 = vld [vmem:[#allocation11 + $0x20] sm:$0xff]
        %v1343 = vld [vmem:[#allocation11 + $0x28] sm:$0xff]
        %v1344 = vld [vmem:[#allocation11 + $0x30] sm:$0xff]
        %v1345 = vld [vmem:[#allocation11 + $0x38] sm:$0xff]
        %v1346 = vld [vmem:[#allocation11 + $0x40] sm:$0xff]
        %v1347 = vld [vmem:[#allocation11 + $0x48] sm:$0xff]
        %v1348 = vld [vmem:[#allocation11 + $0x50] sm:$0xff]
        %v1349 = vld [vmem:[#allocation11 + $0x58] sm:$0xff]
        %v1350 = vld [vmem:[#allocation11 + $0x60] sm:$0xff]
        %v1351 = vld [vmem:[#allocation11 + $0x68] sm:$0xff]
        %v1352 = vld [vmem:[#allocation11 + $0x70] sm:$0xff]
        %v1353 = vld [vmem:[#allocation11 + $0x78] sm:$0xff]
        %v1354 = vld [vmem:[#allocation11 + $0x80] sm:$0xff]
        %v1355 = vld [vmem:[#allocation11 + $0x88] sm:$0xff]
        %v1356 = vld [vmem:[#allocation11 + $0x90] sm:$0xff]
        %v1357 = vld [vmem:[#allocation11 + $0x98] sm:$0xff]
        %v1358 = vld [vmem:[#allocation11 + $0xa0] sm:$0xff]
        %v1359 = vld [vmem:[#allocation11 + $0xa8] sm:$0xff]
        %v1360 = vld [vmem:[#allocation11 + $0xb0] sm:$0xff]
        %v1361 = vld [vmem:[#allocation11 + $0xb8] sm:$0xff]
        %v1362 = vld [vmem:[#allocation11 + $0xc0] sm:$0xff]
        %v1363 = vld [vmem:[#allocation11 + $0xc8] sm:$0xff]
        %v1364 = vld [vmem:[#allocation11 + $0xd0] sm:$0xff]
        %v1365 = vld [vmem:[#allocation11 + $0xd8] sm:$0xff]
        %v1366 = vld [vmem:[#allocation11 + $0xe0] sm:$0xff]
        %v1367 = vld [vmem:[#allocation11 + $0xe8] sm:$0xff]
        %v1368 = vld [vmem:[#allocation11 + $0xf0] sm:$0xff]
        %v1369 = vld [vmem:[#allocation11 + $0xf8] sm:$0xff]
        %v1371 = vperm.slane %v585, 0
        %v1372 = vperm.slane %v585, 1
        %v1407 = vunpack.c.l.b16 %v1338
        %v1408 = vunpack.c.h.b16 %v1338
        %v1409 = vunpack.c.l.b16 %v1339
        %v1410 = vunpack.c.h.b16 %v1339
        %v1411 = vunpack.c.l.b16 %v1340
        %v1412 = vunpack.c.h.b16 %v1340
        %v1413 = vunpack.c.l.b16 %v1341
        %v1414 = vunpack.c.h.b16 %v1341
        %v1415 = vunpack.c.l.b16 %v1342
        %v1416 = vunpack.c.h.b16 %v1342
        %v1417 = vunpack.c.l.b16 %v1343
        %v1418 = vunpack.c.h.b16 %v1343
        %v1419 = vunpack.c.l.b16 %v1344
        %v1420 = vunpack.c.h.b16 %v1344
        %v1421 = vunpack.c.l.b16 %v1345
        %v1422 = vunpack.c.h.b16 %v1345
        %v1423 = vunpack.c.l.b16 %v1346
        %v1424 = vunpack.c.h.b16 %v1346
        %v1425 = vunpack.c.l.b16 %v1347
        %v1426 = vunpack.c.h.b16 %v1347
        %v1427 = vunpack.c.l.b16 %v1348
        %v1428 = vunpack.c.h.b16 %v1348
        %v1429 = vunpack.c.l.b16 %v1349
        %v1430 = vunpack.c.h.b16 %v1349
        %v1431 = vunpack.c.l.b16 %v1350
        %v1432 = vunpack.c.h.b16 %v1350
        %v1433 = vunpack.c.l.b16 %v1351
        %v1434 = vunpack.c.h.b16 %v1351
        %v1435 = vunpack.c.l.b16 %v1352
        %v1436 = vunpack.c.h.b16 %v1352
        %v1437 = vunpack.c.l.b16 %v1353
        %v1438 = vunpack.c.h.b16 %v1353
        %v1439 = vunpack.c.l.b16 %v1354
        %v1440 = vunpack.c.h.b16 %v1354
        %v1441 = vunpack.c.l.b16 %v1355
        %v1442 = vunpack.c.h.b16 %v1355
        %v1443 = vunpack.c.l.b16 %v1356
        %v1444 = vunpack.c.h.b16 %v1356
        %v1445 = vunpack.c.l.b16 %v1357
        %v1446 = vunpack.c.h.b16 %v1357
        %v1447 = vunpack.c.l.b16 %v1358
        %v1448 = vunpack.c.h.b16 %v1358
        %v1449 = vunpack.c.l.b16 %v1359
        %v1450 = vunpack.c.h.b16 %v1359
        %v1451 = vunpack.c.l.b16 %v1360
        %v1452 = vunpack.c.h.b16 %v1360
        %v1453 = vunpack.c.l.b16 %v1361
        %v1454 = vunpack.c.h.b16 %v1361
        %v1455 = vunpack.c.l.b16 %v1362
        %v1456 = vunpack.c.h.b16 %v1362
        %v1457 = vunpack.c.l.b16 %v1363
        %v1458 = vunpack.c.h.b16 %v1363
        %v1459 = vunpack.c.l.b16 %v1364
        %v1460 = vunpack.c.h.b16 %v1364
        %v1461 = vunpack.c.l.b16 %v1365
        %v1462 = vunpack.c.h.b16 %v1365
        %v1463 = vunpack.c.l.b16 %v1366
        %v1464 = vunpack.c.h.b16 %v1366
        %v1465 = vunpack.c.l.b16 %v1367
        %v1466 = vunpack.c.h.b16 %v1367
        %v1467 = vunpack.c.l.b16 %v1368
        %v1468 = vunpack.c.h.b16 %v1368
        %v1469 = vunpack.c.l.b16 %v1369
        %v1470 = vunpack.c.h.b16 %v1369
        %v1471 = vpack.c.b16 %v1409, %v1407
        %v1472 = vpack.c.b16 %v1410, %v1408
        %v1473 = vpack.c.b16 %v1413, %v1411
        %v1474 = vpack.c.b16 %v1414, %v1412
        %v1475 = vpack.c.b16 %v1417, %v1415
        %v1476 = vpack.c.b16 %v1418, %v1416
        %v1477 = vpack.c.b16 %v1421, %v1419
        %v1478 = vpack.c.b16 %v1422, %v1420
        %v1479 = vpack.c.b16 %v1425, %v1423
        %v1480 = vpack.c.b16 %v1426, %v1424
        %v1481 = vpack.c.b16 %v1429, %v1427
        %v1482 = vpack.c.b16 %v1430, %v1428
        %v1483 = vpack.c.b16 %v1433, %v1431
        %v1484 = vpack.c.b16 %v1434, %v1432
        %v1485 = vpack.c.b16 %v1437, %v1435
        %v1486 = vpack.c.b16 %v1438, %v1436
        %v1487 = vpack.c.b16 %v1441, %v1439
        %v1488 = vpack.c.b16 %v1442, %v1440
        %v1489 = vpack.c.b16 %v1445, %v1443
        %v1490 = vpack.c.b16 %v1446, %v1444
        %v1491 = vpack.c.b16 %v1449, %v1447
        %v1492 = vpack.c.b16 %v1450, %v1448
        %v1493 = vpack.c.b16 %v1453, %v1451
        %v1494 = vpack.c.b16 %v1454, %v1452
        %v1495 = vpack.c.b16 %v1457, %v1455
        %v1496 = vpack.c.b16 %v1458, %v1456
        %v1497 = vpack.c.b16 %v1461, %v1459
        %v1498 = vpack.c.b16 %v1462, %v1460
        %v1499 = vpack.c.b16 %v1465, %v1463
        %v1500 = vpack.c.b16 %v1466, %v1464
        %v1501 = vpack.c.b16 %v1469, %v1467
        %v1502 = vpack.c.b16 %v1470, %v1468
        %1535 = vmatpush.bf16.msra.mxu0 %v1485
        %1536 = vmatpush.bf16.msra.mxu0 %v1483
        %1537 = vmatpush.bf16.msra.mxu0 %v1481
        %1538 = vmatpush.bf16.msra.mxu0 %v1479
        %1539 = vmatpush.bf16.msra.mxu0 %v1477
        %1540 = vmatpush.bf16.msra.mxu0 %v1475
        %1541 = vmatpush.bf16.msra.mxu0 %v1473
        %1542 = vmatpush.bf16.msra.mxu0 %v1471
        %1543 = vmatmul.bf16.gmra.mxu0 %v1336
        %v1544 = vpop.f32.mrf.mxu0
        %v1545 = vadd.f32 %v1371, %v1544
        %v1546 = vpop.f32.mrf.mxu0
        %1547 = vdwg.mxu0
        %1548 = vmatpush.bf16.msra.mxu0 %v1501
        %1549 = vmatpush.bf16.msra.mxu0 %v1499
        %1550 = vmatpush.bf16.msra.mxu0 %v1497
        %1551 = vmatpush.bf16.msra.mxu0 %v1495
        %1552 = vmatpush.bf16.msra.mxu0 %v1493
        %1553 = vmatpush.bf16.msra.mxu0 %v1491
        %1554 = vmatpush.bf16.msra.mxu0 %v1489
        %1555 = vmatpush.bf16.msra.mxu0 %v1487
        %1556 = vmatmul.bf16.gmra.mxu0 %v1337
        %v1557 = vpop.f32.mrf.mxu0
        %v1558 = vadd.f32 %v1545, %v1557
        %v1559 = vpop.f32.mrf.mxu0
        %1560 = vdwg.mxu0
        %1561 = vmatpush.bf16.msra.mxu0 %v1486
        %1562 = vmatpush.bf16.msra.mxu0 %v1484
        %1563 = vmatpush.bf16.msra.mxu0 %v1482
        %1564 = vmatpush.bf16.msra.mxu0 %v1480
        %1565 = vmatpush.bf16.msra.mxu0 %v1478
        %1566 = vmatpush.bf16.msra.mxu0 %v1476
        %1567 = vmatpush.bf16.msra.mxu0 %v1474
        %1568 = vmatpush.bf16.msra.mxu0 %v1472
        %1569 = vmatmul.bf16.gmra.mxu0 %v1336
        %v1570 = vpop.f32.mrf.mxu0
        %v1571 = vadd.f32 %v1372, %v1570
        %v1572 = vpop.f32.mrf.mxu0
        %1573 = vdwg.mxu0
        %1574 = vmatpush.bf16.msra.mxu0 %v1502
        %1575 = vmatpush.bf16.msra.mxu0 %v1500
        %1576 = vmatpush.bf16.msra.mxu0 %v1498
        %1577 = vmatpush.bf16.msra.mxu0 %v1496
        %1578 = vmatpush.bf16.msra.mxu0 %v1494
        %1579 = vmatpush.bf16.msra.mxu0 %v1492
        %1580 = vmatpush.bf16.msra.mxu0 %v1490
        %1581 = vmatpush.bf16.msra.mxu0 %v1488
        %1582 = vmatmul.bf16.gmra.mxu0 %v1337
        %v1583 = vpop.f32.mrf.mxu0
        %v1584 = vadd.f32 %v1571, %v1583
        %v1585 = vpop.f32.mrf.mxu0
        %1586 = vdwg.mxu0
        %v1587 = vpack.c.bf16 %v1558, %v1558
        %v1588 = vpack.c.bf16 %v1584, %v1584
        %v1589 = vld [vmem:[#allocation13] sm:$0xff]
        %v1590 = vld [vmem:[#allocation13 + $0x8] sm:$0xff]
        %v1591 = vld [vmem:[#allocation13 + $0x10] sm:$0xff]
        %v1592 = vld [vmem:[#allocation13 + $0x18] sm:$0xff]
        %v1593 = vld [vmem:[#allocation13 + $0x20] sm:$0xff]
        %v1594 = vld [vmem:[#allocation13 + $0x28] sm:$0xff]
        %v1595 = vld [vmem:[#allocation13 + $0x30] sm:$0xff]
        %v1596 = vld [vmem:[#allocation13 + $0x38] sm:$0xff]
        %v1597 = vld [vmem:[#allocation13 + $0x40] sm:$0xff]
        %v1598 = vld [vmem:[#allocation13 + $0x48] sm:$0xff]
        %v1599 = vld [vmem:[#allocation13 + $0x50] sm:$0xff]
        %v1600 = vld [vmem:[#allocation13 + $0x58] sm:$0xff]
        %v1601 = vld [vmem:[#allocation13 + $0x60] sm:$0xff]
        %v1602 = vld [vmem:[#allocation13 + $0x68] sm:$0xff]
        %v1603 = vld [vmem:[#allocation13 + $0x70] sm:$0xff]
        %v1604 = vld [vmem:[#allocation13 + $0x78] sm:$0xff]
        %v1605 = vld [vmem:[#allocation13 + $0x80] sm:$0xff]
        %v1606 = vld [vmem:[#allocation13 + $0x88] sm:$0xff]
        %v1607 = vld [vmem:[#allocation13 + $0x90] sm:$0xff]
        %v1608 = vld [vmem:[#allocation13 + $0x98] sm:$0xff]
        %v1609 = vld [vmem:[#allocation13 + $0xa0] sm:$0xff]
        %v1610 = vld [vmem:[#allocation13 + $0xa8] sm:$0xff]
        %v1611 = vld [vmem:[#allocation13 + $0xb0] sm:$0xff]
        %v1612 = vld [vmem:[#allocation13 + $0xb8] sm:$0xff]
        %v1613 = vld [vmem:[#allocation13 + $0xc0] sm:$0xff]
        %v1614 = vld [vmem:[#allocation13 + $0xc8] sm:$0xff]
        %v1615 = vld [vmem:[#allocation13 + $0xd0] sm:$0xff]
        %v1616 = vld [vmem:[#allocation13 + $0xd8] sm:$0xff]
        %v1617 = vld [vmem:[#allocation13 + $0xe0] sm:$0xff]
        %v1618 = vld [vmem:[#allocation13 + $0xe8] sm:$0xff]
        %v1619 = vld [vmem:[#allocation13 + $0xf0] sm:$0xff]
        %v1620 = vld [vmem:[#allocation13 + $0xf8] sm:$0xff]
        %v1621 = vld [vmem:[#allocation13 + $0x100] sm:$0xff]
        %v1622 = vld [vmem:[#allocation13 + $0x108] sm:$0xff]
        %v1623 = vld [vmem:[#allocation13 + $0x110] sm:$0xff]
        %v1624 = vld [vmem:[#allocation13 + $0x118] sm:$0xff]
        %v1625 = vld [vmem:[#allocation13 + $0x120] sm:$0xff]
        %v1626 = vld [vmem:[#allocation13 + $0x128] sm:$0xff]
        %v1627 = vld [vmem:[#allocation13 + $0x130] sm:$0xff]
        %v1628 = vld [vmem:[#allocation13 + $0x138] sm:$0xff]
        %v1629 = vld [vmem:[#allocation13 + $0x140] sm:$0xff]
        %v1630 = vld [vmem:[#allocation13 + $0x148] sm:$0xff]
        %v1631 = vld [vmem:[#allocation13 + $0x150] sm:$0xff]
        %v1632 = vld [vmem:[#allocation13 + $0x158] sm:$0xff]
        %v1633 = vld [vmem:[#allocation13 + $0x160] sm:$0xff]
        %v1634 = vld [vmem:[#allocation13 + $0x168] sm:$0xff]
        %v1635 = vld [vmem:[#allocation13 + $0x170] sm:$0xff]
        %v1636 = vld [vmem:[#allocation13 + $0x178] sm:$0xff]
        %v1637 = vld [vmem:[#allocation13 + $0x180] sm:$0xff]
        %v1638 = vld [vmem:[#allocation13 + $0x188] sm:$0xff]
        %v1639 = vld [vmem:[#allocation13 + $0x190] sm:$0xff]
        %v1640 = vld [vmem:[#allocation13 + $0x198] sm:$0xff]
        %v1641 = vld [vmem:[#allocation13 + $0x1a0] sm:$0xff]
        %v1642 = vld [vmem:[#allocation13 + $0x1a8] sm:$0xff]
        %v1643 = vld [vmem:[#allocation13 + $0x1b0] sm:$0xff]
        %v1644 = vld [vmem:[#allocation13 + $0x1b8] sm:$0xff]
        %v1645 = vld [vmem:[#allocation13 + $0x1c0] sm:$0xff]
        %v1646 = vld [vmem:[#allocation13 + $0x1c8] sm:$0xff]
        %v1647 = vld [vmem:[#allocation13 + $0x1d0] sm:$0xff]
        %v1648 = vld [vmem:[#allocation13 + $0x1d8] sm:$0xff]
        %v1649 = vld [vmem:[#allocation13 + $0x1e0] sm:$0xff]
        %v1650 = vld [vmem:[#allocation13 + $0x1e8] sm:$0xff]
        %v1651 = vld [vmem:[#allocation13 + $0x1f0] sm:$0xff]
        %v1652 = vld [vmem:[#allocation13 + $0x1f8] sm:$0xff]
        %v1653 = vld [vmem:[#allocation13 + $0x200] sm:$0xff]
        %v1654 = vld [vmem:[#allocation13 + $0x208] sm:$0xff]
        %v1655 = vld [vmem:[#allocation13 + $0x210] sm:$0xff]
        %v1656 = vld [vmem:[#allocation13 + $0x218] sm:$0xff]
        %v1657 = vld [vmem:[#allocation13 + $0x220] sm:$0xff]
        %v1658 = vld [vmem:[#allocation13 + $0x228] sm:$0xff]
        %v1659 = vld [vmem:[#allocation13 + $0x230] sm:$0xff]
        %v1660 = vld [vmem:[#allocation13 + $0x238] sm:$0xff]
        %v1661 = vld [vmem:[#allocation13 + $0x240] sm:$0xff]
        %v1662 = vld [vmem:[#allocation13 + $0x248] sm:$0xff]
        %v1663 = vld [vmem:[#allocation13 + $0x250] sm:$0xff]
        %v1664 = vld [vmem:[#allocation13 + $0x258] sm:$0xff]
        %v1665 = vld [vmem:[#allocation13 + $0x260] sm:$0xff]
        %v1666 = vld [vmem:[#allocation13 + $0x268] sm:$0xff]
        %v1667 = vld [vmem:[#allocation13 + $0x270] sm:$0xff]
        %v1668 = vld [vmem:[#allocation13 + $0x278] sm:$0xff]
        %v1669 = vld [vmem:[#allocation13 + $0x280] sm:$0xff]
        %v1670 = vld [vmem:[#allocation13 + $0x288] sm:$0xff]
        %v1671 = vld [vmem:[#allocation13 + $0x290] sm:$0xff]
        %v1672 = vld [vmem:[#allocation13 + $0x298] sm:$0xff]
        %v1673 = vld [vmem:[#allocation13 + $0x2a0] sm:$0xff]
        %v1674 = vld [vmem:[#allocation13 + $0x2a8] sm:$0xff]
        %v1675 = vld [vmem:[#allocation13 + $0x2b0] sm:$0xff]
        %v1676 = vld [vmem:[#allocation13 + $0x2b8] sm:$0xff]
        %v1677 = vld [vmem:[#allocation13 + $0x2c0] sm:$0xff]
        %v1678 = vld [vmem:[#allocation13 + $0x2c8] sm:$0xff]
        %v1679 = vld [vmem:[#allocation13 + $0x2d0] sm:$0xff]
        %v1680 = vld [vmem:[#allocation13 + $0x2d8] sm:$0xff]
        %v1681 = vld [vmem:[#allocation13 + $0x2e0] sm:$0xff]
        %v1682 = vld [vmem:[#allocation13 + $0x2e8] sm:$0xff]
        %v1683 = vld [vmem:[#allocation13 + $0x2f0] sm:$0xff]
        %v1684 = vld [vmem:[#allocation13 + $0x2f8] sm:$0xff]
        %v1685 = vld [vmem:[#allocation13 + $0x300] sm:$0xff]
        %v1686 = vld [vmem:[#allocation13 + $0x308] sm:$0xff]
        %v1687 = vld [vmem:[#allocation13 + $0x310] sm:$0xff]
        %v1688 = vld [vmem:[#allocation13 + $0x318] sm:$0xff]
        %v1689 = vld [vmem:[#allocation13 + $0x320] sm:$0xff]
        %v1690 = vld [vmem:[#allocation13 + $0x328] sm:$0xff]
        %v1691 = vld [vmem:[#allocation13 + $0x330] sm:$0xff]
        %v1692 = vld [vmem:[#allocation13 + $0x338] sm:$0xff]
        %v1693 = vld [vmem:[#allocation13 + $0x340] sm:$0xff]
        %v1694 = vld [vmem:[#allocation13 + $0x348] sm:$0xff]
        %v1695 = vld [vmem:[#allocation13 + $0x350] sm:$0xff]
        %v1696 = vld [vmem:[#allocation13 + $0x358] sm:$0xff]
        %v1697 = vld [vmem:[#allocation13 + $0x360] sm:$0xff]
        %v1698 = vld [vmem:[#allocation13 + $0x368] sm:$0xff]
        %v1699 = vld [vmem:[#allocation13 + $0x370] sm:$0xff]
        %v1700 = vld [vmem:[#allocation13 + $0x378] sm:$0xff]
        %v1701 = vld [vmem:[#allocation13 + $0x380] sm:$0xff]
        %v1702 = vld [vmem:[#allocation13 + $0x388] sm:$0xff]
        %v1703 = vld [vmem:[#allocation13 + $0x390] sm:$0xff]
        %v1704 = vld [vmem:[#allocation13 + $0x398] sm:$0xff]
        %v1705 = vld [vmem:[#allocation13 + $0x3a0] sm:$0xff]
        %v1706 = vld [vmem:[#allocation13 + $0x3a8] sm:$0xff]
        %v1707 = vld [vmem:[#allocation13 + $0x3b0] sm:$0xff]
        %v1708 = vld [vmem:[#allocation13 + $0x3b8] sm:$0xff]
        %v1709 = vld [vmem:[#allocation13 + $0x3c0] sm:$0xff]
        %v1710 = vld [vmem:[#allocation13 + $0x3c8] sm:$0xff]
        %v1711 = vld [vmem:[#allocation13 + $0x3d0] sm:$0xff]
        %v1712 = vld [vmem:[#allocation13 + $0x3d8] sm:$0xff]
        %v1713 = vld [vmem:[#allocation13 + $0x3e0] sm:$0xff]
        %v1714 = vld [vmem:[#allocation13 + $0x3e8] sm:$0xff]
        %v1715 = vld [vmem:[#allocation13 + $0x3f0] sm:$0xff]
        %v1716 = vld [vmem:[#allocation13 + $0x3f8] sm:$0xff]
        %v1717 = vld [vmem:[#allocation13 + $0x400] sm:$0xff]
        %v1718 = vld [vmem:[#allocation13 + $0x408] sm:$0xff]
        %v1719 = vld [vmem:[#allocation13 + $0x410] sm:$0xff]
        %v1720 = vld [vmem:[#allocation13 + $0x418] sm:$0xff]
        %v1721 = vld [vmem:[#allocation13 + $0x420] sm:$0xff]
        %v1722 = vld [vmem:[#allocation13 + $0x428] sm:$0xff]
        %v1723 = vld [vmem:[#allocation13 + $0x430] sm:$0xff]
        %v1724 = vld [vmem:[#allocation13 + $0x438] sm:$0xff]
        %v1725 = vld [vmem:[#allocation13 + $0x440] sm:$0xff]
        %v1726 = vld [vmem:[#allocation13 + $0x448] sm:$0xff]
        %v1727 = vld [vmem:[#allocation13 + $0x450] sm:$0xff]
        %v1728 = vld [vmem:[#allocation13 + $0x458] sm:$0xff]
        %v1729 = vld [vmem:[#allocation13 + $0x460] sm:$0xff]
        %v1730 = vld [vmem:[#allocation13 + $0x468] sm:$0xff]
        %v1731 = vld [vmem:[#allocation13 + $0x470] sm:$0xff]
        %v1732 = vld [vmem:[#allocation13 + $0x478] sm:$0xff]
        %v1733 = vld [vmem:[#allocation13 + $0x480] sm:$0xff]
        %v1734 = vld [vmem:[#allocation13 + $0x488] sm:$0xff]
        %v1735 = vld [vmem:[#allocation13 + $0x490] sm:$0xff]
        %v1736 = vld [vmem:[#allocation13 + $0x498] sm:$0xff]
        %v1737 = vld [vmem:[#allocation13 + $0x4a0] sm:$0xff]
        %v1738 = vld [vmem:[#allocation13 + $0x4a8] sm:$0xff]
        %v1739 = vld [vmem:[#allocation13 + $0x4b0] sm:$0xff]
        %v1740 = vld [vmem:[#allocation13 + $0x4b8] sm:$0xff]
        %v1741 = vld [vmem:[#allocation13 + $0x4c0] sm:$0xff]
        %v1742 = vld [vmem:[#allocation13 + $0x4c8] sm:$0xff]
        %v1743 = vld [vmem:[#allocation13 + $0x4d0] sm:$0xff]
        %v1744 = vld [vmem:[#allocation13 + $0x4d8] sm:$0xff]
        %v1745 = vld [vmem:[#allocation13 + $0x4e0] sm:$0xff]
        %v1746 = vld [vmem:[#allocation13 + $0x4e8] sm:$0xff]
        %v1747 = vld [vmem:[#allocation13 + $0x4f0] sm:$0xff]
        %v1748 = vld [vmem:[#allocation13 + $0x4f8] sm:$0xff]
        %v1749 = vld [vmem:[#allocation13 + $0x500] sm:$0xff]
        %v1750 = vld [vmem:[#allocation13 + $0x508] sm:$0xff]
        %v1751 = vld [vmem:[#allocation13 + $0x510] sm:$0xff]
        %v1752 = vld [vmem:[#allocation13 + $0x518] sm:$0xff]
        %v1753 = vld [vmem:[#allocation13 + $0x520] sm:$0xff]
        %v1754 = vld [vmem:[#allocation13 + $0x528] sm:$0xff]
        %v1755 = vld [vmem:[#allocation13 + $0x530] sm:$0xff]
        %v1756 = vld [vmem:[#allocation13 + $0x538] sm:$0xff]
        %v1757 = vld [vmem:[#allocation13 + $0x540] sm:$0xff]
        %v1758 = vld [vmem:[#allocation13 + $0x548] sm:$0xff]
        %v1759 = vld [vmem:[#allocation13 + $0x550] sm:$0xff]
        %v1760 = vld [vmem:[#allocation13 + $0x558] sm:$0xff]
        %v1761 = vld [vmem:[#allocation13 + $0x560] sm:$0xff]
        %v1762 = vld [vmem:[#allocation13 + $0x568] sm:$0xff]
        %v1763 = vld [vmem:[#allocation13 + $0x570] sm:$0xff]
        %v1764 = vld [vmem:[#allocation13 + $0x578] sm:$0xff]
        %v1765 = vld [vmem:[#allocation13 + $0x580] sm:$0xff]
        %v1766 = vld [vmem:[#allocation13 + $0x588] sm:$0xff]
        %v1767 = vld [vmem:[#allocation13 + $0x590] sm:$0xff]
        %v1768 = vld [vmem:[#allocation13 + $0x598] sm:$0xff]
        %v1769 = vld [vmem:[#allocation13 + $0x5a0] sm:$0xff]
        %v1770 = vld [vmem:[#allocation13 + $0x5a8] sm:$0xff]
        %v1771 = vld [vmem:[#allocation13 + $0x5b0] sm:$0xff]
        %v1772 = vld [vmem:[#allocation13 + $0x5b8] sm:$0xff]
        %v1773 = vld [vmem:[#allocation13 + $0x5c0] sm:$0xff]
        %v1774 = vld [vmem:[#allocation13 + $0x5c8] sm:$0xff]
        %v1775 = vld [vmem:[#allocation13 + $0x5d0] sm:$0xff]
        %v1776 = vld [vmem:[#allocation13 + $0x5d8] sm:$0xff]
        %v1777 = vld [vmem:[#allocation13 + $0x5e0] sm:$0xff]
        %v1778 = vld [vmem:[#allocation13 + $0x5e8] sm:$0xff]
        %v1779 = vld [vmem:[#allocation13 + $0x5f0] sm:$0xff]
        %v1780 = vld [vmem:[#allocation13 + $0x5f8] sm:$0xff]
        %v1781 = vld [vmem:[#allocation13 + $0x600] sm:$0xff]
        %v1782 = vld [vmem:[#allocation13 + $0x608] sm:$0xff]
        %v1783 = vld [vmem:[#allocation13 + $0x610] sm:$0xff]
        %v1784 = vld [vmem:[#allocation13 + $0x618] sm:$0xff]
        %v1785 = vld [vmem:[#allocation13 + $0x620] sm:$0xff]
        %v1786 = vld [vmem:[#allocation13 + $0x628] sm:$0xff]
        %v1787 = vld [vmem:[#allocation13 + $0x630] sm:$0xff]
        %v1788 = vld [vmem:[#allocation13 + $0x638] sm:$0xff]
        %v1789 = vld [vmem:[#allocation13 + $0x640] sm:$0xff]
        %v1790 = vld [vmem:[#allocation13 + $0x648] sm:$0xff]
        %v1791 = vld [vmem:[#allocation13 + $0x650] sm:$0xff]
        %v1792 = vld [vmem:[#allocation13 + $0x658] sm:$0xff]
        %v1793 = vld [vmem:[#allocation13 + $0x660] sm:$0xff]
        %v1794 = vld [vmem:[#allocation13 + $0x668] sm:$0xff]
        %v1795 = vld [vmem:[#allocation13 + $0x670] sm:$0xff]
        %v1796 = vld [vmem:[#allocation13 + $0x678] sm:$0xff]
        %v1797 = vld [vmem:[#allocation13 + $0x680] sm:$0xff]
        %v1798 = vld [vmem:[#allocation13 + $0x688] sm:$0xff]
        %v1799 = vld [vmem:[#allocation13 + $0x690] sm:$0xff]
        %v1800 = vld [vmem:[#allocation13 + $0x698] sm:$0xff]
        %v1801 = vld [vmem:[#allocation13 + $0x6a0] sm:$0xff]
        %v1802 = vld [vmem:[#allocation13 + $0x6a8] sm:$0xff]
        %v1803 = vld [vmem:[#allocation13 + $0x6b0] sm:$0xff]
        %v1804 = vld [vmem:[#allocation13 + $0x6b8] sm:$0xff]
        %v1805 = vld [vmem:[#allocation13 + $0x6c0] sm:$0xff]
        %v1806 = vld [vmem:[#allocation13 + $0x6c8] sm:$0xff]
        %v1807 = vld [vmem:[#allocation13 + $0x6d0] sm:$0xff]
        %v1808 = vld [vmem:[#allocation13 + $0x6d8] sm:$0xff]
        %v1809 = vld [vmem:[#allocation13 + $0x6e0] sm:$0xff]
        %v1810 = vld [vmem:[#allocation13 + $0x6e8] sm:$0xff]
        %v1811 = vld [vmem:[#allocation13 + $0x6f0] sm:$0xff]
        %v1812 = vld [vmem:[#allocation13 + $0x6f8] sm:$0xff]
        %v1813 = vld [vmem:[#allocation13 + $0x700] sm:$0xff]
        %v1814 = vld [vmem:[#allocation13 + $0x708] sm:$0xff]
        %v1815 = vld [vmem:[#allocation13 + $0x710] sm:$0xff]
        %v1816 = vld [vmem:[#allocation13 + $0x718] sm:$0xff]
        %v1817 = vld [vmem:[#allocation13 + $0x720] sm:$0xff]
        %v1818 = vld [vmem:[#allocation13 + $0x728] sm:$0xff]
        %v1819 = vld [vmem:[#allocation13 + $0x730] sm:$0xff]
        %v1820 = vld [vmem:[#allocation13 + $0x738] sm:$0xff]
        %v1821 = vld [vmem:[#allocation13 + $0x740] sm:$0xff]
        %v1822 = vld [vmem:[#allocation13 + $0x748] sm:$0xff]
        %v1823 = vld [vmem:[#allocation13 + $0x750] sm:$0xff]
        %v1824 = vld [vmem:[#allocation13 + $0x758] sm:$0xff]
        %v1825 = vld [vmem:[#allocation13 + $0x760] sm:$0xff]
        %v1826 = vld [vmem:[#allocation13 + $0x768] sm:$0xff]
        %v1827 = vld [vmem:[#allocation13 + $0x770] sm:$0xff]
        %v1828 = vld [vmem:[#allocation13 + $0x778] sm:$0xff]
        %v1829 = vld [vmem:[#allocation13 + $0x780] sm:$0xff]
        %v1830 = vld [vmem:[#allocation13 + $0x788] sm:$0xff]
        %v1831 = vld [vmem:[#allocation13 + $0x790] sm:$0xff]
        %v1832 = vld [vmem:[#allocation13 + $0x798] sm:$0xff]
        %v1833 = vld [vmem:[#allocation13 + $0x7a0] sm:$0xff]
        %v1834 = vld [vmem:[#allocation13 + $0x7a8] sm:$0xff]
        %v1835 = vld [vmem:[#allocation13 + $0x7b0] sm:$0xff]
        %v1836 = vld [vmem:[#allocation13 + $0x7b8] sm:$0xff]
        %v1837 = vld [vmem:[#allocation13 + $0x7c0] sm:$0xff]
        %v1838 = vld [vmem:[#allocation13 + $0x7c8] sm:$0xff]
        %v1839 = vld [vmem:[#allocation13 + $0x7d0] sm:$0xff]
        %v1840 = vld [vmem:[#allocation13 + $0x7d8] sm:$0xff]
        %v1841 = vld [vmem:[#allocation13 + $0x7e0] sm:$0xff]
        %v1842 = vld [vmem:[#allocation13 + $0x7e8] sm:$0xff]
        %v1843 = vld [vmem:[#allocation13 + $0x7f0] sm:$0xff]
        %v1844 = vld [vmem:[#allocation13 + $0x7f8] sm:$0xff]
        %v1845 = vld [vmem:[#allocation13 + $0x800] sm:$0xff]
        %v1846 = vld [vmem:[#allocation13 + $0x808] sm:$0xff]
        %v1847 = vld [vmem:[#allocation13 + $0x810] sm:$0xff]
        %v1848 = vld [vmem:[#allocation13 + $0x818] sm:$0xff]
        %v1849 = vld [vmem:[#allocation13 + $0x820] sm:$0xff]
        %v1850 = vld [vmem:[#allocation13 + $0x828] sm:$0xff]
        %v1851 = vld [vmem:[#allocation13 + $0x830] sm:$0xff]
        %v1852 = vld [vmem:[#allocation13 + $0x838] sm:$0xff]
        %v1853 = vld [vmem:[#allocation13 + $0x840] sm:$0xff]
        %v1854 = vld [vmem:[#allocation13 + $0x848] sm:$0xff]
        %v1855 = vld [vmem:[#allocation13 + $0x850] sm:$0xff]
        %v1856 = vld [vmem:[#allocation13 + $0x858] sm:$0xff]
        %v1857 = vld [vmem:[#allocation13 + $0x860] sm:$0xff]
        %v1858 = vld [vmem:[#allocation13 + $0x868] sm:$0xff]
        %v1859 = vld [vmem:[#allocation13 + $0x870] sm:$0xff]
        %v1860 = vld [vmem:[#allocation13 + $0x878] sm:$0xff]
        %v1861 = vld [vmem:[#allocation13 + $0x880] sm:$0xff]
        %v1862 = vld [vmem:[#allocation13 + $0x888] sm:$0xff]
        %v1863 = vld [vmem:[#allocation13 + $0x890] sm:$0xff]
        %v1864 = vld [vmem:[#allocation13 + $0x898] sm:$0xff]
        %v1865 = vld [vmem:[#allocation13 + $0x8a0] sm:$0xff]
        %v1866 = vld [vmem:[#allocation13 + $0x8a8] sm:$0xff]
        %v1867 = vld [vmem:[#allocation13 + $0x8b0] sm:$0xff]
        %v1868 = vld [vmem:[#allocation13 + $0x8b8] sm:$0xff]
        %v1869 = vld [vmem:[#allocation13 + $0x8c0] sm:$0xff]
        %v1870 = vld [vmem:[#allocation13 + $0x8c8] sm:$0xff]
        %v1871 = vld [vmem:[#allocation13 + $0x8d0] sm:$0xff]
        %v1872 = vld [vmem:[#allocation13 + $0x8d8] sm:$0xff]
        %v1873 = vld [vmem:[#allocation13 + $0x8e0] sm:$0xff]
        %v1874 = vld [vmem:[#allocation13 + $0x8e8] sm:$0xff]
        %v1875 = vld [vmem:[#allocation13 + $0x8f0] sm:$0xff]
        %v1876 = vld [vmem:[#allocation13 + $0x8f8] sm:$0xff]
        %v2165 = vunpack.c.l.b16 %v1589
        %v2166 = vunpack.c.h.b16 %v1589
        %v2167 = vunpack.c.l.b16 %v1590
        %v2168 = vunpack.c.h.b16 %v1590
        %v2169 = vunpack.c.l.b16 %v1591
        %v2170 = vunpack.c.h.b16 %v1591
        %v2171 = vunpack.c.l.b16 %v1592
        %v2172 = vunpack.c.h.b16 %v1592
        %v2173 = vunpack.c.l.b16 %v1593
        %v2174 = vunpack.c.h.b16 %v1593
        %v2175 = vunpack.c.l.b16 %v1594
        %v2176 = vunpack.c.h.b16 %v1594
        %v2177 = vunpack.c.l.b16 %v1595
        %v2178 = vunpack.c.h.b16 %v1595
        %v2179 = vunpack.c.l.b16 %v1596
        %v2180 = vunpack.c.h.b16 %v1596
        %v2181 = vunpack.c.l.b16 %v1597
        %v2182 = vunpack.c.h.b16 %v1597
        %v2183 = vunpack.c.l.b16 %v1598
        %v2184 = vunpack.c.h.b16 %v1598
        %v2185 = vunpack.c.l.b16 %v1599
        %v2186 = vunpack.c.h.b16 %v1599
        %v2187 = vunpack.c.l.b16 %v1600
        %v2188 = vunpack.c.h.b16 %v1600
        %v2189 = vunpack.c.l.b16 %v1601
        %v2190 = vunpack.c.h.b16 %v1601
        %v2191 = vunpack.c.l.b16 %v1602
        %v2192 = vunpack.c.h.b16 %v1602
        %v2193 = vunpack.c.l.b16 %v1603
        %v2194 = vunpack.c.h.b16 %v1603
        %v2195 = vunpack.c.l.b16 %v1604
        %v2196 = vunpack.c.h.b16 %v1604
        %v2197 = vunpack.c.l.b16 %v1605
        %v2198 = vunpack.c.h.b16 %v1605
        %v2199 = vunpack.c.l.b16 %v1606
        %v2200 = vunpack.c.h.b16 %v1606
        %v2201 = vunpack.c.l.b16 %v1607
        %v2202 = vunpack.c.h.b16 %v1607
        %v2203 = vunpack.c.l.b16 %v1608
        %v2204 = vunpack.c.h.b16 %v1608
        %v2205 = vunpack.c.l.b16 %v1609
        %v2206 = vunpack.c.h.b16 %v1609
        %v2207 = vunpack.c.l.b16 %v1610
        %v2208 = vunpack.c.h.b16 %v1610
        %v2209 = vunpack.c.l.b16 %v1611
        %v2210 = vunpack.c.h.b16 %v1611
        %v2211 = vunpack.c.l.b16 %v1612
        %v2212 = vunpack.c.h.b16 %v1612
        %v2213 = vunpack.c.l.b16 %v1613
        %v2214 = vunpack.c.h.b16 %v1613
        %v2215 = vunpack.c.l.b16 %v1614
        %v2216 = vunpack.c.h.b16 %v1614
        %v2217 = vunpack.c.l.b16 %v1615
        %v2218 = vunpack.c.h.b16 %v1615
        %v2219 = vunpack.c.l.b16 %v1616
        %v2220 = vunpack.c.h.b16 %v1616
        %v2221 = vunpack.c.l.b16 %v1617
        %v2222 = vunpack.c.h.b16 %v1617
        %v2223 = vunpack.c.l.b16 %v1618
        %v2224 = vunpack.c.h.b16 %v1618
        %v2225 = vunpack.c.l.b16 %v1619
        %v2226 = vunpack.c.h.b16 %v1619
        %v2227 = vunpack.c.l.b16 %v1620
        %v2228 = vunpack.c.h.b16 %v1620
        %v2229 = vunpack.c.l.b16 %v1621
        %v2230 = vunpack.c.h.b16 %v1621
        %v2231 = vunpack.c.l.b16 %v1622
        %v2232 = vunpack.c.h.b16 %v1622
        %v2233 = vunpack.c.l.b16 %v1623
        %v2234 = vunpack.c.h.b16 %v1623
        %v2235 = vunpack.c.l.b16 %v1624
        %v2236 = vunpack.c.h.b16 %v1624
        %v2237 = vunpack.c.l.b16 %v1625
        %v2238 = vunpack.c.h.b16 %v1625
        %v2239 = vunpack.c.l.b16 %v1626
        %v2240 = vunpack.c.h.b16 %v1626
        %v2241 = vunpack.c.l.b16 %v1627
        %v2242 = vunpack.c.h.b16 %v1627
        %v2243 = vunpack.c.l.b16 %v1628
        %v2244 = vunpack.c.h.b16 %v1628
        %v2245 = vunpack.c.l.b16 %v1629
        %v2246 = vunpack.c.h.b16 %v1629
        %v2247 = vunpack.c.l.b16 %v1630
        %v2248 = vunpack.c.h.b16 %v1630
        %v2249 = vunpack.c.l.b16 %v1631
        %v2250 = vunpack.c.h.b16 %v1631
        %v2251 = vunpack.c.l.b16 %v1632
        %v2252 = vunpack.c.h.b16 %v1632
        %v2253 = vunpack.c.l.b16 %v1633
        %v2254 = vunpack.c.h.b16 %v1633
        %v2255 = vunpack.c.l.b16 %v1634
        %v2256 = vunpack.c.h.b16 %v1634
        %v2257 = vunpack.c.l.b16 %v1635
        %v2258 = vunpack.c.h.b16 %v1635
        %v2259 = vunpack.c.l.b16 %v1636
        %v2260 = vunpack.c.h.b16 %v1636
        %v2261 = vunpack.c.l.b16 %v1637
        %v2262 = vunpack.c.h.b16 %v1637
        %v2263 = vunpack.c.l.b16 %v1638
        %v2264 = vunpack.c.h.b16 %v1638
        %v2265 = vunpack.c.l.b16 %v1639
        %v2266 = vunpack.c.h.b16 %v1639
        %v2267 = vunpack.c.l.b16 %v1640
        %v2268 = vunpack.c.h.b16 %v1640
        %v2269 = vunpack.c.l.b16 %v1641
        %v2270 = vunpack.c.h.b16 %v1641
        %v2271 = vunpack.c.l.b16 %v1642
        %v2272 = vunpack.c.h.b16 %v1642
        %v2273 = vunpack.c.l.b16 %v1643
        %v2274 = vunpack.c.h.b16 %v1643
        %v2275 = vunpack.c.l.b16 %v1644
        %v2276 = vunpack.c.h.b16 %v1644
        %v2277 = vunpack.c.l.b16 %v1645
        %v2278 = vunpack.c.h.b16 %v1645
        %v2279 = vunpack.c.l.b16 %v1646
        %v2280 = vunpack.c.h.b16 %v1646
        %v2281 = vunpack.c.l.b16 %v1647
        %v2282 = vunpack.c.h.b16 %v1647
        %v2283 = vunpack.c.l.b16 %v1648
        %v2284 = vunpack.c.h.b16 %v1648
        %v2285 = vunpack.c.l.b16 %v1649
        %v2286 = vunpack.c.h.b16 %v1649
        %v2287 = vunpack.c.l.b16 %v1650
        %v2288 = vunpack.c.h.b16 %v1650
        %v2289 = vunpack.c.l.b16 %v1651
        %v2290 = vunpack.c.h.b16 %v1651
        %v2291 = vunpack.c.l.b16 %v1652
        %v2292 = vunpack.c.h.b16 %v1652
        %v2293 = vunpack.c.l.b16 %v1653
        %v2294 = vunpack.c.h.b16 %v1653
        %v2295 = vunpack.c.l.b16 %v1654
        %v2296 = vunpack.c.h.b16 %v1654
        %v2297 = vunpack.c.l.b16 %v1655
        %v2298 = vunpack.c.h.b16 %v1655
        %v2299 = vunpack.c.l.b16 %v1656
        %v2300 = vunpack.c.h.b16 %v1656
        %v2301 = vunpack.c.l.b16 %v1657
        %v2302 = vunpack.c.h.b16 %v1657
        %v2303 = vunpack.c.l.b16 %v1658
        %v2304 = vunpack.c.h.b16 %v1658
        %v2305 = vunpack.c.l.b16 %v1659
        %v2306 = vunpack.c.h.b16 %v1659
        %v2307 = vunpack.c.l.b16 %v1660
        %v2308 = vunpack.c.h.b16 %v1660
        %v2309 = vunpack.c.l.b16 %v1661
        %v2310 = vunpack.c.h.b16 %v1661
        %v2311 = vunpack.c.l.b16 %v1662
        %v2312 = vunpack.c.h.b16 %v1662
        %v2313 = vunpack.c.l.b16 %v1663
        %v2314 = vunpack.c.h.b16 %v1663
        %v2315 = vunpack.c.l.b16 %v1664
        %v2316 = vunpack.c.h.b16 %v1664
        %v2317 = vunpack.c.l.b16 %v1665
        %v2318 = vunpack.c.h.b16 %v1665
        %v2319 = vunpack.c.l.b16 %v1666
        %v2320 = vunpack.c.h.b16 %v1666
        %v2321 = vunpack.c.l.b16 %v1667
        %v2322 = vunpack.c.h.b16 %v1667
        %v2323 = vunpack.c.l.b16 %v1668
        %v2324 = vunpack.c.h.b16 %v1668
        %v2325 = vunpack.c.l.b16 %v1669
        %v2326 = vunpack.c.h.b16 %v1669
        %v2327 = vunpack.c.l.b16 %v1670
        %v2328 = vunpack.c.h.b16 %v1670
        %v2329 = vunpack.c.l.b16 %v1671
        %v2330 = vunpack.c.h.b16 %v1671
        %v2331 = vunpack.c.l.b16 %v1672
        %v2332 = vunpack.c.h.b16 %v1672
        %v2333 = vunpack.c.l.b16 %v1673
        %v2334 = vunpack.c.h.b16 %v1673
        %v2335 = vunpack.c.l.b16 %v1674
        %v2336 = vunpack.c.h.b16 %v1674
        %v2337 = vunpack.c.l.b16 %v1675
        %v2338 = vunpack.c.h.b16 %v1675
        %v2339 = vunpack.c.l.b16 %v1676
        %v2340 = vunpack.c.h.b16 %v1676
        %v2341 = vunpack.c.l.b16 %v1677
        %v2342 = vunpack.c.h.b16 %v1677
        %v2343 = vunpack.c.l.b16 %v1678
        %v2344 = vunpack.c.h.b16 %v1678
        %v2345 = vunpack.c.l.b16 %v1679
        %v2346 = vunpack.c.h.b16 %v1679
        %v2347 = vunpack.c.l.b16 %v1680
        %v2348 = vunpack.c.h.b16 %v1680
        %v2349 = vunpack.c.l.b16 %v1681
        %v2350 = vunpack.c.h.b16 %v1681
        %v2351 = vunpack.c.l.b16 %v1682
        %v2352 = vunpack.c.h.b16 %v1682
        %v2353 = vunpack.c.l.b16 %v1683
        %v2354 = vunpack.c.h.b16 %v1683
        %v2355 = vunpack.c.l.b16 %v1684
        %v2356 = vunpack.c.h.b16 %v1684
        %v2357 = vunpack.c.l.b16 %v1685
        %v2358 = vunpack.c.h.b16 %v1685
        %v2359 = vunpack.c.l.b16 %v1686
        %v2360 = vunpack.c.h.b16 %v1686
        %v2361 = vunpack.c.l.b16 %v1687
        %v2362 = vunpack.c.h.b16 %v1687
        %v2363 = vunpack.c.l.b16 %v1688
        %v2364 = vunpack.c.h.b16 %v1688
        %v2365 = vunpack.c.l.b16 %v1689
        %v2366 = vunpack.c.h.b16 %v1689
        %v2367 = vunpack.c.l.b16 %v1690
        %v2368 = vunpack.c.h.b16 %v1690
        %v2369 = vunpack.c.l.b16 %v1691
        %v2370 = vunpack.c.h.b16 %v1691
        %v2371 = vunpack.c.l.b16 %v1692
        %v2372 = vunpack.c.h.b16 %v1692
        %v2373 = vunpack.c.l.b16 %v1693
        %v2374 = vunpack.c.h.b16 %v1693
        %v2375 = vunpack.c.l.b16 %v1694
        %v2376 = vunpack.c.h.b16 %v1694
        %v2377 = vunpack.c.l.b16 %v1695
        %v2378 = vunpack.c.h.b16 %v1695
        %v2379 = vunpack.c.l.b16 %v1696
        %v2380 = vunpack.c.h.b16 %v1696
        %v2381 = vunpack.c.l.b16 %v1697
        %v2382 = vunpack.c.h.b16 %v1697
        %v2383 = vunpack.c.l.b16 %v1698
        %v2384 = vunpack.c.h.b16 %v1698
        %v2385 = vunpack.c.l.b16 %v1699
        %v2386 = vunpack.c.h.b16 %v1699
        %v2387 = vunpack.c.l.b16 %v1700
        %v2388 = vunpack.c.h.b16 %v1700
        %v2389 = vunpack.c.l.b16 %v1701
        %v2390 = vunpack.c.h.b16 %v1701
        %v2391 = vunpack.c.l.b16 %v1702
        %v2392 = vunpack.c.h.b16 %v1702
        %v2393 = vunpack.c.l.b16 %v1703
        %v2394 = vunpack.c.h.b16 %v1703
        %v2395 = vunpack.c.l.b16 %v1704
        %v2396 = vunpack.c.h.b16 %v1704
        %v2397 = vunpack.c.l.b16 %v1705
        %v2398 = vunpack.c.h.b16 %v1705
        %v2399 = vunpack.c.l.b16 %v1706
        %v2400 = vunpack.c.h.b16 %v1706
        %v2401 = vunpack.c.l.b16 %v1707
        %v2402 = vunpack.c.h.b16 %v1707
        %v2403 = vunpack.c.l.b16 %v1708
        %v2404 = vunpack.c.h.b16 %v1708
        %v2405 = vunpack.c.l.b16 %v1709
        %v2406 = vunpack.c.h.b16 %v1709
        %v2407 = vunpack.c.l.b16 %v1710
        %v2408 = vunpack.c.h.b16 %v1710
        %v2409 = vunpack.c.l.b16 %v1711
        %v2410 = vunpack.c.h.b16 %v1711
        %v2411 = vunpack.c.l.b16 %v1712
        %v2412 = vunpack.c.h.b16 %v1712
        %v2413 = vunpack.c.l.b16 %v1713
        %v2414 = vunpack.c.h.b16 %v1713
        %v2415 = vunpack.c.l.b16 %v1714
        %v2416 = vunpack.c.h.b16 %v1714
        %v2417 = vunpack.c.l.b16 %v1715
        %v2418 = vunpack.c.h.b16 %v1715
        %v2419 = vunpack.c.l.b16 %v1716
        %v2420 = vunpack.c.h.b16 %v1716
        %v2421 = vunpack.c.l.b16 %v1717
        %v2422 = vunpack.c.h.b16 %v1717
        %v2423 = vunpack.c.l.b16 %v1718
        %v2424 = vunpack.c.h.b16 %v1718
        %v2425 = vunpack.c.l.b16 %v1719
        %v2426 = vunpack.c.h.b16 %v1719
        %v2427 = vunpack.c.l.b16 %v1720
        %v2428 = vunpack.c.h.b16 %v1720
        %v2429 = vunpack.c.l.b16 %v1721
        %v2430 = vunpack.c.h.b16 %v1721
        %v2431 = vunpack.c.l.b16 %v1722
        %v2432 = vunpack.c.h.b16 %v1722
        %v2433 = vunpack.c.l.b16 %v1723
        %v2434 = vunpack.c.h.b16 %v1723
        %v2435 = vunpack.c.l.b16 %v1724
        %v2436 = vunpack.c.h.b16 %v1724
        %v2437 = vunpack.c.l.b16 %v1725
        %v2438 = vunpack.c.h.b16 %v1725
        %v2439 = vunpack.c.l.b16 %v1726
        %v2440 = vunpack.c.h.b16 %v1726
        %v2441 = vunpack.c.l.b16 %v1727
        %v2442 = vunpack.c.h.b16 %v1727
        %v2443 = vunpack.c.l.b16 %v1728
        %v2444 = vunpack.c.h.b16 %v1728
        %v2445 = vunpack.c.l.b16 %v1729
        %v2446 = vunpack.c.h.b16 %v1729
        %v2447 = vunpack.c.l.b16 %v1730
        %v2448 = vunpack.c.h.b16 %v1730
        %v2449 = vunpack.c.l.b16 %v1731
        %v2450 = vunpack.c.h.b16 %v1731
        %v2451 = vunpack.c.l.b16 %v1732
        %v2452 = vunpack.c.h.b16 %v1732
        %v2453 = vunpack.c.l.b16 %v1733
        %v2454 = vunpack.c.h.b16 %v1733
        %v2455 = vunpack.c.l.b16 %v1734
        %v2456 = vunpack.c.h.b16 %v1734
        %v2457 = vunpack.c.l.b16 %v1735
        %v2458 = vunpack.c.h.b16 %v1735
        %v2459 = vunpack.c.l.b16 %v1736
        %v2460 = vunpack.c.h.b16 %v1736
        %v2461 = vunpack.c.l.b16 %v1737
        %v2462 = vunpack.c.h.b16 %v1737
        %v2463 = vunpack.c.l.b16 %v1738
        %v2464 = vunpack.c.h.b16 %v1738
        %v2465 = vunpack.c.l.b16 %v1739
        %v2466 = vunpack.c.h.b16 %v1739
        %v2467 = vunpack.c.l.b16 %v1740
        %v2468 = vunpack.c.h.b16 %v1740
        %v2469 = vunpack.c.l.b16 %v1741
        %v2470 = vunpack.c.h.b16 %v1741
        %v2471 = vunpack.c.l.b16 %v1742
        %v2472 = vunpack.c.h.b16 %v1742
        %v2473 = vunpack.c.l.b16 %v1743
        %v2474 = vunpack.c.h.b16 %v1743
        %v2475 = vunpack.c.l.b16 %v1744
        %v2476 = vunpack.c.h.b16 %v1744
        %v2477 = vunpack.c.l.b16 %v1745
        %v2478 = vunpack.c.h.b16 %v1745
        %v2479 = vunpack.c.l.b16 %v1746
        %v2480 = vunpack.c.h.b16 %v1746
        %v2481 = vunpack.c.l.b16 %v1747
        %v2482 = vunpack.c.h.b16 %v1747
        %v2483 = vunpack.c.l.b16 %v1748
        %v2484 = vunpack.c.h.b16 %v1748
        %v2485 = vunpack.c.l.b16 %v1749
        %v2486 = vunpack.c.h.b16 %v1749
        %v2487 = vunpack.c.l.b16 %v1750
        %v2488 = vunpack.c.h.b16 %v1750
        %v2489 = vunpack.c.l.b16 %v1751
        %v2490 = vunpack.c.h.b16 %v1751
        %v2491 = vunpack.c.l.b16 %v1752
        %v2492 = vunpack.c.h.b16 %v1752
        %v2493 = vunpack.c.l.b16 %v1753
        %v2494 = vunpack.c.h.b16 %v1753
        %v2495 = vunpack.c.l.b16 %v1754
        %v2496 = vunpack.c.h.b16 %v1754
        %v2497 = vunpack.c.l.b16 %v1755
        %v2498 = vunpack.c.h.b16 %v1755
        %v2499 = vunpack.c.l.b16 %v1756
        %v2500 = vunpack.c.h.b16 %v1756
        %v2501 = vunpack.c.l.b16 %v1757
        %v2502 = vunpack.c.h.b16 %v1757
        %v2503 = vunpack.c.l.b16 %v1758
        %v2504 = vunpack.c.h.b16 %v1758
        %v2505 = vunpack.c.l.b16 %v1759
        %v2506 = vunpack.c.h.b16 %v1759
        %v2507 = vunpack.c.l.b16 %v1760
        %v2508 = vunpack.c.h.b16 %v1760
        %v2509 = vunpack.c.l.b16 %v1761
        %v2510 = vunpack.c.h.b16 %v1761
        %v2511 = vunpack.c.l.b16 %v1762
        %v2512 = vunpack.c.h.b16 %v1762
        %v2513 = vunpack.c.l.b16 %v1763
        %v2514 = vunpack.c.h.b16 %v1763
        %v2515 = vunpack.c.l.b16 %v1764
        %v2516 = vunpack.c.h.b16 %v1764
        %v2517 = vunpack.c.l.b16 %v1765
        %v2518 = vunpack.c.h.b16 %v1765
        %v2519 = vunpack.c.l.b16 %v1766
        %v2520 = vunpack.c.h.b16 %v1766
        %v2521 = vunpack.c.l.b16 %v1767
        %v2522 = vunpack.c.h.b16 %v1767
        %v2523 = vunpack.c.l.b16 %v1768
        %v2524 = vunpack.c.h.b16 %v1768
        %v2525 = vunpack.c.l.b16 %v1769
        %v2526 = vunpack.c.h.b16 %v1769
        %v2527 = vunpack.c.l.b16 %v1770
        %v2528 = vunpack.c.h.b16 %v1770
        %v2529 = vunpack.c.l.b16 %v1771
        %v2530 = vunpack.c.h.b16 %v1771
        %v2531 = vunpack.c.l.b16 %v1772
        %v2532 = vunpack.c.h.b16 %v1772
        %v2533 = vunpack.c.l.b16 %v1773
        %v2534 = vunpack.c.h.b16 %v1773
        %v2535 = vunpack.c.l.b16 %v1774
        %v2536 = vunpack.c.h.b16 %v1774
        %v2537 = vunpack.c.l.b16 %v1775
        %v2538 = vunpack.c.h.b16 %v1775
        %v2539 = vunpack.c.l.b16 %v1776
        %v2540 = vunpack.c.h.b16 %v1776
        %v2541 = vunpack.c.l.b16 %v1777
        %v2542 = vunpack.c.h.b16 %v1777
        %v2543 = vunpack.c.l.b16 %v1778
        %v2544 = vunpack.c.h.b16 %v1778
        %v2545 = vunpack.c.l.b16 %v1779
        %v2546 = vunpack.c.h.b16 %v1779
        %v2547 = vunpack.c.l.b16 %v1780
        %v2548 = vunpack.c.h.b16 %v1780
        %v2549 = vunpack.c.l.b16 %v1781
        %v2550 = vunpack.c.h.b16 %v1781
        %v2551 = vunpack.c.l.b16 %v1782
        %v2552 = vunpack.c.h.b16 %v1782
        %v2553 = vunpack.c.l.b16 %v1783
        %v2554 = vunpack.c.h.b16 %v1783
        %v2555 = vunpack.c.l.b16 %v1784
        %v2556 = vunpack.c.h.b16 %v1784
        %v2557 = vunpack.c.l.b16 %v1785
        %v2558 = vunpack.c.h.b16 %v1785
        %v2559 = vunpack.c.l.b16 %v1786
        %v2560 = vunpack.c.h.b16 %v1786
        %v2561 = vunpack.c.l.b16 %v1787
        %v2562 = vunpack.c.h.b16 %v1787
        %v2563 = vunpack.c.l.b16 %v1788
        %v2564 = vunpack.c.h.b16 %v1788
        %v2565 = vunpack.c.l.b16 %v1789
        %v2566 = vunpack.c.h.b16 %v1789
        %v2567 = vunpack.c.l.b16 %v1790
        %v2568 = vunpack.c.h.b16 %v1790
        %v2569 = vunpack.c.l.b16 %v1791
        %v2570 = vunpack.c.h.b16 %v1791
        %v2571 = vunpack.c.l.b16 %v1792
        %v2572 = vunpack.c.h.b16 %v1792
        %v2573 = vunpack.c.l.b16 %v1793
        %v2574 = vunpack.c.h.b16 %v1793
        %v2575 = vunpack.c.l.b16 %v1794
        %v2576 = vunpack.c.h.b16 %v1794
        %v2577 = vunpack.c.l.b16 %v1795
        %v2578 = vunpack.c.h.b16 %v1795
        %v2579 = vunpack.c.l.b16 %v1796
        %v2580 = vunpack.c.h.b16 %v1796
        %v2581 = vunpack.c.l.b16 %v1797
        %v2582 = vunpack.c.h.b16 %v1797
        %v2583 = vunpack.c.l.b16 %v1798
        %v2584 = vunpack.c.h.b16 %v1798
        %v2585 = vunpack.c.l.b16 %v1799
        %v2586 = vunpack.c.h.b16 %v1799
        %v2587 = vunpack.c.l.b16 %v1800
        %v2588 = vunpack.c.h.b16 %v1800
        %v2589 = vunpack.c.l.b16 %v1801
        %v2590 = vunpack.c.h.b16 %v1801
        %v2591 = vunpack.c.l.b16 %v1802
        %v2592 = vunpack.c.h.b16 %v1802
        %v2593 = vunpack.c.l.b16 %v1803
        %v2594 = vunpack.c.h.b16 %v1803
        %v2595 = vunpack.c.l.b16 %v1804
        %v2596 = vunpack.c.h.b16 %v1804
        %v2597 = vunpack.c.l.b16 %v1805
        %v2598 = vunpack.c.h.b16 %v1805
        %v2599 = vunpack.c.l.b16 %v1806
        %v2600 = vunpack.c.h.b16 %v1806
        %v2601 = vunpack.c.l.b16 %v1807
        %v2602 = vunpack.c.h.b16 %v1807
        %v2603 = vunpack.c.l.b16 %v1808
        %v2604 = vunpack.c.h.b16 %v1808
        %v2605 = vunpack.c.l.b16 %v1809
        %v2606 = vunpack.c.h.b16 %v1809
        %v2607 = vunpack.c.l.b16 %v1810
        %v2608 = vunpack.c.h.b16 %v1810
        %v2609 = vunpack.c.l.b16 %v1811
        %v2610 = vunpack.c.h.b16 %v1811
        %v2611 = vunpack.c.l.b16 %v1812
        %v2612 = vunpack.c.h.b16 %v1812
        %v2613 = vunpack.c.l.b16 %v1813
        %v2614 = vunpack.c.h.b16 %v1813
        %v2615 = vunpack.c.l.b16 %v1814
        %v2616 = vunpack.c.h.b16 %v1814
        %v2617 = vunpack.c.l.b16 %v1815
        %v2618 = vunpack.c.h.b16 %v1815
        %v2619 = vunpack.c.l.b16 %v1816
        %v2620 = vunpack.c.h.b16 %v1816
        %v2621 = vunpack.c.l.b16 %v1817
        %v2622 = vunpack.c.h.b16 %v1817
        %v2623 = vunpack.c.l.b16 %v1818
        %v2624 = vunpack.c.h.b16 %v1818
        %v2625 = vunpack.c.l.b16 %v1819
        %v2626 = vunpack.c.h.b16 %v1819
        %v2627 = vunpack.c.l.b16 %v1820
        %v2628 = vunpack.c.h.b16 %v1820
        %v2629 = vunpack.c.l.b16 %v1821
        %v2630 = vunpack.c.h.b16 %v1821
        %v2631 = vunpack.c.l.b16 %v1822
        %v2632 = vunpack.c.h.b16 %v1822
        %v2633 = vunpack.c.l.b16 %v1823
        %v2634 = vunpack.c.h.b16 %v1823
        %v2635 = vunpack.c.l.b16 %v1824
        %v2636 = vunpack.c.h.b16 %v1824
        %v2637 = vunpack.c.l.b16 %v1825
        %v2638 = vunpack.c.h.b16 %v1825
        %v2639 = vunpack.c.l.b16 %v1826
        %v2640 = vunpack.c.h.b16 %v1826
        %v2641 = vunpack.c.l.b16 %v1827
        %v2642 = vunpack.c.h.b16 %v1827
        %v2643 = vunpack.c.l.b16 %v1828
        %v2644 = vunpack.c.h.b16 %v1828
        %v2645 = vunpack.c.l.b16 %v1829
        %v2646 = vunpack.c.h.b16 %v1829
        %v2647 = vunpack.c.l.b16 %v1830
        %v2648 = vunpack.c.h.b16 %v1830
        %v2649 = vunpack.c.l.b16 %v1831
        %v2650 = vunpack.c.h.b16 %v1831
        %v2651 = vunpack.c.l.b16 %v1832
        %v2652 = vunpack.c.h.b16 %v1832
        %v2653 = vunpack.c.l.b16 %v1833
        %v2654 = vunpack.c.h.b16 %v1833
        %v2655 = vunpack.c.l.b16 %v1834
        %v2656 = vunpack.c.h.b16 %v1834
        %v2657 = vunpack.c.l.b16 %v1835
        %v2658 = vunpack.c.h.b16 %v1835
        %v2659 = vunpack.c.l.b16 %v1836
        %v2660 = vunpack.c.h.b16 %v1836
        %v2661 = vunpack.c.l.b16 %v1837
        %v2662 = vunpack.c.h.b16 %v1837
        %v2663 = vunpack.c.l.b16 %v1838
        %v2664 = vunpack.c.h.b16 %v1838
        %v2665 = vunpack.c.l.b16 %v1839
        %v2666 = vunpack.c.h.b16 %v1839
        %v2667 = vunpack.c.l.b16 %v1840
        %v2668 = vunpack.c.h.b16 %v1840
        %v2669 = vunpack.c.l.b16 %v1841
        %v2670 = vunpack.c.h.b16 %v1841
        %v2671 = vunpack.c.l.b16 %v1842
        %v2672 = vunpack.c.h.b16 %v1842
        %v2673 = vunpack.c.l.b16 %v1843
        %v2674 = vunpack.c.h.b16 %v1843
        %v2675 = vunpack.c.l.b16 %v1844
        %v2676 = vunpack.c.h.b16 %v1844
        %v2677 = vunpack.c.l.b16 %v1845
        %v2678 = vunpack.c.h.b16 %v1845
        %v2679 = vunpack.c.l.b16 %v1846
        %v2680 = vunpack.c.h.b16 %v1846
        %v2681 = vunpack.c.l.b16 %v1847
        %v2682 = vunpack.c.h.b16 %v1847
        %v2683 = vunpack.c.l.b16 %v1848
        %v2684 = vunpack.c.h.b16 %v1848
        %v2685 = vunpack.c.l.b16 %v1849
        %v2686 = vunpack.c.h.b16 %v1849
        %v2687 = vunpack.c.l.b16 %v1850
        %v2688 = vunpack.c.h.b16 %v1850
        %v2689 = vunpack.c.l.b16 %v1851
        %v2690 = vunpack.c.h.b16 %v1851
        %v2691 = vunpack.c.l.b16 %v1852
        %v2692 = vunpack.c.h.b16 %v1852
        %v2693 = vunpack.c.l.b16 %v1853
        %v2694 = vunpack.c.h.b16 %v1853
        %v2695 = vunpack.c.l.b16 %v1854
        %v2696 = vunpack.c.h.b16 %v1854
        %v2697 = vunpack.c.l.b16 %v1855
        %v2698 = vunpack.c.h.b16 %v1855
        %v2699 = vunpack.c.l.b16 %v1856
        %v2700 = vunpack.c.h.b16 %v1856
        %v2701 = vunpack.c.l.b16 %v1857
        %v2702 = vunpack.c.h.b16 %v1857
        %v2703 = vunpack.c.l.b16 %v1858
        %v2704 = vunpack.c.h.b16 %v1858
        %v2705 = vunpack.c.l.b16 %v1859
        %v2706 = vunpack.c.h.b16 %v1859
        %v2707 = vunpack.c.l.b16 %v1860
        %v2708 = vunpack.c.h.b16 %v1860
        %v2709 = vunpack.c.l.b16 %v1861
        %v2710 = vunpack.c.h.b16 %v1861
        %v2711 = vunpack.c.l.b16 %v1862
        %v2712 = vunpack.c.h.b16 %v1862
        %v2713 = vunpack.c.l.b16 %v1863
        %v2714 = vunpack.c.h.b16 %v1863
        %v2715 = vunpack.c.l.b16 %v1864
        %v2716 = vunpack.c.h.b16 %v1864
        %v2717 = vunpack.c.l.b16 %v1865
        %v2718 = vunpack.c.h.b16 %v1865
        %v2719 = vunpack.c.l.b16 %v1866
        %v2720 = vunpack.c.h.b16 %v1866
        %v2721 = vunpack.c.l.b16 %v1867
        %v2722 = vunpack.c.h.b16 %v1867
        %v2723 = vunpack.c.l.b16 %v1868
        %v2724 = vunpack.c.h.b16 %v1868
        %v2725 = vunpack.c.l.b16 %v1869
        %v2726 = vunpack.c.h.b16 %v1869
        %v2727 = vunpack.c.l.b16 %v1870
        %v2728 = vunpack.c.h.b16 %v1870
        %v2729 = vunpack.c.l.b16 %v1871
        %v2730 = vunpack.c.h.b16 %v1871
        %v2731 = vunpack.c.l.b16 %v1872
        %v2732 = vunpack.c.h.b16 %v1872
        %v2733 = vunpack.c.l.b16 %v1873
        %v2734 = vunpack.c.h.b16 %v1873
        %v2735 = vunpack.c.l.b16 %v1874
        %v2736 = vunpack.c.h.b16 %v1874
        %v2737 = vunpack.c.l.b16 %v1875
        %v2738 = vunpack.c.h.b16 %v1875
        %v2739 = vunpack.c.l.b16 %v1876
        %v2740 = vunpack.c.h.b16 %v1876
        %v2741 = vpack.c.b16 %v2183, %v2165
        %v2742 = vpack.c.b16 %v2184, %v2166
        %v2743 = vpack.c.b16 %v2185, %v2167
        %v2744 = vpack.c.b16 %v2186, %v2168
        %v2745 = vpack.c.b16 %v2187, %v2169
        %v2746 = vpack.c.b16 %v2188, %v2170
        %v2747 = vpack.c.b16 %v2189, %v2171
        %v2748 = vpack.c.b16 %v2190, %v2172
        %v2749 = vpack.c.b16 %v2191, %v2173
        %v2750 = vpack.c.b16 %v2192, %v2174
        %v2751 = vpack.c.b16 %v2193, %v2175
        %v2752 = vpack.c.b16 %v2194, %v2176
        %v2753 = vpack.c.b16 %v2195, %v2177
        %v2754 = vpack.c.b16 %v2196, %v2178
        %v2755 = vpack.c.b16 %v2197, %v2179
        %v2756 = vpack.c.b16 %v2198, %v2180
        %v2757 = vpack.c.b16 %v2199, %v2181
        %v2758 = vpack.c.b16 %v2200, %v2182
        %v2759 = vpack.c.b16 %v2219, %v2201
        %v2760 = vpack.c.b16 %v2220, %v2202
        %v2761 = vpack.c.b16 %v2221, %v2203
        %v2762 = vpack.c.b16 %v2222, %v2204
        %v2763 = vpack.c.b16 %v2223, %v2205
        %v2764 = vpack.c.b16 %v2224, %v2206
        %v2765 = vpack.c.b16 %v2225, %v2207
        %v2766 = vpack.c.b16 %v2226, %v2208
        %v2767 = vpack.c.b16 %v2227, %v2209
        %v2768 = vpack.c.b16 %v2228, %v2210
        %v2769 = vpack.c.b16 %v2229, %v2211
        %v2770 = vpack.c.b16 %v2230, %v2212
        %v2771 = vpack.c.b16 %v2231, %v2213
        %v2772 = vpack.c.b16 %v2232, %v2214
        %v2773 = vpack.c.b16 %v2233, %v2215
        %v2774 = vpack.c.b16 %v2234, %v2216
        %v2775 = vpack.c.b16 %v2235, %v2217
        %v2776 = vpack.c.b16 %v2236, %v2218
        %v2777 = vpack.c.b16 %v2255, %v2237
        %v2778 = vpack.c.b16 %v2256, %v2238
        %v2779 = vpack.c.b16 %v2257, %v2239
        %v2780 = vpack.c.b16 %v2258, %v2240
        %v2781 = vpack.c.b16 %v2259, %v2241
        %v2782 = vpack.c.b16 %v2260, %v2242
        %v2783 = vpack.c.b16 %v2261, %v2243
        %v2784 = vpack.c.b16 %v2262, %v2244
        %v2785 = vpack.c.b16 %v2263, %v2245
        %v2786 = vpack.c.b16 %v2264, %v2246
        %v2787 = vpack.c.b16 %v2265, %v2247
        %v2788 = vpack.c.b16 %v2266, %v2248
        %v2789 = vpack.c.b16 %v2267, %v2249
        %v2790 = vpack.c.b16 %v2268, %v2250
        %v2791 = vpack.c.b16 %v2269, %v2251
        %v2792 = vpack.c.b16 %v2270, %v2252
        %v2793 = vpack.c.b16 %v2271, %v2253
        %v2794 = vpack.c.b16 %v2272, %v2254
        %v2795 = vpack.c.b16 %v2291, %v2273
        %v2796 = vpack.c.b16 %v2292, %v2274
        %v2797 = vpack.c.b16 %v2293, %v2275
        %v2798 = vpack.c.b16 %v2294, %v2276
        %v2799 = vpack.c.b16 %v2295, %v2277
        %v2800 = vpack.c.b16 %v2296, %v2278
        %v2801 = vpack.c.b16 %v2297, %v2279
        %v2802 = vpack.c.b16 %v2298, %v2280
        %v2803 = vpack.c.b16 %v2299, %v2281
        %v2804 = vpack.c.b16 %v2300, %v2282
        %v2805 = vpack.c.b16 %v2301, %v2283
        %v2806 = vpack.c.b16 %v2302, %v2284
        %v2807 = vpack.c.b16 %v2303, %v2285
        %v2808 = vpack.c.b16 %v2304, %v2286
        %v2809 = vpack.c.b16 %v2305, %v2287
        %v2810 = vpack.c.b16 %v2306, %v2288
        %v2811 = vpack.c.b16 %v2307, %v2289
        %v2812 = vpack.c.b16 %v2308, %v2290
        %v2813 = vpack.c.b16 %v2327, %v2309
        %v2814 = vpack.c.b16 %v2328, %v2310
        %v2815 = vpack.c.b16 %v2329, %v2311
        %v2816 = vpack.c.b16 %v2330, %v2312
        %v2817 = vpack.c.b16 %v2331, %v2313
        %v2818 = vpack.c.b16 %v2332, %v2314
        %v2819 = vpack.c.b16 %v2333, %v2315
        %v2820 = vpack.c.b16 %v2334, %v2316
        %v2821 = vpack.c.b16 %v2335, %v2317
        %v2822 = vpack.c.b16 %v2336, %v2318
        %v2823 = vpack.c.b16 %v2337, %v2319
        %v2824 = vpack.c.b16 %v2338, %v2320
        %v2825 = vpack.c.b16 %v2339, %v2321
        %v2826 = vpack.c.b16 %v2340, %v2322
        %v2827 = vpack.c.b16 %v2341, %v2323
        %v2828 = vpack.c.b16 %v2342, %v2324
        %v2829 = vpack.c.b16 %v2343, %v2325
        %v2830 = vpack.c.b16 %v2344, %v2326
        %v2831 = vpack.c.b16 %v2363, %v2345
        %v2832 = vpack.c.b16 %v2364, %v2346
        %v2833 = vpack.c.b16 %v2365, %v2347
        %v2834 = vpack.c.b16 %v2366, %v2348
        %v2835 = vpack.c.b16 %v2367, %v2349
        %v2836 = vpack.c.b16 %v2368, %v2350
        %v2837 = vpack.c.b16 %v2369, %v2351
        %v2838 = vpack.c.b16 %v2370, %v2352
        %v2839 = vpack.c.b16 %v2371, %v2353
        %v2840 = vpack.c.b16 %v2372, %v2354
        %v2841 = vpack.c.b16 %v2373, %v2355
        %v2842 = vpack.c.b16 %v2374, %v2356
        %v2843 = vpack.c.b16 %v2375, %v2357
        %v2844 = vpack.c.b16 %v2376, %v2358
        %v2845 = vpack.c.b16 %v2377, %v2359
        %v2846 = vpack.c.b16 %v2378, %v2360
        %v2847 = vpack.c.b16 %v2379, %v2361
        %v2848 = vpack.c.b16 %v2380, %v2362
        %v2849 = vpack.c.b16 %v2399, %v2381
        %v2850 = vpack.c.b16 %v2400, %v2382
        %v2851 = vpack.c.b16 %v2401, %v2383
        %v2852 = vpack.c.b16 %v2402, %v2384
        %v2853 = vpack.c.b16 %v2403, %v2385
        %v2854 = vpack.c.b16 %v2404, %v2386
        %v2855 = vpack.c.b16 %v2405, %v2387
        %v2856 = vpack.c.b16 %v2406, %v2388
        %v2857 = vpack.c.b16 %v2407, %v2389
        %v2858 = vpack.c.b16 %v2408, %v2390
        %v2859 = vpack.c.b16 %v2409, %v2391
        %v2860 = vpack.c.b16 %v2410, %v2392
        %v2861 = vpack.c.b16 %v2411, %v2393
        %v2862 = vpack.c.b16 %v2412, %v2394
        %v2863 = vpack.c.b16 %v2413, %v2395
        %v2864 = vpack.c.b16 %v2414, %v2396
        %v2865 = vpack.c.b16 %v2415, %v2397
        %v2866 = vpack.c.b16 %v2416, %v2398
        %v2867 = vpack.c.b16 %v2435, %v2417
        %v2868 = vpack.c.b16 %v2436, %v2418
        %v2869 = vpack.c.b16 %v2437, %v2419
        %v2870 = vpack.c.b16 %v2438, %v2420
        %v2871 = vpack.c.b16 %v2439, %v2421
        %v2872 = vpack.c.b16 %v2440, %v2422
        %v2873 = vpack.c.b16 %v2441, %v2423
        %v2874 = vpack.c.b16 %v2442, %v2424
        %v2875 = vpack.c.b16 %v2443, %v2425
        %v2876 = vpack.c.b16 %v2444, %v2426
        %v2877 = vpack.c.b16 %v2445, %v2427
        %v2878 = vpack.c.b16 %v2446, %v2428
        %v2879 = vpack.c.b16 %v2447, %v2429
        %v2880 = vpack.c.b16 %v2448, %v2430
        %v2881 = vpack.c.b16 %v2449, %v2431
        %v2882 = vpack.c.b16 %v2450, %v2432
        %v2883 = vpack.c.b16 %v2451, %v2433
        %v2884 = vpack.c.b16 %v2452, %v2434
        %v2885 = vpack.c.b16 %v2471, %v2453
        %v2886 = vpack.c.b16 %v2472, %v2454
        %v2887 = vpack.c.b16 %v2473, %v2455
        %v2888 = vpack.c.b16 %v2474, %v2456
        %v2889 = vpack.c.b16 %v2475, %v2457
        %v2890 = vpack.c.b16 %v2476, %v2458
        %v2891 = vpack.c.b16 %v2477, %v2459
        %v2892 = vpack.c.b16 %v2478, %v2460
        %v2893 = vpack.c.b16 %v2479, %v2461
        %v2894 = vpack.c.b16 %v2480, %v2462
        %v2895 = vpack.c.b16 %v2481, %v2463
        %v2896 = vpack.c.b16 %v2482, %v2464
        %v2897 = vpack.c.b16 %v2483, %v2465
        %v2898 = vpack.c.b16 %v2484, %v2466
        %v2899 = vpack.c.b16 %v2485, %v2467
        %v2900 = vpack.c.b16 %v2486, %v2468
        %v2901 = vpack.c.b16 %v2487, %v2469
        %v2902 = vpack.c.b16 %v2488, %v2470
        %v2903 = vpack.c.b16 %v2507, %v2489
        %v2904 = vpack.c.b16 %v2508, %v2490
        %v2905 = vpack.c.b16 %v2509, %v2491
        %v2906 = vpack.c.b16 %v2510, %v2492
        %v2907 = vpack.c.b16 %v2511, %v2493
        %v2908 = vpack.c.b16 %v2512, %v2494
        %v2909 = vpack.c.b16 %v2513, %v2495
        %v2910 = vpack.c.b16 %v2514, %v2496
        %v2911 = vpack.c.b16 %v2515, %v2497
        %v2912 = vpack.c.b16 %v2516, %v2498
        %v2913 = vpack.c.b16 %v2517, %v2499
        %v2914 = vpack.c.b16 %v2518, %v2500
        %v2915 = vpack.c.b16 %v2519, %v2501
        %v2916 = vpack.c.b16 %v2520, %v2502
        %v2917 = vpack.c.b16 %v2521, %v2503
        %v2918 = vpack.c.b16 %v2522, %v2504
        %v2919 = vpack.c.b16 %v2523, %v2505
        %v2920 = vpack.c.b16 %v2524, %v2506
        %v2921 = vpack.c.b16 %v2543, %v2525
        %v2922 = vpack.c.b16 %v2544, %v2526
        %v2923 = vpack.c.b16 %v2545, %v2527
        %v2924 = vpack.c.b16 %v2546, %v2528
        %v2925 = vpack.c.b16 %v2547, %v2529
        %v2926 = vpack.c.b16 %v2548, %v2530
        %v2927 = vpack.c.b16 %v2549, %v2531
        %v2928 = vpack.c.b16 %v2550, %v2532
        %v2929 = vpack.c.b16 %v2551, %v2533
        %v2930 = vpack.c.b16 %v2552, %v2534
        %v2931 = vpack.c.b16 %v2553, %v2535
        %v2932 = vpack.c.b16 %v2554, %v2536
        %v2933 = vpack.c.b16 %v2555, %v2537
        %v2934 = vpack.c.b16 %v2556, %v2538
        %v2935 = vpack.c.b16 %v2557, %v2539
        %v2936 = vpack.c.b16 %v2558, %v2540
        %v2937 = vpack.c.b16 %v2559, %v2541
        %v2938 = vpack.c.b16 %v2560, %v2542
        %v2939 = vpack.c.b16 %v2579, %v2561
        %v2940 = vpack.c.b16 %v2580, %v2562
        %v2941 = vpack.c.b16 %v2581, %v2563
        %v2942 = vpack.c.b16 %v2582, %v2564
        %v2943 = vpack.c.b16 %v2583, %v2565
        %v2944 = vpack.c.b16 %v2584, %v2566
        %v2945 = vpack.c.b16 %v2585, %v2567
        %v2946 = vpack.c.b16 %v2586, %v2568
        %v2947 = vpack.c.b16 %v2587, %v2569
        %v2948 = vpack.c.b16 %v2588, %v2570
        %v2949 = vpack.c.b16 %v2589, %v2571
        %v2950 = vpack.c.b16 %v2590, %v2572
        %v2951 = vpack.c.b16 %v2591, %v2573
        %v2952 = vpack.c.b16 %v2592, %v2574
        %v2953 = vpack.c.b16 %v2593, %v2575
        %v2954 = vpack.c.b16 %v2594, %v2576
        %v2955 = vpack.c.b16 %v2595, %v2577
        %v2956 = vpack.c.b16 %v2596, %v2578
        %v2957 = vpack.c.b16 %v2615, %v2597
        %v2958 = vpack.c.b16 %v2616, %v2598
        %v2959 = vpack.c.b16 %v2617, %v2599
        %v2960 = vpack.c.b16 %v2618, %v2600
        %v2961 = vpack.c.b16 %v2619, %v2601
        %v2962 = vpack.c.b16 %v2620, %v2602
        %v2963 = vpack.c.b16 %v2621, %v2603
        %v2964 = vpack.c.b16 %v2622, %v2604
        %v2965 = vpack.c.b16 %v2623, %v2605
        %v2966 = vpack.c.b16 %v2624, %v2606
        %v2967 = vpack.c.b16 %v2625, %v2607
        %v2968 = vpack.c.b16 %v2626, %v2608
        %v2969 = vpack.c.b16 %v2627, %v2609
        %v2970 = vpack.c.b16 %v2628, %v2610
        %v2971 = vpack.c.b16 %v2629, %v2611
        %v2972 = vpack.c.b16 %v2630, %v2612
        %v2973 = vpack.c.b16 %v2631, %v2613
        %v2974 = vpack.c.b16 %v2632, %v2614
        %v2975 = vpack.c.b16 %v2651, %v2633
        %v2976 = vpack.c.b16 %v2652, %v2634
        %v2977 = vpack.c.b16 %v2653, %v2635
        %v2978 = vpack.c.b16 %v2654, %v2636
        %v2979 = vpack.c.b16 %v2655, %v2637
        %v2980 = vpack.c.b16 %v2656, %v2638
        %v2981 = vpack.c.b16 %v2657, %v2639
        %v2982 = vpack.c.b16 %v2658, %v2640
        %v2983 = vpack.c.b16 %v2659, %v2641
        %v2984 = vpack.c.b16 %v2660, %v2642
        %v2985 = vpack.c.b16 %v2661, %v2643
        %v2986 = vpack.c.b16 %v2662, %v2644
        %v2987 = vpack.c.b16 %v2663, %v2645
        %v2988 = vpack.c.b16 %v2664, %v2646
        %v2989 = vpack.c.b16 %v2665, %v2647
        %v2990 = vpack.c.b16 %v2666, %v2648
        %v2991 = vpack.c.b16 %v2667, %v2649
        %v2992 = vpack.c.b16 %v2668, %v2650
        %v2993 = vpack.c.b16 %v2687, %v2669
        %v2994 = vpack.c.b16 %v2688, %v2670
        %v2995 = vpack.c.b16 %v2689, %v2671
        %v2996 = vpack.c.b16 %v2690, %v2672
        %v2997 = vpack.c.b16 %v2691, %v2673
        %v2998 = vpack.c.b16 %v2692, %v2674
        %v2999 = vpack.c.b16 %v2693, %v2675
        %v3000 = vpack.c.b16 %v2694, %v2676
        %v3001 = vpack.c.b16 %v2695, %v2677
        %v3002 = vpack.c.b16 %v2696, %v2678
        %v3003 = vpack.c.b16 %v2697, %v2679
        %v3004 = vpack.c.b16 %v2698, %v2680
        %v3005 = vpack.c.b16 %v2699, %v2681
        %v3006 = vpack.c.b16 %v2700, %v2682
        %v3007 = vpack.c.b16 %v2701, %v2683
        %v3008 = vpack.c.b16 %v2702, %v2684
        %v3009 = vpack.c.b16 %v2703, %v2685
        %v3010 = vpack.c.b16 %v2704, %v2686
        %v3011 = vpack.c.b16 %v2723, %v2705
        %v3012 = vpack.c.b16 %v2724, %v2706
        %v3013 = vpack.c.b16 %v2725, %v2707
        %v3014 = vpack.c.b16 %v2726, %v2708
        %v3015 = vpack.c.b16 %v2727, %v2709
        %v3016 = vpack.c.b16 %v2728, %v2710
        %v3017 = vpack.c.b16 %v2729, %v2711
        %v3018 = vpack.c.b16 %v2730, %v2712
        %v3019 = vpack.c.b16 %v2731, %v2713
        %v3020 = vpack.c.b16 %v2732, %v2714
        %v3021 = vpack.c.b16 %v2733, %v2715
        %v3022 = vpack.c.b16 %v2734, %v2716
        %v3023 = vpack.c.b16 %v2735, %v2717
        %v3024 = vpack.c.b16 %v2736, %v2718
        %v3025 = vpack.c.b16 %v2737, %v2719
        %v3026 = vpack.c.b16 %v2738, %v2720
        %v3027 = vpack.c.b16 %v2739, %v2721
        %v3028 = vpack.c.b16 %v2740, %v2722
        %3317 = vmatpush.bf16.msra.mxu0 %v2867
        %3318 = vmatpush.bf16.msra.mxu0 %v2849
        %3319 = vmatpush.bf16.msra.mxu0 %v2831
        %3320 = vmatpush.bf16.msra.mxu0 %v2813
        %3321 = vmatpush.bf16.msra.mxu0 %v2795
        %3322 = vmatpush.bf16.msra.mxu0 %v2777
        %3323 = vmatpush.bf16.msra.mxu0 %v2759
        %3324 = vmatpush.bf16.msra.mxu0 %v2741
        %3325 = vmatmul.bf16.gmra.mxu0 %v1587
        %v3326 = vpop.f32.mrf.mxu0
        %v3327 = vadd.f32 0.0, %v3326
        %v3328 = vpop.f32.mrf.mxu0
        %3329 = vdwg.mxu0
        %3330 = vmatpush.bf16.msra.mxu0 %v3011
        %3331 = vmatpush.bf16.msra.mxu0 %v2993
        %3332 = vmatpush.bf16.msra.mxu0 %v2975
        %3333 = vmatpush.bf16.msra.mxu0 %v2957
        %3334 = vmatpush.bf16.msra.mxu0 %v2939
        %3335 = vmatpush.bf16.msra.mxu0 %v2921
        %3336 = vmatpush.bf16.msra.mxu0 %v2903
        %3337 = vmatpush.bf16.msra.mxu0 %v2885
        %3338 = vmatmul.bf16.gmra.mxu0 %v1588
        %v3339 = vpop.f32.mrf.mxu0
        %v3340 = vadd.f32 %v3327, %v3339
        %v3341 = vpop.f32.mrf.mxu0
        %3342 = vdwg.mxu0
        %3343 = vmatpush.bf16.msra.mxu0 %v2868
        %3344 = vmatpush.bf16.msra.mxu0 %v2850
        %3345 = vmatpush.bf16.msra.mxu0 %v2832
        %3346 = vmatpush.bf16.msra.mxu0 %v2814
        %3347 = vmatpush.bf16.msra.mxu0 %v2796
        %3348 = vmatpush.bf16.msra.mxu0 %v2778
        %3349 = vmatpush.bf16.msra.mxu0 %v2760
        %3350 = vmatpush.bf16.msra.mxu0 %v2742
        %3351 = vmatmul.bf16.gmra.mxu0 %v1587
        %v3352 = vpop.f32.mrf.mxu0
        %v3353 = vadd.f32 0.0, %v3352
        %v3354 = vpop.f32.mrf.mxu0
        %3355 = vdwg.mxu0
        %3356 = vmatpush.bf16.msra.mxu0 %v3012
        %3357 = vmatpush.bf16.msra.mxu0 %v2994
        %3358 = vmatpush.bf16.msra.mxu0 %v2976
        %3359 = vmatpush.bf16.msra.mxu0 %v2958
        %3360 = vmatpush.bf16.msra.mxu0 %v2940
        %3361 = vmatpush.bf16.msra.mxu0 %v2922
        %3362 = vmatpush.bf16.msra.mxu0 %v2904
        %3363 = vmatpush.bf16.msra.mxu0 %v2886
        %3364 = vmatmul.bf16.gmra.mxu0 %v1588
        %v3365 = vpop.f32.mrf.mxu0
        %v3366 = vadd.f32 %v3353, %v3365
        %v3367 = vpop.f32.mrf.mxu0
        %3368 = vdwg.mxu0
        %3369 = vmatpush.bf16.msra.mxu0 %v2869
        %3370 = vmatpush.bf16.msra.mxu0 %v2851
        %3371 = vmatpush.bf16.msra.mxu0 %v2833
        %3372 = vmatpush.bf16.msra.mxu0 %v2815
        %3373 = vmatpush.bf16.msra.mxu0 %v2797
        %3374 = vmatpush.bf16.msra.mxu0 %v2779
        %3375 = vmatpush.bf16.msra.mxu0 %v2761
        %3376 = vmatpush.bf16.msra.mxu0 %v2743
        %3377 = vmatmul.bf16.gmra.mxu0 %v1587
        %v3378 = vpop.f32.mrf.mxu0
        %v3379 = vadd.f32 0.0, %v3378
        %v3380 = vpop.f32.mrf.mxu0
        %3381 = vdwg.mxu0
        %3382 = vmatpush.bf16.msra.mxu0 %v3013
        %3383 = vmatpush.bf16.msra.mxu0 %v2995
        %3384 = vmatpush.bf16.msra.mxu0 %v2977
        %3385 = vmatpush.bf16.msra.mxu0 %v2959
        %3386 = vmatpush.bf16.msra.mxu0 %v2941
        %3387 = vmatpush.bf16.msra.mxu0 %v2923
        %3388 = vmatpush.bf16.msra.mxu0 %v2905
        %3389 = vmatpush.bf16.msra.mxu0 %v2887
        %3390 = vmatmul.bf16.gmra.mxu0 %v1588
        %v3391 = vpop.f32.mrf.mxu0
        %v3392 = vadd.f32 %v3379, %v3391
        %v3393 = vpop.f32.mrf.mxu0
        %3394 = vdwg.mxu0
        %3395 = vmatpush.bf16.msra.mxu0 %v2870
        %3396 = vmatpush.bf16.msra.mxu0 %v2852
        %3397 = vmatpush.bf16.msra.mxu0 %v2834
        %3398 = vmatpush.bf16.msra.mxu0 %v2816
        %3399 = vmatpush.bf16.msra.mxu0 %v2798
        %3400 = vmatpush.bf16.msra.mxu0 %v2780
        %3401 = vmatpush.bf16.msra.mxu0 %v2762
        %3402 = vmatpush.bf16.msra.mxu0 %v2744
        %3403 = vmatmul.bf16.gmra.mxu0 %v1587
        %v3404 = vpop.f32.mrf.mxu0
        %v3405 = vadd.f32 0.0, %v3404
        %v3406 = vpop.f32.mrf.mxu0
        %3407 = vdwg.mxu0
        %3408 = vmatpush.bf16.msra.mxu0 %v3014
        %3409 = vmatpush.bf16.msra.mxu0 %v2996
        %3410 = vmatpush.bf16.msra.mxu0 %v2978
        %3411 = vmatpush.bf16.msra.mxu0 %v2960
        %3412 = vmatpush.bf16.msra.mxu0 %v2942
        %3413 = vmatpush.bf16.msra.mxu0 %v2924
        %3414 = vmatpush.bf16.msra.mxu0 %v2906
        %3415 = vmatpush.bf16.msra.mxu0 %v2888
        %3416 = vmatmul.bf16.gmra.mxu0 %v1588
        %v3417 = vpop.f32.mrf.mxu0
        %v3418 = vadd.f32 %v3405, %v3417
        %v3419 = vpop.f32.mrf.mxu0
        %3420 = vdwg.mxu0
        %3421 = vmatpush.bf16.msra.mxu0 %v2871
        %3422 = vmatpush.bf16.msra.mxu0 %v2853
        %3423 = vmatpush.bf16.msra.mxu0 %v2835
        %3424 = vmatpush.bf16.msra.mxu0 %v2817
        %3425 = vmatpush.bf16.msra.mxu0 %v2799
        %3426 = vmatpush.bf16.msra.mxu0 %v2781
        %3427 = vmatpush.bf16.msra.mxu0 %v2763
        %3428 = vmatpush.bf16.msra.mxu0 %v2745
        %3429 = vmatmul.bf16.gmra.mxu0 %v1587
        %v3430 = vpop.f32.mrf.mxu0
        %v3431 = vadd.f32 0.0, %v3430
        %v3432 = vpop.f32.mrf.mxu0
        %3433 = vdwg.mxu0
        %3434 = vmatpush.bf16.msra.mxu0 %v3015
        %3435 = vmatpush.bf16.msra.mxu0 %v2997
        %3436 = vmatpush.bf16.msra.mxu0 %v2979
        %3437 = vmatpush.bf16.msra.mxu0 %v2961
        %3438 = vmatpush.bf16.msra.mxu0 %v2943
        %3439 = vmatpush.bf16.msra.mxu0 %v2925
        %3440 = vmatpush.bf16.msra.mxu0 %v2907
        %3441 = vmatpush.bf16.msra.mxu0 %v2889
        %3442 = vmatmul.bf16.gmra.mxu0 %v1588
        %v3443 = vpop.f32.mrf.mxu0
        %v3444 = vadd.f32 %v3431, %v3443
        %v3445 = vpop.f32.mrf.mxu0
        %3446 = vdwg.mxu0
        %3447 = vmatpush.bf16.msra.mxu0 %v2872
        %3448 = vmatpush.bf16.msra.mxu0 %v2854
        %3449 = vmatpush.bf16.msra.mxu0 %v2836
        %3450 = vmatpush.bf16.msra.mxu0 %v2818
        %3451 = vmatpush.bf16.msra.mxu0 %v2800
        %3452 = vmatpush.bf16.msra.mxu0 %v2782
        %3453 = vmatpush.bf16.msra.mxu0 %v2764
        %3454 = vmatpush.bf16.msra.mxu0 %v2746
        %3455 = vmatmul.bf16.gmra.mxu0 %v1587
        %v3456 = vpop.f32.mrf.mxu0
        %v3457 = vadd.f32 0.0, %v3456
        %v3458 = vpop.f32.mrf.mxu0
        %3459 = vdwg.mxu0
        %3460 = vmatpush.bf16.msra.mxu0 %v3016
        %3461 = vmatpush.bf16.msra.mxu0 %v2998
        %3462 = vmatpush.bf16.msra.mxu0 %v2980
        %3463 = vmatpush.bf16.msra.mxu0 %v2962
        %3464 = vmatpush.bf16.msra.mxu0 %v2944
        %3465 = vmatpush.bf16.msra.mxu0 %v2926
        %3466 = vmatpush.bf16.msra.mxu0 %v2908
        %3467 = vmatpush.bf16.msra.mxu0 %v2890
        %3468 = vmatmul.bf16.gmra.mxu0 %v1588
        %v3469 = vpop.f32.mrf.mxu0
        %v3470 = vadd.f32 %v3457, %v3469
        %v3471 = vpop.f32.mrf.mxu0
        %3472 = vdwg.mxu0
        %3473 = vmatpush.bf16.msra.mxu0 %v2873
        %3474 = vmatpush.bf16.msra.mxu0 %v2855
        %3475 = vmatpush.bf16.msra.mxu0 %v2837
        %3476 = vmatpush.bf16.msra.mxu0 %v2819
        %3477 = vmatpush.bf16.msra.mxu0 %v2801
        %3478 = vmatpush.bf16.msra.mxu0 %v2783
        %3479 = vmatpush.bf16.msra.mxu0 %v2765
        %3480 = vmatpush.bf16.msra.mxu0 %v2747
        %3481 = vmatmul.bf16.gmra.mxu0 %v1587
        %v3482 = vpop.f32.mrf.mxu0
        %v3483 = vadd.f32 0.0, %v3482
        %v3484 = vpop.f32.mrf.mxu0
        %3485 = vdwg.mxu0
        %3486 = vmatpush.bf16.msra.mxu0 %v3017
        %3487 = vmatpush.bf16.msra.mxu0 %v2999
        %3488 = vmatpush.bf16.msra.mxu0 %v2981
        %3489 = vmatpush.bf16.msra.mxu0 %v2963
        %3490 = vmatpush.bf16.msra.mxu0 %v2945
        %3491 = vmatpush.bf16.msra.mxu0 %v2927
        %3492 = vmatpush.bf16.msra.mxu0 %v2909
        %3493 = vmatpush.bf16.msra.mxu0 %v2891
        %3494 = vmatmul.bf16.gmra.mxu0 %v1588
        %v3495 = vpop.f32.mrf.mxu0
        %v3496 = vadd.f32 %v3483, %v3495
        %v3497 = vpop.f32.mrf.mxu0
        %3498 = vdwg.mxu0
        %3499 = vmatpush.bf16.msra.mxu0 %v2874
        %3500 = vmatpush.bf16.msra.mxu0 %v2856
        %3501 = vmatpush.bf16.msra.mxu0 %v2838
        %3502 = vmatpush.bf16.msra.mxu0 %v2820
        %3503 = vmatpush.bf16.msra.mxu0 %v2802
        %3504 = vmatpush.bf16.msra.mxu0 %v2784
        %3505 = vmatpush.bf16.msra.mxu0 %v2766
        %3506 = vmatpush.bf16.msra.mxu0 %v2748
        %3507 = vmatmul.bf16.gmra.mxu0 %v1587
        %v3508 = vpop.f32.mrf.mxu0
        %v3509 = vadd.f32 0.0, %v3508
        %v3510 = vpop.f32.mrf.mxu0
        %3511 = vdwg.mxu0
        %3512 = vmatpush.bf16.msra.mxu0 %v3018
        %3513 = vmatpush.bf16.msra.mxu0 %v3000
        %3514 = vmatpush.bf16.msra.mxu0 %v2982
        %3515 = vmatpush.bf16.msra.mxu0 %v2964
        %3516 = vmatpush.bf16.msra.mxu0 %v2946
        %3517 = vmatpush.bf16.msra.mxu0 %v2928
        %3518 = vmatpush.bf16.msra.mxu0 %v2910
        %3519 = vmatpush.bf16.msra.mxu0 %v2892
        %3520 = vmatmul.bf16.gmra.mxu0 %v1588
        %v3521 = vpop.f32.mrf.mxu0
        %v3522 = vadd.f32 %v3509, %v3521
        %v3523 = vpop.f32.mrf.mxu0
        %3524 = vdwg.mxu0
        %3525 = vmatpush.bf16.msra.mxu0 %v2875
        %3526 = vmatpush.bf16.msra.mxu0 %v2857
        %3527 = vmatpush.bf16.msra.mxu0 %v2839
        %3528 = vmatpush.bf16.msra.mxu0 %v2821
        %3529 = vmatpush.bf16.msra.mxu0 %v2803
        %3530 = vmatpush.bf16.msra.mxu0 %v2785
        %3531 = vmatpush.bf16.msra.mxu0 %v2767
        %3532 = vmatpush.bf16.msra.mxu0 %v2749
        %3533 = vmatmul.bf16.gmra.mxu0 %v1587
        %v3534 = vpop.f32.mrf.mxu0
        %v3535 = vadd.f32 0.0, %v3534
        %v3536 = vpop.f32.mrf.mxu0
        %3537 = vdwg.mxu0
        %3538 = vmatpush.bf16.msra.mxu0 %v3019
        %3539 = vmatpush.bf16.msra.mxu0 %v3001
        %3540 = vmatpush.bf16.msra.mxu0 %v2983
        %3541 = vmatpush.bf16.msra.mxu0 %v2965
        %3542 = vmatpush.bf16.msra.mxu0 %v2947
        %3543 = vmatpush.bf16.msra.mxu0 %v2929
        %3544 = vmatpush.bf16.msra.mxu0 %v2911
        %3545 = vmatpush.bf16.msra.mxu0 %v2893
        %3546 = vmatmul.bf16.gmra.mxu0 %v1588
        %v3547 = vpop.f32.mrf.mxu0
        %v3548 = vadd.f32 %v3535, %v3547
        %v3549 = vpop.f32.mrf.mxu0
        %3550 = vdwg.mxu0
        %3551 = vmatpush.bf16.msra.mxu0 %v2876
        %3552 = vmatpush.bf16.msra.mxu0 %v2858
        %3553 = vmatpush.bf16.msra.mxu0 %v2840
        %3554 = vmatpush.bf16.msra.mxu0 %v2822
        %3555 = vmatpush.bf16.msra.mxu0 %v2804
        %3556 = vmatpush.bf16.msra.mxu0 %v2786
        %3557 = vmatpush.bf16.msra.mxu0 %v2768
        %3558 = vmatpush.bf16.msra.mxu0 %v2750
        %3559 = vmatmul.bf16.gmra.mxu0 %v1587
        %v3560 = vpop.f32.mrf.mxu0
        %v3561 = vadd.f32 0.0, %v3560
        %v3562 = vpop.f32.mrf.mxu0
        %3563 = vdwg.mxu0
        %3564 = vmatpush.bf16.msra.mxu0 %v3020
        %3565 = vmatpush.bf16.msra.mxu0 %v3002
        %3566 = vmatpush.bf16.msra.mxu0 %v2984
        %3567 = vmatpush.bf16.msra.mxu0 %v2966
        %3568 = vmatpush.bf16.msra.mxu0 %v2948
        %3569 = vmatpush.bf16.msra.mxu0 %v2930
        %3570 = vmatpush.bf16.msra.mxu0 %v2912
        %3571 = vmatpush.bf16.msra.mxu0 %v2894
        %3572 = vmatmul.bf16.gmra.mxu0 %v1588
        %v3573 = vpop.f32.mrf.mxu0
        %v3574 = vadd.f32 %v3561, %v3573
        %v3575 = vpop.f32.mrf.mxu0
        %3576 = vdwg.mxu0
        %3577 = vmatpush.bf16.msra.mxu0 %v2877
        %3578 = vmatpush.bf16.msra.mxu0 %v2859
        %3579 = vmatpush.bf16.msra.mxu0 %v2841
        %3580 = vmatpush.bf16.msra.mxu0 %v2823
        %3581 = vmatpush.bf16.msra.mxu0 %v2805
        %3582 = vmatpush.bf16.msra.mxu0 %v2787
        %3583 = vmatpush.bf16.msra.mxu0 %v2769
        %3584 = vmatpush.bf16.msra.mxu0 %v2751
        %3585 = vmatmul.bf16.gmra.mxu0 %v1587
        %v3586 = vpop.f32.mrf.mxu0
        %v3587 = vadd.f32 0.0, %v3586
        %v3588 = vpop.f32.mrf.mxu0
        %3589 = vdwg.mxu0
        %3590 = vmatpush.bf16.msra.mxu0 %v3021
        %3591 = vmatpush.bf16.msra.mxu0 %v3003
        %3592 = vmatpush.bf16.msra.mxu0 %v2985
        %3593 = vmatpush.bf16.msra.mxu0 %v2967
        %3594 = vmatpush.bf16.msra.mxu0 %v2949
        %3595 = vmatpush.bf16.msra.mxu0 %v2931
        %3596 = vmatpush.bf16.msra.mxu0 %v2913
        %3597 = vmatpush.bf16.msra.mxu0 %v2895
        %3598 = vmatmul.bf16.gmra.mxu0 %v1588
        %v3599 = vpop.f32.mrf.mxu0
        %v3600 = vadd.f32 %v3587, %v3599
        %v3601 = vpop.f32.mrf.mxu0
        %3602 = vdwg.mxu0
        %3603 = vmatpush.bf16.msra.mxu0 %v2878
        %3604 = vmatpush.bf16.msra.mxu0 %v2860
        %3605 = vmatpush.bf16.msra.mxu0 %v2842
        %3606 = vmatpush.bf16.msra.mxu0 %v2824
        %3607 = vmatpush.bf16.msra.mxu0 %v2806
        %3608 = vmatpush.bf16.msra.mxu0 %v2788
        %3609 = vmatpush.bf16.msra.mxu0 %v2770
        %3610 = vmatpush.bf16.msra.mxu0 %v2752
        %3611 = vmatmul.bf16.gmra.mxu0 %v1587
        %v3612 = vpop.f32.mrf.mxu0
        %v3613 = vadd.f32 0.0, %v3612
        %v3614 = vpop.f32.mrf.mxu0
        %3615 = vdwg.mxu0
        %3616 = vmatpush.bf16.msra.mxu0 %v3022
        %3617 = vmatpush.bf16.msra.mxu0 %v3004
        %3618 = vmatpush.bf16.msra.mxu0 %v2986
        %3619 = vmatpush.bf16.msra.mxu0 %v2968
        %3620 = vmatpush.bf16.msra.mxu0 %v2950
        %3621 = vmatpush.bf16.msra.mxu0 %v2932
        %3622 = vmatpush.bf16.msra.mxu0 %v2914
        %3623 = vmatpush.bf16.msra.mxu0 %v2896
        %3624 = vmatmul.bf16.gmra.mxu0 %v1588
        %v3625 = vpop.f32.mrf.mxu0
        %v3626 = vadd.f32 %v3613, %v3625
        %v3627 = vpop.f32.mrf.mxu0
        %3628 = vdwg.mxu0
        %3629 = vmatpush.bf16.msra.mxu0 %v2879
        %3630 = vmatpush.bf16.msra.mxu0 %v2861
        %3631 = vmatpush.bf16.msra.mxu0 %v2843
        %3632 = vmatpush.bf16.msra.mxu0 %v2825
        %3633 = vmatpush.bf16.msra.mxu0 %v2807
        %3634 = vmatpush.bf16.msra.mxu0 %v2789
        %3635 = vmatpush.bf16.msra.mxu0 %v2771
        %3636 = vmatpush.bf16.msra.mxu0 %v2753
        %3637 = vmatmul.bf16.gmra.mxu0 %v1587
        %v3638 = vpop.f32.mrf.mxu0
        %v3639 = vadd.f32 0.0, %v3638
        %v3640 = vpop.f32.mrf.mxu0
        %3641 = vdwg.mxu0
        %3642 = vmatpush.bf16.msra.mxu0 %v3023
        %3643 = vmatpush.bf16.msra.mxu0 %v3005
        %3644 = vmatpush.bf16.msra.mxu0 %v2987
        %3645 = vmatpush.bf16.msra.mxu0 %v2969
        %3646 = vmatpush.bf16.msra.mxu0 %v2951
        %3647 = vmatpush.bf16.msra.mxu0 %v2933
        %3648 = vmatpush.bf16.msra.mxu0 %v2915
        %3649 = vmatpush.bf16.msra.mxu0 %v2897
        %3650 = vmatmul.bf16.gmra.mxu0 %v1588
        %v3651 = vpop.f32.mrf.mxu0
        %v3652 = vadd.f32 %v3639, %v3651
        %v3653 = vpop.f32.mrf.mxu0
        %3654 = vdwg.mxu0
        %3655 = vmatpush.bf16.msra.mxu0 %v2880
        %3656 = vmatpush.bf16.msra.mxu0 %v2862
        %3657 = vmatpush.bf16.msra.mxu0 %v2844
        %3658 = vmatpush.bf16.msra.mxu0 %v2826
        %3659 = vmatpush.bf16.msra.mxu0 %v2808
        %3660 = vmatpush.bf16.msra.mxu0 %v2790
        %3661 = vmatpush.bf16.msra.mxu0 %v2772
        %3662 = vmatpush.bf16.msra.mxu0 %v2754
        %3663 = vmatmul.bf16.gmra.mxu0 %v1587
        %v3664 = vpop.f32.mrf.mxu0
        %v3665 = vadd.f32 0.0, %v3664
        %v3666 = vpop.f32.mrf.mxu0
        %3667 = vdwg.mxu0
        %3668 = vmatpush.bf16.msra.mxu0 %v3024
        %3669 = vmatpush.bf16.msra.mxu0 %v3006
        %3670 = vmatpush.bf16.msra.mxu0 %v2988
        %3671 = vmatpush.bf16.msra.mxu0 %v2970
        %3672 = vmatpush.bf16.msra.mxu0 %v2952
        %3673 = vmatpush.bf16.msra.mxu0 %v2934
        %3674 = vmatpush.bf16.msra.mxu0 %v2916
        %3675 = vmatpush.bf16.msra.mxu0 %v2898
        %3676 = vmatmul.bf16.gmra.mxu0 %v1588
        %v3677 = vpop.f32.mrf.mxu0
        %v3678 = vadd.f32 %v3665, %v3677
        %v3679 = vpop.f32.mrf.mxu0
        %3680 = vdwg.mxu0
        %3681 = vmatpush.bf16.msra.mxu0 %v2881
        %3682 = vmatpush.bf16.msra.mxu0 %v2863
        %3683 = vmatpush.bf16.msra.mxu0 %v2845
        %3684 = vmatpush.bf16.msra.mxu0 %v2827
        %3685 = vmatpush.bf16.msra.mxu0 %v2809
        %3686 = vmatpush.bf16.msra.mxu0 %v2791
        %3687 = vmatpush.bf16.msra.mxu0 %v2773
        %3688 = vmatpush.bf16.msra.mxu0 %v2755
        %3689 = vmatmul.bf16.gmra.mxu0 %v1587
        %v3690 = vpop.f32.mrf.mxu0
        %v3691 = vadd.f32 0.0, %v3690
        %v3692 = vpop.f32.mrf.mxu0
        %3693 = vdwg.mxu0
        %3694 = vmatpush.bf16.msra.mxu0 %v3025
        %3695 = vmatpush.bf16.msra.mxu0 %v3007
        %3696 = vmatpush.bf16.msra.mxu0 %v2989
        %3697 = vmatpush.bf16.msra.mxu0 %v2971
        %3698 = vmatpush.bf16.msra.mxu0 %v2953
        %3699 = vmatpush.bf16.msra.mxu0 %v2935
        %3700 = vmatpush.bf16.msra.mxu0 %v2917
        %3701 = vmatpush.bf16.msra.mxu0 %v2899
        %3702 = vmatmul.bf16.gmra.mxu0 %v1588
        %v3703 = vpop.f32.mrf.mxu0
        %v3704 = vadd.f32 %v3691, %v3703
        %v3705 = vpop.f32.mrf.mxu0
        %3706 = vdwg.mxu0
        %3707 = vmatpush.bf16.msra.mxu0 %v2882
        %3708 = vmatpush.bf16.msra.mxu0 %v2864
        %3709 = vmatpush.bf16.msra.mxu0 %v2846
        %3710 = vmatpush.bf16.msra.mxu0 %v2828
        %3711 = vmatpush.bf16.msra.mxu0 %v2810
        %3712 = vmatpush.bf16.msra.mxu0 %v2792
        %3713 = vmatpush.bf16.msra.mxu0 %v2774
        %3714 = vmatpush.bf16.msra.mxu0 %v2756
        %3715 = vmatmul.bf16.gmra.mxu0 %v1587
        %v3716 = vpop.f32.mrf.mxu0
        %v3717 = vadd.f32 0.0, %v3716
        %v3718 = vpop.f32.mrf.mxu0
        %3719 = vdwg.mxu0
        %3720 = vmatpush.bf16.msra.mxu0 %v3026
        %3721 = vmatpush.bf16.msra.mxu0 %v3008
        %3722 = vmatpush.bf16.msra.mxu0 %v2990
        %3723 = vmatpush.bf16.msra.mxu0 %v2972
        %3724 = vmatpush.bf16.msra.mxu0 %v2954
        %3725 = vmatpush.bf16.msra.mxu0 %v2936
        %3726 = vmatpush.bf16.msra.mxu0 %v2918
        %3727 = vmatpush.bf16.msra.mxu0 %v2900
        %3728 = vmatmul.bf16.gmra.mxu0 %v1588
        %v3729 = vpop.f32.mrf.mxu0
        %v3730 = vadd.f32 %v3717, %v3729
        %v3731 = vpop.f32.mrf.mxu0
        %3732 = vdwg.mxu0
        %3733 = vmatpush.bf16.msra.mxu0 %v2883
        %3734 = vmatpush.bf16.msra.mxu0 %v2865
        %3735 = vmatpush.bf16.msra.mxu0 %v2847
        %3736 = vmatpush.bf16.msra.mxu0 %v2829
        %3737 = vmatpush.bf16.msra.mxu0 %v2811
        %3738 = vmatpush.bf16.msra.mxu0 %v2793
        %3739 = vmatpush.bf16.msra.mxu0 %v2775
        %3740 = vmatpush.bf16.msra.mxu0 %v2757
        %3741 = vmatmul.bf16.gmra.mxu0 %v1587
        %v3742 = vpop.f32.mrf.mxu0
        %v3743 = vadd.f32 0.0, %v3742
        %v3744 = vpop.f32.mrf.mxu0
        %3745 = vdwg.mxu0
        %3746 = vmatpush.bf16.msra.mxu0 %v3027
        %3747 = vmatpush.bf16.msra.mxu0 %v3009
        %3748 = vmatpush.bf16.msra.mxu0 %v2991
        %3749 = vmatpush.bf16.msra.mxu0 %v2973
        %3750 = vmatpush.bf16.msra.mxu0 %v2955
        %3751 = vmatpush.bf16.msra.mxu0 %v2937
        %3752 = vmatpush.bf16.msra.mxu0 %v2919
        %3753 = vmatpush.bf16.msra.mxu0 %v2901
        %3754 = vmatmul.bf16.gmra.mxu0 %v1588
        %v3755 = vpop.f32.mrf.mxu0
        %v3756 = vadd.f32 %v3743, %v3755
        %v3757 = vpop.f32.mrf.mxu0
        %3758 = vdwg.mxu0
        %3759 = vmatpush.bf16.msra.mxu0 %v2884
        %3760 = vmatpush.bf16.msra.mxu0 %v2866
        %3761 = vmatpush.bf16.msra.mxu0 %v2848
        %3762 = vmatpush.bf16.msra.mxu0 %v2830
        %3763 = vmatpush.bf16.msra.mxu0 %v2812
        %3764 = vmatpush.bf16.msra.mxu0 %v2794
        %3765 = vmatpush.bf16.msra.mxu0 %v2776
        %3766 = vmatpush.bf16.msra.mxu0 %v2758
        %3767 = vmatmul.bf16.gmra.mxu0 %v1587
        %v3768 = vpop.f32.mrf.mxu0
        %v3769 = vadd.f32 0.0, %v3768
        %v3770 = vpop.f32.mrf.mxu0
        %3771 = vdwg.mxu0
        %3772 = vmatpush.bf16.msra.mxu0 %v3028
        %3773 = vmatpush.bf16.msra.mxu0 %v3010
        %3774 = vmatpush.bf16.msra.mxu0 %v2992
        %3775 = vmatpush.bf16.msra.mxu0 %v2974
        %3776 = vmatpush.bf16.msra.mxu0 %v2956
        %3777 = vmatpush.bf16.msra.mxu0 %v2938
        %3778 = vmatpush.bf16.msra.mxu0 %v2920
        %3779 = vmatpush.bf16.msra.mxu0 %v2902
        %3780 = vmatmul.bf16.gmra.mxu0 %v1588
        %v3781 = vpop.f32.mrf.mxu0
        %v3782 = vadd.f32 %v3769, %v3781
        %v3783 = vpop.f32.mrf.mxu0
        %3784 = vdwg.mxu0
        %v3785 = vld [vmem:[#allocation17] ss:$4 sm:$0x3]
        %s3786 = scalar_lea.vmem [#allocation17], 1
        %v3787 = vld [vmem:[%s3786] ss:$4 sm:$0x3]
        %s3788 = scalar_lea.vmem [#allocation17], 2
        %v3789 = vld [vmem:[%s3788] ss:$4 sm:$0x3]
        %v3790 = vrot.slane %v3340, 4
        %v3791 = vadd.f32 %v3340, %v3790
        %v3792 = vrot.slane %v3791, 2
        %v3793 = vadd.f32 %v3791, %v3792
        %v3794 = vrot.slane %v3793, 1
        %v3795 = vadd.f32 %v3793, %v3794
        %v3796 = vrot.slane %v3366, 4
        %v3797 = vadd.f32 %v3366, %v3796
        %v3798 = vrot.slane %v3797, 2
        %v3799 = vadd.f32 %v3797, %v3798
        %v3800 = vrot.slane %v3799, 1
        %v3801 = vadd.f32 %v3799, %v3800
        %v3802 = vadd.f32 %v3795, 0.0
        %v3803 = vadd.f32 %v3801, 0.0
        %v3804 = vmul.f32 %v3340, %v3340
        %v3805 = vmul.f32 %v3366, %v3366
        %v3806 = vrot.slane %v3804, 4
        %v3807 = vadd.f32 %v3804, %v3806
        %v3808 = vrot.slane %v3807, 2
        %v3809 = vadd.f32 %v3807, %v3808
        %v3810 = vrot.slane %v3809, 1
        %v3811 = vadd.f32 %v3809, %v3810
        %v3812 = vrot.slane %v3805, 4
        %v3813 = vadd.f32 %v3805, %v3812
        %v3814 = vrot.slane %v3813, 2
        %v3815 = vadd.f32 %v3813, %v3814
        %v3816 = vrot.slane %v3815, 1
        %v3817 = vadd.f32 %v3815, %v3816
        %v3818 = vadd.f32 %v3811, 0.0
        %v3819 = vadd.f32 %v3817, 0.0
        %v3820 = vrot.slane %v3392, 4
        %v3821 = vadd.f32 %v3392, %v3820
        %v3822 = vrot.slane %v3821, 2
        %v3823 = vadd.f32 %v3821, %v3822
        %v3824 = vrot.slane %v3823, 1
        %v3825 = vadd.f32 %v3823, %v3824
        %v3826 = vrot.slane %v3418, 4
        %v3827 = vadd.f32 %v3418, %v3826
        %v3828 = vrot.slane %v3827, 2
        %v3829 = vadd.f32 %v3827, %v3828
        %v3830 = vrot.slane %v3829, 1
        %v3831 = vadd.f32 %v3829, %v3830
        %v3832 = vadd.f32 %v3802, %v3825
        %v3833 = vadd.f32 %v3803, %v3831
        %v3834 = vmul.f32 %v3392, %v3392
        %v3835 = vmul.f32 %v3418, %v3418
        %v3836 = vrot.slane %v3834, 4
        %v3837 = vadd.f32 %v3834, %v3836
        %v3838 = vrot.slane %v3837, 2
        %v3839 = vadd.f32 %v3837, %v3838
        %v3840 = vrot.slane %v3839, 1
        %v3841 = vadd.f32 %v3839, %v3840
        %v3842 = vrot.slane %v3835, 4
        %v3843 = vadd.f32 %v3835, %v3842
        %v3844 = vrot.slane %v3843, 2
        %v3845 = vadd.f32 %v3843, %v3844
        %v3846 = vrot.slane %v3845, 1
        %v3847 = vadd.f32 %v3845, %v3846
        %v3848 = vadd.f32 %v3818, %v3841
        %v3849 = vadd.f32 %v3819, %v3847
        %v3850 = vrot.slane %v3444, 4
        %v3851 = vadd.f32 %v3444, %v3850
        %v3852 = vrot.slane %v3851, 2
        %v3853 = vadd.f32 %v3851, %v3852
        %v3854 = vrot.slane %v3853, 1
        %v3855 = vadd.f32 %v3853, %v3854
        %v3856 = vrot.slane %v3470, 4
        %v3857 = vadd.f32 %v3470, %v3856
        %v3858 = vrot.slane %v3857, 2
        %v3859 = vadd.f32 %v3857, %v3858
        %v3860 = vrot.slane %v3859, 1
        %v3861 = vadd.f32 %v3859, %v3860
        %v3862 = vadd.f32 %v3832, %v3855
        %v3863 = vadd.f32 %v3833, %v3861
        %v3864 = vmul.f32 %v3444, %v3444
        %v3865 = vmul.f32 %v3470, %v3470
        %v3866 = vrot.slane %v3864, 4
        %v3867 = vadd.f32 %v3864, %v3866
        %v3868 = vrot.slane %v3867, 2
        %v3869 = vadd.f32 %v3867, %v3868
        %v3870 = vrot.slane %v3869, 1
        %v3871 = vadd.f32 %v3869, %v3870
        %v3872 = vrot.slane %v3865, 4
        %v3873 = vadd.f32 %v3865, %v3872
        %v3874 = vrot.slane %v3873, 2
        %v3875 = vadd.f32 %v3873, %v3874
        %v3876 = vrot.slane %v3875, 1
        %v3877 = vadd.f32 %v3875, %v3876
        %v3878 = vadd.f32 %v3848, %v3871
        %v3879 = vadd.f32 %v3849, %v3877
        %v3880 = vrot.slane %v3496, 4
        %v3881 = vadd.f32 %v3496, %v3880
        %v3882 = vrot.slane %v3881, 2
        %v3883 = vadd.f32 %v3881, %v3882
        %v3884 = vrot.slane %v3883, 1
        %v3885 = vadd.f32 %v3883, %v3884
        %v3886 = vrot.slane %v3522, 4
        %v3887 = vadd.f32 %v3522, %v3886
        %v3888 = vrot.slane %v3887, 2
        %v3889 = vadd.f32 %v3887, %v3888
        %v3890 = vrot.slane %v3889, 1
        %v3891 = vadd.f32 %v3889, %v3890
        %v3892 = vadd.f32 %v3862, %v3885
        %v3893 = vadd.f32 %v3863, %v3891
        %v3894 = vmul.f32 %v3496, %v3496
        %v3895 = vmul.f32 %v3522, %v3522
        %v3896 = vrot.slane %v3894, 4
        %v3897 = vadd.f32 %v3894, %v3896
        %v3898 = vrot.slane %v3897, 2
        %v3899 = vadd.f32 %v3897, %v3898
        %v3900 = vrot.slane %v3899, 1
        %v3901 = vadd.f32 %v3899, %v3900
        %v3902 = vrot.slane %v3895, 4
        %v3903 = vadd.f32 %v3895, %v3902
        %v3904 = vrot.slane %v3903, 2
        %v3905 = vadd.f32 %v3903, %v3904
        %v3906 = vrot.slane %v3905, 1
        %v3907 = vadd.f32 %v3905, %v3906
        %v3908 = vadd.f32 %v3878, %v3901
        %v3909 = vadd.f32 %v3879, %v3907
        %v3910 = vrot.slane %v3548, 4
        %v3911 = vadd.f32 %v3548, %v3910
        %v3912 = vrot.slane %v3911, 2
        %v3913 = vadd.f32 %v3911, %v3912
        %v3914 = vrot.slane %v3913, 1
        %v3915 = vadd.f32 %v3913, %v3914
        %v3916 = vrot.slane %v3574, 4
        %v3917 = vadd.f32 %v3574, %v3916
        %v3918 = vrot.slane %v3917, 2
        %v3919 = vadd.f32 %v3917, %v3918
        %v3920 = vrot.slane %v3919, 1
        %v3921 = vadd.f32 %v3919, %v3920
        %v3922 = vadd.f32 %v3892, %v3915
        %v3923 = vadd.f32 %v3893, %v3921
        %v3924 = vmul.f32 %v3548, %v3548
        %v3925 = vmul.f32 %v3574, %v3574
        %v3926 = vrot.slane %v3924, 4
        %v3927 = vadd.f32 %v3924, %v3926
        %v3928 = vrot.slane %v3927, 2
        %v3929 = vadd.f32 %v3927, %v3928
        %v3930 = vrot.slane %v3929, 1
        %v3931 = vadd.f32 %v3929, %v3930
        %v3932 = vrot.slane %v3925, 4
        %v3933 = vadd.f32 %v3925, %v3932
        %v3934 = vrot.slane %v3933, 2
        %v3935 = vadd.f32 %v3933, %v3934
        %v3936 = vrot.slane %v3935, 1
        %v3937 = vadd.f32 %v3935, %v3936
        %v3938 = vadd.f32 %v3908, %v3931
        %v3939 = vadd.f32 %v3909, %v3937
        %v3940 = vrot.slane %v3600, 4
        %v3941 = vadd.f32 %v3600, %v3940
        %v3942 = vrot.slane %v3941, 2
        %v3943 = vadd.f32 %v3941, %v3942
        %v3944 = vrot.slane %v3943, 1
        %v3945 = vadd.f32 %v3943, %v3944
        %v3946 = vrot.slane %v3626, 4
        %v3947 = vadd.f32 %v3626, %v3946
        %v3948 = vrot.slane %v3947, 2
        %v3949 = vadd.f32 %v3947, %v3948
        %v3950 = vrot.slane %v3949, 1
        %v3951 = vadd.f32 %v3949, %v3950
        %v3952 = vadd.f32 %v3922, %v3945
        %v3953 = vadd.f32 %v3923, %v3951
        %v3954 = vmul.f32 %v3600, %v3600
        %v3955 = vmul.f32 %v3626, %v3626
        %v3956 = vrot.slane %v3954, 4
        %v3957 = vadd.f32 %v3954, %v3956
        %v3958 = vrot.slane %v3957, 2
        %v3959 = vadd.f32 %v3957, %v3958
        %v3960 = vrot.slane %v3959, 1
        %v3961 = vadd.f32 %v3959, %v3960
        %v3962 = vrot.slane %v3955, 4
        %v3963 = vadd.f32 %v3955, %v3962
        %v3964 = vrot.slane %v3963, 2
        %v3965 = vadd.f32 %v3963, %v3964
        %v3966 = vrot.slane %v3965, 1
        %v3967 = vadd.f32 %v3965, %v3966
        %v3968 = vadd.f32 %v3938, %v3961
        %v3969 = vadd.f32 %v3939, %v3967
        %v3970 = vrot.slane %v3652, 4
        %v3971 = vadd.f32 %v3652, %v3970
        %v3972 = vrot.slane %v3971, 2
        %v3973 = vadd.f32 %v3971, %v3972
        %v3974 = vrot.slane %v3973, 1
        %v3975 = vadd.f32 %v3973, %v3974
        %v3976 = vrot.slane %v3678, 4
        %v3977 = vadd.f32 %v3678, %v3976
        %v3978 = vrot.slane %v3977, 2
        %v3979 = vadd.f32 %v3977, %v3978
        %v3980 = vrot.slane %v3979, 1
        %v3981 = vadd.f32 %v3979, %v3980
        %v3982 = vadd.f32 %v3952, %v3975
        %v3983 = vadd.f32 %v3953, %v3981
        %v3984 = vmul.f32 %v3652, %v3652
        %v3985 = vmul.f32 %v3678, %v3678
        %v3986 = vrot.slane %v3984, 4
        %v3987 = vadd.f32 %v3984, %v3986
        %v3988 = vrot.slane %v3987, 2
        %v3989 = vadd.f32 %v3987, %v3988
        %v3990 = vrot.slane %v3989, 1
        %v3991 = vadd.f32 %v3989, %v3990
        %v3992 = vrot.slane %v3985, 4
        %v3993 = vadd.f32 %v3985, %v3992
        %v3994 = vrot.slane %v3993, 2
        %v3995 = vadd.f32 %v3993, %v3994
        %v3996 = vrot.slane %v3995, 1
        %v3997 = vadd.f32 %v3995, %v3996
        %v3998 = vadd.f32 %v3968, %v3991
        %v3999 = vadd.f32 %v3969, %v3997
        %v4000 = vrot.slane %v3704, 4
        %v4001 = vadd.f32 %v3704, %v4000
        %v4002 = vrot.slane %v4001, 2
        %v4003 = vadd.f32 %v4001, %v4002
        %v4004 = vrot.slane %v4003, 1
        %v4005 = vadd.f32 %v4003, %v4004
        %v4006 = vrot.slane %v3730, 4
        %v4007 = vadd.f32 %v3730, %v4006
        %v4008 = vrot.slane %v4007, 2
        %v4009 = vadd.f32 %v4007, %v4008
        %v4010 = vrot.slane %v4009, 1
        %v4011 = vadd.f32 %v4009, %v4010
        %v4012 = vadd.f32 %v3982, %v4005
        %v4013 = vadd.f32 %v3983, %v4011
        %v4014 = vmul.f32 %v3704, %v3704
        %v4015 = vmul.f32 %v3730, %v3730
        %v4016 = vrot.slane %v4014, 4
        %v4017 = vadd.f32 %v4014, %v4016
        %v4018 = vrot.slane %v4017, 2
        %v4019 = vadd.f32 %v4017, %v4018
        %v4020 = vrot.slane %v4019, 1
        %v4021 = vadd.f32 %v4019, %v4020
        %v4022 = vrot.slane %v4015, 4
        %v4023 = vadd.f32 %v4015, %v4022
        %v4024 = vrot.slane %v4023, 2
        %v4025 = vadd.f32 %v4023, %v4024
        %v4026 = vrot.slane %v4025, 1
        %v4027 = vadd.f32 %v4025, %v4026
        %v4028 = vadd.f32 %v3998, %v4021
        %v4029 = vadd.f32 %v3999, %v4027
        %v4030 = vrot.slane %v3756, 4
        %v4031 = vadd.f32 %v3756, %v4030
        %v4032 = vrot.slane %v4031, 2
        %v4033 = vadd.f32 %v4031, %v4032
        %v4034 = vrot.slane %v4033, 1
        %v4035 = vadd.f32 %v4033, %v4034
        %v4036 = vrot.slane %v3782, 4
        %v4037 = vadd.f32 %v3782, %v4036
        %v4038 = vrot.slane %v4037, 2
        %v4039 = vadd.f32 %v4037, %v4038
        %v4040 = vrot.slane %v4039, 1
        %v4041 = vadd.f32 %v4039, %v4040
        %v4042 = vadd.f32 %v4012, %v4035
        %v4043 = vadd.f32 %v4013, %v4041
        %v4044 = vmul.f32 %v3756, %v3756
        %v4045 = vmul.f32 %v3782, %v3782
        %v4046 = vrot.slane %v4044, 4
        %v4047 = vadd.f32 %v4044, %v4046
        %v4048 = vrot.slane %v4047, 2
        %v4049 = vadd.f32 %v4047, %v4048
        %v4050 = vrot.slane %v4049, 1
        %v4051 = vadd.f32 %v4049, %v4050
        %v4052 = vrot.slane %v4045, 4
        %v4053 = vadd.f32 %v4045, %v4052
        %v4054 = vrot.slane %v4053, 2
        %v4055 = vadd.f32 %v4053, %v4054
        %v4056 = vrot.slane %v4055, 1
        %v4057 = vadd.f32 %v4055, %v4056
        %v4058 = vadd.f32 %v4028, %v4051
        %v4059 = vadd.f32 %v4029, %v4057
        %v4060 = vmul.f32 %v3785, 2.0
        %v4063 = vrot.slane %v4043, 7
        %vm4064 = vcmask 1040384
        %v4065 = vsel %vm4064, %v4042, %v4063
        %v4067 = vmul.f32 %v4060, %v4065
        %v4069 = vperm.slane %v4067, 0
        %v4070 = vperm.slane %v4067, 1
        %v4073 = vadd.f32 %v4058, %v4069
        %v4074 = vadd.f32 %v4059, %v4070
        %v4075 = vmul.f32 %v3785, 72.0
        %v4076 = vmul.f32 %v4075, %v3785
        %v4078 = vperm.slane %v4076, 0
        %v4079 = vperm.slane %v4076, 1
        %v4082 = vadd.f32 %v4073, %v4078
        %v4083 = vadd.f32 %v4074, %v4079
        %v4085 = vperm.slane %v4075, 0
        %v4086 = vperm.slane %v4075, 1
        %v4089 = vadd.f32 %v4042, %v4085
        %v4090 = vadd.f32 %v4043, %v4086
        %v4093 = vrot.slane %v4082, 7
        %v4094 = vrot.slane %v4083, 7
        %v4097 = vsel %vm4064, %v4089, %v4093
        %v4098 = vsel %vm4064, %v4090, %v4094
        %v4099 = vld [vmem:[%s7] sm:$0xff]
        %v4100 = vld [vmem:[%s7 + $0x8] sm:$0xff]
        %v4101 = vld [vmem:[%s7 + $0x10] sm:$0xff]
        %v4102 = vld [vmem:[%s7 + $0x18] sm:$0xff]
        %v4103 = vld [vmem:[%s7 + $0x20] sm:$0xff]
        %v4104 = vld [vmem:[%s7 + $0x28] sm:$0xff]
        %v4105 = vld [vmem:[%s7 + $0x30] sm:$0xff]
        %v4106 = vld [vmem:[%s7 + $0x38] sm:$0xff]
        %v4107 = vld [vmem:[%s7 + $0x40] sm:$0xff]
        %v4108 = vld [vmem:[%s7 + $0x48] sm:$0xff]
        %v4109 = vld [vmem:[%s7 + $0x50] sm:$0xff]
        %v4110 = vld [vmem:[%s7 + $0x58] sm:$0xff]
        %v4111 = vld [vmem:[%s7 + $0x60] sm:$0xff]
        %v4112 = vld [vmem:[%s7 + $0x68] sm:$0xff]
        %v4113 = vld [vmem:[%s7 + $0x70] sm:$0xff]
        %v4114 = vld [vmem:[%s7 + $0x78] sm:$0xff]
        %v4115 = vld [vmem:[%s7 + $0x80] sm:$0xff]
        %v4116 = vld [vmem:[%s7 + $0x88] sm:$0xff]
        %v4117 = vld [vmem:[%s7 + $0x90] sm:$0xff]
        %v4118 = vld [vmem:[%s7 + $0x98] sm:$0xff]
        %v4119 = vld [vmem:[%s7 + $0xa0] sm:$0xff]
        %v4120 = vld [vmem:[%s7 + $0xa8] sm:$0xff]
        %v4121 = vld [vmem:[%s7 + $0xb0] sm:$0xff]
        %v4122 = vld [vmem:[%s7 + $0xb8] sm:$0xff]
        %v4123 = vld [vmem:[%s7 + $0xc0] sm:$0xff]
        %v4124 = vld [vmem:[%s7 + $0xc8] sm:$0xff]
        %v4125 = vld [vmem:[%s7 + $0xd0] sm:$0xff]
        %v4126 = vld [vmem:[%s7 + $0xd8] sm:$0xff]
        %v4127 = vld [vmem:[%s7 + $0xe0] sm:$0xff]
        %v4128 = vld [vmem:[%s7 + $0xe8] sm:$0xff]
        %v4129 = vld [vmem:[%s7 + $0xf0] sm:$0xff]
        %v4130 = vld [vmem:[%s7 + $0xf8] sm:$0xff]
        %4131 = vmatpush.msra.mxu0 %v4114
        %4132 = vmatpush.msra.mxu0 %v4113
        %4133 = vmatpush.msra.mxu0 %v4112
        %4134 = vmatpush.msra.mxu0 %v4111
        %4135 = vmatpush.msra.mxu0 %v4110
        %4136 = vmatpush.msra.mxu0 %v4109
        %4137 = vmatpush.msra.mxu0 %v4108
        %4138 = vmatpush.msra.mxu0 %v4107
        %4139 = vmatpush.msra.mxu0 %v4106
        %4140 = vmatpush.msra.mxu0 %v4105
        %4141 = vmatpush.msra.mxu0 %v4104
        %4142 = vmatpush.msra.mxu0 %v4103
        %4143 = vmatpush.msra.mxu0 %v4102
        %4144 = vmatpush.msra.mxu0 %v4101
        %4145 = vmatpush.msra.mxu0 %v4100
        %4146 = vmatpush.msra.mxu0 %v4099
        %4147 = vmatmul.f32.gmra.mxu0 %v4097
        %v4148 = vpop.f32.mrf.mxu0
        %v4149 = vadd.f32 0.0, %v4148
        %4150 = vdwg.mxu0
        %4151 = vmatpush.msra.mxu0 %v4130
        %4152 = vmatpush.msra.mxu0 %v4129
        %4153 = vmatpush.msra.mxu0 %v4128
        %4154 = vmatpush.msra.mxu0 %v4127
        %4155 = vmatpush.msra.mxu0 %v4126
        %4156 = vmatpush.msra.mxu0 %v4125
        %4157 = vmatpush.msra.mxu0 %v4124
        %4158 = vmatpush.msra.mxu0 %v4123
        %4159 = vmatpush.msra.mxu0 %v4122
        %4160 = vmatpush.msra.mxu0 %v4121
        %4161 = vmatpush.msra.mxu0 %v4120
        %4162 = vmatpush.msra.mxu0 %v4119
        %4163 = vmatpush.msra.mxu0 %v4118
        %4164 = vmatpush.msra.mxu0 %v4117
        %4165 = vmatpush.msra.mxu0 %v4116
        %4166 = vmatpush.msra.mxu0 %v4115
        %4167 = vmatmul.f32.gmra.mxu0 %v4098
        %v4168 = vpop.f32.mrf.mxu0
        %v4169 = vadd.f32 %v4149, %v4168
        %4170 = vdwg.mxu0
        %v4171 = vld [vmem:[#allocation14] sm:$0xff]
        %v4172 = vld [vmem:[#allocation14 + $0x8] sm:$0xff]
        %v4173 = vld [vmem:[#allocation14 + $0x10] sm:$0xff]
        %v4174 = vld [vmem:[#allocation14 + $0x18] sm:$0xff]
        %v4175 = vld [vmem:[#allocation14 + $0x20] sm:$0xff]
        %v4176 = vld [vmem:[#allocation14 + $0x28] sm:$0xff]
        %v4177 = vld [vmem:[#allocation14 + $0x30] sm:$0xff]
        %v4178 = vld [vmem:[#allocation14 + $0x38] sm:$0xff]
        %vm4179 = vcmask 261120
        %v4181 = vsel %vm4179, %v4169, 0
        %4183 = vmatpush.msra.mxu0 0.0
        %4184 = vmatpush.msra.mxu0 0.0
        %4185 = vmatpush.msra.mxu0 0.0
        %4186 = vmatpush.msra.mxu0 0.0
        %4187 = vmatpush.msra.mxu0 0.0
        %4188 = vmatpush.msra.mxu0 0.0
        %4189 = vmatpush.msra.mxu0 0.0
        %4190 = vmatpush.msra.mxu0 0.0
        %4191 = vmatpush.msra.mxu0 0.0
        %4192 = vmatpush.msra.mxu0 0.0
        %4193 = vmatpush.msra.mxu0 0.0
        %4194 = vmatpush.msra.mxu0 0.0
        %4195 = vmatpush.msra.mxu0 %v4177
        %4196 = vmatpush.msra.mxu0 %v4175
        %4197 = vmatpush.msra.mxu0 %v4173
        %4198 = vmatpush.msra.mxu0 %v4171
        %4199 = vmatmul.f32.gmra.mxu0 %v4181
        %v4200 = vpop.f32.mrf.mxu0
        %v4201 = vadd.f32 0.0, %v4200
        %4202 = vdwg.mxu0
        %4203 = vmatpush.msra.mxu0 0.0
        %4204 = vmatpush.msra.mxu0 0.0
        %4205 = vmatpush.msra.mxu0 0.0
        %4206 = vmatpush.msra.mxu0 0.0
        %4207 = vmatpush.msra.mxu0 0.0
        %4208 = vmatpush.msra.mxu0 0.0
        %4209 = vmatpush.msra.mxu0 0.0
        %4210 = vmatpush.msra.mxu0 0.0
        %4211 = vmatpush.msra.mxu0 0.0
        %4212 = vmatpush.msra.mxu0 0.0
        %4213 = vmatpush.msra.mxu0 0.0
        %4214 = vmatpush.msra.mxu0 0.0
        %4215 = vmatpush.msra.mxu0 %v4178
        %4216 = vmatpush.msra.mxu0 %v4176
        %4217 = vmatpush.msra.mxu0 %v4174
        %4218 = vmatpush.msra.mxu0 %v4172
        %4219 = vmatmul.f32.gmra.mxu0 %v4181
        %v4220 = vpop.f32.mrf.mxu0
        %v4221 = vadd.f32 0.0, %v4220
        %4222 = vdwg.mxu0
        %v4223 = vmul.f32 %v4201, 0.0017361111
        %v4224 = vmul.f32 %v4221, 0.0017361111
        %v4225 = vmul.f32 %v4223, %v4223
        %v4226 = vmul.f32 %v4224, %v4224
        %v4229 = vrot.slane %v4225, 7
        %v4230 = vrot.slane %v4226, 7
        %v4233 = vsub.f32 %v4223, %v4229
        %v4234 = vsub.f32 %v4224, %v4230
        %v4235 = vmax.f32 %v4233, 0.0
        %v4236 = vmax.f32 %v4234, 0.0
        %v4237 = vadd.f32 %v4235, 1e-05
        %v4238 = vadd.f32 %v4236, 1e-05
        %v4239 = vrsqrt.pop %v4237
        %v4240 = vmul.f32 %v4239, %v4237
        %v4241 = vmul.f32 %v4240, %v4239
        %v4242 = vmul.f32 0.5, %v4241
        %v4243 = vsub.f32 1.5, %v4242
        %v4244 = vmul.f32 %v4239, %v4243
        %vm4245 = vweird.f32 %v4237
        %vm4246 = vweird.f32 %v4239
        %vm4247 = vmor %vm4245, %vm4246
        %v4248 = vsel %vm4247, %v4239, %v4244
        %v4249 = vrsqrt.pop %v4238
        %v4250 = vmul.f32 %v4249, %v4238
        %v4251 = vmul.f32 %v4250, %v4249
        %v4252 = vmul.f32 0.5, %v4251
        %v4253 = vsub.f32 1.5, %v4252
        %v4254 = vmul.f32 %v4249, %v4253
        %vm4255 = vweird.f32 %v4238
        %vm4256 = vweird.f32 %v4249
        %vm4257 = vmor %vm4255, %vm4256
        %v4258 = vsel %vm4257, %v4249, %v4254
        %v4260 = vperm.slane %v3787, 0
        %v4261 = vperm.slane %v3787, 1
        %v4264 = vmul.f32 %v4248, %v4260
        %v4265 = vmul.f32 %v4258, %v4261
        %v4268 = vrot.slane %v4224, 7
        %v4269 = vsel %vm4064, %v4223, %v4268
        %v4271 = vsub.f32 %v3785, %v4269
        %4274 = vst [vmem:[#allocation1] sm:$0xff] %v4264
        %4275 = vst [vmem:[#allocation1 + $0x9] sm:$0xff] %v4265
        %s4276 = scalar_lea.vmem [#allocation1], 1
        %v4277 = vld [vmem:[%s4276] ss:$9 sm:$0xff]
        %v4279 = vmul.f32 %v4271, %v4277
        %v4280 = vadd.f32 %v3789, %v4279
        %v4282 = vperm.slane %v4280, 0
        %v4283 = vperm.slane %v4280, 1
        %v4286 = vperm.slane %v4264, 1
        %v4287 = vperm.slane %v4265, 1
        %v4288 = vmul.f32 %v3340, %v4286
        %v4289 = vmul.f32 %v3366, %v4287
        %v4290 = vmul.f32 %v3392, %v4286
        %v4291 = vmul.f32 %v3418, %v4287
        %v4292 = vmul.f32 %v3444, %v4286
        %v4293 = vmul.f32 %v3470, %v4287
        %v4294 = vmul.f32 %v3496, %v4286
        %v4295 = vmul.f32 %v3522, %v4287
        %v4296 = vmul.f32 %v3548, %v4286
        %v4297 = vmul.f32 %v3574, %v4287
        %v4298 = vmul.f32 %v3600, %v4286
        %v4299 = vmul.f32 %v3626, %v4287
        %v4300 = vmul.f32 %v3652, %v4286
        %v4301 = vmul.f32 %v3678, %v4287
        %v4302 = vmul.f32 %v3704, %v4286
        %v4303 = vmul.f32 %v3730, %v4287
        %v4304 = vmul.f32 %v3756, %v4286
        %v4305 = vmul.f32 %v3782, %v4287
        %v4306 = vperm.slane %v4282, 0
        %v4307 = vperm.slane %v4283, 0
        %v4308 = vadd.f32 %v4288, %v4306
        %v4309 = vadd.f32 %v4289, %v4307
        %v4310 = vadd.f32 %v4290, %v4306
        %v4311 = vadd.f32 %v4291, %v4307
        %v4312 = vadd.f32 %v4292, %v4306
        %v4313 = vadd.f32 %v4293, %v4307
        %v4314 = vadd.f32 %v4294, %v4306
        %v4315 = vadd.f32 %v4295, %v4307
        %v4316 = vadd.f32 %v4296, %v4306
        %v4317 = vadd.f32 %v4297, %v4307
        %v4318 = vadd.f32 %v4298, %v4306
        %v4319 = vadd.f32 %v4299, %v4307
        %v4320 = vadd.f32 %v4300, %v4306
        %v4321 = vadd.f32 %v4301, %v4307
        %v4322 = vadd.f32 %v4302, %v4306
        %v4323 = vadd.f32 %v4303, %v4307
        %v4324 = vadd.f32 %v4304, %v4306
        %v4325 = vadd.f32 %v4305, %v4307
        %v4326 = vmax.f32 %v4308, 0.0
        %v4327 = vmax.f32 %v4309, 0.0
        %v4328 = vmax.f32 %v4310, 0.0
        %v4329 = vmax.f32 %v4311, 0.0
        %v4330 = vmax.f32 %v4312, 0.0
        %v4331 = vmax.f32 %v4313, 0.0
        %v4332 = vmax.f32 %v4314, 0.0
        %v4333 = vmax.f32 %v4315, 0.0
        %v4334 = vmax.f32 %v4316, 0.0
        %v4335 = vmax.f32 %v4317, 0.0
        %v4336 = vmax.f32 %v4318, 0.0
        %v4337 = vmax.f32 %v4319, 0.0
        %v4338 = vmax.f32 %v4320, 0.0
        %v4339 = vmax.f32 %v4321, 0.0
        %v4340 = vmax.f32 %v4322, 0.0
        %v4341 = vmax.f32 %v4323, 0.0
        %v4342 = vmax.f32 %v4324, 0.0
        %v4343 = vmax.f32 %v4325, 0.0
        %4344 = vst [vmem:[%s572] sm:$0xff] %v4326
        %4345 = vst [vmem:[%s572 + $0x8] sm:$0xff] %v4327
        %4346 = vst [vmem:[%s572 + $0x10] sm:$0xff] %v4328
        %4347 = vst [vmem:[%s572 + $0x18] sm:$0xff] %v4329
        %4348 = vst [vmem:[%s572 + $0x20] sm:$0xff] %v4330
        %4349 = vst [vmem:[%s572 + $0x28] sm:$0xff] %v4331
        %4350 = vst [vmem:[%s572 + $0x30] sm:$0xff] %v4332
        %4351 = vst [vmem:[%s572 + $0x38] sm:$0xff] %v4333
        %4352 = vst [vmem:[%s572 + $0x40] sm:$0xff] %v4334
        %4353 = vst [vmem:[%s572 + $0x48] sm:$0xff] %v4335
        %4354 = vst [vmem:[%s572 + $0x50] sm:$0xff] %v4336
        %4355 = vst [vmem:[%s572 + $0x58] sm:$0xff] %v4337
        %4356 = vst [vmem:[%s572 + $0x60] sm:$0xff] %v4338
        %4357 = vst [vmem:[%s572 + $0x68] sm:$0xff] %v4339
        %4358 = vst [vmem:[%s572 + $0x70] sm:$0xff] %v4340
        %4359 = vst [vmem:[%s572 + $0x78] sm:$0xff] %v4341
        %4360 = vst [vmem:[%s572 + $0x80] sm:$0xff] %v4342
        %4361 = vst [vmem:[%s572 + $0x88] sm:$0xff] %v4343
        %s4362 = sand.u32 %s284, 1
        %s4363 = scalar_lea.sflag [#allocation4], %s4362
        %s4364 = sand.u32 %s284, 1
        %s4365 = smul.addr %s4364, 144
        %s4366 = scalar_lea.vmem [#allocation19], %s4365
        // Predicated region
        $region105: #{cdecoder_forward.1} parent=63 // pred_check
          %p4367 = pneg %p294
        $region106: #{cdecoder_forward.1} parent=63 // pred_check_branch
          %4369 = sbr.rel (%p4367) target = $region108
        $region107: #{cdecoder_forward.1} parent=63 // pred_region
          %4371 = vsyncadd %s4363, 0
          %s4372 = smul.addr %s35, 18
          %s4373 = smul.addr %s4372, 8
          %s4374 = scalar_lea.hbm %s11, %s4373
          %s4376 = sshll.u32 %s4366, 4
          %s4377 = int_to_ptr.vmem [resolvable:$true] %s4376
          %s4378 = sshll.u32 %s4374, 4
          %s4379 = int_to_ptr.hbm [resolvable:$true] %s4378
          %4381 = dma.vmem_to_hbm [thread:$0]  %s4377, 2304, %s4379, %s4363
        $region108: #{cdecoder_forward.1} parent=63 // pred_fallthru
          _
      $region64: #{cdecoder_forward.1} parent=5 // pred_fallthru
        _
      %p4382 = scmp.le.s32.totalorder 2, %s30
      // Predicated region
      $region109: #{cdecoder_forward.1} parent=5 // pred_check
        %p4383 = pneg %p4382
      $region110: #{cdecoder_forward.1} parent=5 // pred_check_branch
        %4385 = sbr.rel (%p4383) target = $region112
      $region111: #{cdecoder_forward.1} parent=5 // pred_region
        %s4386 = ssub.s32 %s30, 2
        // Predicated region
        $region113: #{cdecoder_forward.1} parent=111 // pred_check
          %p4387 = pneg %p300
        $region114: #{cdecoder_forward.1} parent=111 // pred_check_branch
          %4389 = sbr.rel (%p4387) target = $region116
        $region115: #{cdecoder_forward.1} parent=111 // pred_region
          %s4390 = sand.u32 %s285, 1
          %s4391 = scalar_lea.sflag [#allocation4], %s4390
          %s4392 = sand.u32 %s285, 1
          %s4393 = smul.addr %s4392, 144
          %s4394 = scalar_lea.vmem [#allocation19], %s4393
          %4396 = dma.done %s4391, 2304
        $region116: #{cdecoder_forward.1} parent=111 // pred_fallthru
          _
      $region112: #{cdecoder_forward.1} parent=5 // pred_fallthru
        _
    $region6: #{cdecoder_forward.1} parent=1 // loop_footer
      %s34 = sadd.s32 1, %s30
    $region7: #{cdecoder_forward.1} parent=1 // loop_footer_branch
      %29 = sbr.rel target = $region3
    $region8: #{cdecoder_forward.1} parent=1 // loop_exit
      _
    %4397 = vsyncpa [#allocation3], 1
    %s4398 = scalar_lea.sflag [#allocation3], 1
    %4399 = vsyncpa %s4398, 1
    %4400 = vsyncpa [#allocation6], 1
    %s4401 = scalar_lea.sflag [#allocation6], 1
    %4402 = vsyncpa %s4401, 1
    %4403 = vsyncpa [#allocation9], 1
    %4404 = vsyncpa [#allocation12], 1
    %4405 = vsyncpa [#allocation15], 1
    %4406 = vsyncpa [#allocation18], 1
    %4407 = vsyncpa [#allocation4], 1
    %s4408 = scalar_lea.sflag [#allocation4], 1
    %4409 = vsyncpa %s4408, 1

</llo_original>
